<compile_context>
chip_gen: v5e
topology: v5e:2x2
jax: 0.10.0
libtpu: 0.0.40
codegen_flags: <defaults>
</compile_context>

<pallas_src>
import functools
import numpy as np
import jax
import jax.numpy as jnp
from jax.experimental import pallas as pl
from jax.experimental.pallas import tpu as pltpu

F32 = jnp.float32
BF16 = jnp.bfloat16


# ----------------------------------------------------------------------------
# In-kernel building blocks (pure jnp, traced inside the Pallas kernel body).
# ----------------------------------------------------------------------------
def _lstm_cell(gates, c_prev, hidden):
    """One LSTM cell update from pre-activation gates (PyTorch i,f,g,o order).
    Single sigmoid over the full 4H width; tanh only on the g slice."""
    H = hidden
    sig = jax.nn.sigmoid(gates)                       # one EUP pass, full width
    i_g = sig[:, 0 * H:1 * H]
    f_g = sig[:, 1 * H:2 * H]
    o_g = sig[:, 3 * H:4 * H]
    g_g = jnp.tanh(gates[:, 2 * H:3 * H])
    c_new = f_g * c_prev + i_g * g_g
    h_new = o_g * jnp.tanh(c_new)
    return h_new, c_new


def _uni_lstm_final(x2d, wih, whh, b, batch, hidden):
    """Unidirectional LSTM over the full sequence; returns final hidden (B,H).
    x2d: (T*B, D) bf16 time-major-flattened input.  Input projection hoisted
    out of the recurrence (one MXU call); only h @ W_hh inside the loop."""
    B, H = batch, hidden
    T = x2d.shape[0] // B
    xg = jnp.dot(x2d, wih, preferred_element_type=F32) + b          # (T*B, 4H)
    h = jnp.zeros((B, H), F32)
    c = jnp.zeros((B, H), F32)
    for t in range(T):                                 # static, fully unrolled
        gates = xg[t * B:(t + 1) * B] + jnp.dot(
            h.astype(BF16), whh, preferred_element_type=F32)
        h, c = _lstm_cell(gates, c, H)
    return h


def _bi_lstm_pool(x2d, wih, whh, b, lens, batch, hidden):
    """Bidirectional LSTM with packed-sequence masking + avg/max pooling.
    Both directions run interleaved in ONE unrolled loop body; per-direction
    input projections are hoisted out of the loop.  Returns the (B, 6H)
    TextModule feature in exact PyTorch order:
      [h_bwd_final, h_fwd_final, avg_fwd, avg_bwd, max_fwd, max_bwd]."""
    B, H = batch, hidden
    T = x2d.shape[0] // B
    # hoisted input projections (biases folded in): one MXU call per direction
    xg_f = jnp.dot(x2d, wih[0], preferred_element_type=F32) + b[0]   # (T*B,4H)
    xg_b = jnp.dot(x2d, wih[1], preferred_element_type=F32) + b[1]
    whh_f = whh[0]
    whh_b = whh[1]

    zeros = jnp.zeros((B, H), F32)
    ninf = jnp.full((B, H), -jnp.inf, F32)
    h_f, c_f, h_b, c_b = zeros, zeros, zeros, zeros
    sum_f, sum_b = zeros, zeros
    max_f, max_b = ninf, ninf

    for t in range(T):                                 # static, fully unrolled
        tb = T - 1 - t                                 # backward-dir position
        g_f = xg_f[t * B:(t + 1) * B] + jnp.dot(
            h_f.astype(BF16), whh_f, preferred_element_type=F32)
        g_b = xg_b[tb * B:(tb + 1) * B] + jnp.dot(
            h_b.astype(BF16), whh_b, preferred_element_type=F32)
        hf_new, cf_new = _lstm_cell(g_f, c_f, H)
        hb_new, cb_new = _lstm_cell(g_b, c_b, H)
        vf = lens > t            # (B,1) packed-sequence mask (forward step t)
        vb = lens > tb           # backward direction starts at position len-1
        h_f = jnp.where(vf, hf_new, h_f)
        c_f = jnp.where(vf, cf_new, c_f)
        h_b = jnp.where(vb, hb_new, h_b)
        c_b = jnp.where(vb, cb_new, c_b)
        # pad_packed_sequence pads with zeros -> padded steps contribute 0
        sum_f = sum_f + jnp.where(vf, hf_new, 0.0)
        sum_b = sum_b + jnp.where(vb, hb_new, 0.0)
        # torch max-pools only over the first `len` steps -> masked max
        max_f = jnp.maximum(max_f, jnp.where(vf, hf_new, -jnp.inf))
        max_b = jnp.maximum(max_b, jnp.where(vb, hb_new, -jnp.inf))

    inv_len = 1.0 / lens.astype(F32)
    avg_f = sum_f * inv_len
    avg_b = sum_b * inv_len
    # torch: cat([hidden[-1] (bwd final), hidden[-2] (fwd final), avg_pool, max_pool])
    return jnp.concatenate([h_b, h_f, avg_f, avg_b, max_f, max_b], axis=1)


# ----------------------------------------------------------------------------
# Whole-model fused kernel
# ----------------------------------------------------------------------------
def _model_kernel(x_ind_ref, x_news_ref, x_title_ref,
                  len_news_ref, len_title_ref,
                  wih_i_ref, whh_i_ref, b_i_ref,
                  wih_n_ref, whh_n_ref, b_n_ref,
                  wih_t_ref, whh_t_ref, b_t_ref,
                  w1_i_ref, w1_n_ref, w1_t_ref, b1_ref, w2_ref, b2_ref,
                  out_ref, *, batch):
    B = batch
    H_I = whh_i_ref.shape[0]           # (H_I, 4H_I)
    H_N = whh_n_ref.shape[1]           # (2, H_N, 4H_N)
    H_T = whh_t_ref.shape[1]           # (2, H_T, 4H_T)

    # indicator LSTM: unidirectional, full length (no packing), final hidden
    h_ind = _uni_lstm_final(x_ind_ref[...], wih_i_ref[...], whh_i_ref[...],
                            b_i_ref[...], B, H_I)

    # news / title TextModules: bidirectional LSTM + masked avg/max pooling
    feat_news = _bi_lstm_pool(x_news_ref[...], wih_n_ref[...], whh_n_ref[...],
                              b_n_ref[...], len_news_ref[...], B, H_N)
    feat_title = _bi_lstm_pool(x_title_ref[...], wih_t_ref[...], whh_t_ref[...],
                               b_t_ref[...], len_title_ref[...], B, H_T)

    # head: BatchNorm (folded into fc1) -> fc1 -> ReLU(dropout=id) -> fc2
    h1 = (jnp.dot(h_ind, w1_i_ref[...], preferred_element_type=F32)
          + jnp.dot(feat_news, w1_n_ref[...], preferred_element_type=F32)
          + jnp.dot(feat_title, w1_t_ref[...], preferred_element_type=F32)
          + b1_ref[...])
    h1 = jnp.maximum(h1, 0.0)
    # fc2 has a single output column -> lane reduction, no 1-column MXU matmul
    out_ref[...] = jnp.sum(h1 * w2_ref[...], axis=1, keepdims=True) + b2_ref[...]


# ----------------------------------------------------------------------------
# Parameter init (deterministic, synthetic) and prep (BN fold, bf16 cast).
# Fused-gate layout (D, 4H) == PyTorch weight_ih_l0.T with gate order i,f,g,o.
# ----------------------------------------------------------------------------
def init_lstm(key, D, H, num_dirs=1, scale=0.1):
    k1, k2, k3 = jax.random.split(key, 3)
    return dict(
        wih=jax.random.normal(k1, (num_dirs, D, 4 * H), F32) * scale,
        whh=jax.random.normal(k2, (num_dirs, H, 4 * H), F32) * scale,
        b=jax.random.normal(k3, (num_dirs, 1, 4 * H), F32) * scale,  # b_ih+b_hh
    )


def init_bn(key, F):
    k1, k2, k3, k4 = jax.random.split(key, 4)
    return dict(
        gamma=1.0 + 0.1 * jax.random.normal(k1, (F,), F32),
        beta=0.1 * jax.random.normal(k2, (F,), F32),
        mean=0.1 * jax.random.normal(k3, (F,), F32),
        var=1.0 + 0.1 * jax.random.uniform(k4, (F,), F32),
    )


def init_params(key, *, vocab, emb_size, input_size, hidden_size, fc_size,
                h_news, h_title):
    keys = jax.random.split(key, 10)
    emb = 0.1 * jax.random.normal(keys[0], (vocab, emb_size), F32)
    emb = emb.at[0].set(0.0)                     # padding_idx = vocab['<pad>'] = 0
    feat_dim = hidden_size + 6 * h_news + 6 * h_title
    return dict(
        embedding=emb,
        ind=init_lstm(keys[1], input_size, hidden_size, num_dirs=1),
        news=init_lstm(keys[2], emb_size, h_news, num_dirs=2),
        title=init_lstm(keys[3], emb_size, h_title, num_dirs=2),
        bn_ind=init_bn(keys[4], hidden_size),
        bn_news=init_bn(keys[5], 6 * h_news),
        bn_title=init_bn(keys[6], 6 * h_title),
        fc1_w=0.1 * jax.random.normal(keys[7], (feat_dim, fc_size), F32),
        fc1_b=0.1 * jax.random.normal(keys[8], (1, fc_size), F32),
        fc2_w=0.1 * jax.random.normal(keys[9], (1, fc_size), F32),   # row form
        fc2_b=jnp.zeros((1, 1), F32),
    )


def _bn_scale_shift(bn, eps=1e-5):
    scale = bn["gamma"] / jnp.sqrt(bn["var"] + eps)
    shift = bn["beta"] - bn["mean"] * scale
    return scale, shift


def prepare_params(params):
    """Fold eval-mode BatchNorm into fc1, cast LSTM weights to bf16."""
    s_i, t_i = _bn_scale_shift(params["bn_ind"])
    s_n, t_n = _bn_scale_shift(params["bn_news"])
    s_t, t_t = _bn_scale_shift(params["bn_title"])
    H_I = s_i.shape[0]
    F_N = s_n.shape[0]
    w1 = params["fc1_w"]
    w1_i = w1[:H_I]
    w1_n = w1[H_I:H_I + F_N]
    w1_t = w1[H_I + F_N:]
    b1 = (params["fc1_b"]
          + t_i[None, :] @ w1_i + t_n[None, :] @ w1_n + t_t[None, :] @ w1_t)
    return dict(
        embedding=params["embedding"],
        ind=dict(wih=params["ind"]["wih"][0].astype(BF16),
                 whh=params["ind"]["whh"][0].astype(BF16),
                 b=params["ind"]["b"][0]),
        news=dict(wih=params["news"]["wih"].astype(BF16),
                  whh=params["news"]["whh"].astype(BF16),
                  b=params["news"]["b"]),
        title=dict(wih=params["title"]["wih"].astype(BF16),
                   whh=params["title"]["whh"].astype(BF16),
                   b=params["title"]["b"]),
        w1_ind=s_i[:, None] * w1_i,
        w1_news=s_n[:, None] * w1_n,
        w1_title=s_t[:, None] * w1_t,
        b1=b1,
        w2=params["fc2_w"],
        b2=params["fc2_b"],
    )


# ----------------------------------------------------------------------------
# Forward
# ----------------------------------------------------------------------------
@jax.jit
def _forward_device(prep, X, news_tok, news_len, title_tok, title_len):
    B, T_X, D_in = X.shape
    E = prep["embedding"].shape[1]
    T_N = news_tok.shape[1]
    T_T = title_tok.shape[1]

    # time-major flattened (T*B, D) inputs (lane-dense per-step gate slices)
    x_ind = jnp.transpose(X, (1, 0, 2)).reshape(T_X * B, D_in).astype(BF16)
    emb_n = jnp.take(prep["embedding"], news_tok, axis=0)      # (B,T_N,E) gather glue
    x_news = jnp.transpose(emb_n, (1, 0, 2)).reshape(T_N * B, E).astype(BF16)
    emb_t = jnp.take(prep["embedding"], title_tok, axis=0)
    x_title = jnp.transpose(emb_t, (1, 0, 2)).reshape(T_T * B, E).astype(BF16)

    # clamp length >= 1: torch raises on zero-length packed sequences
    len_n = jnp.maximum(news_len.reshape(B, 1).astype(jnp.int32), 1)
    len_t = jnp.maximum(title_len.reshape(B, 1).astype(jnp.int32), 1)

    args = (x_ind, x_news, x_title, len_n, len_t,
            prep["ind"]["wih"], prep["ind"]["whh"], prep["ind"]["b"],
            prep["news"]["wih"], prep["news"]["whh"], prep["news"]["b"],
            prep["title"]["wih"], prep["title"]["whh"], prep["title"]["b"],
            prep["w1_ind"], prep["w1_news"], prep["w1_title"],
            prep["b1"], prep["w2"], prep["b2"])
    vmem = pl.BlockSpec(memory_space=pltpu.MemorySpace.VMEM)
    return pl.pallas_call(
        functools.partial(_model_kernel, batch=B),
        out_shape=jax.ShapeDtypeStruct((B, 1), jnp.float32),
        in_specs=[vmem] * len(args),
        out_specs=vmem,
    )(*args)


def model_forward(prep, X, news, len_news, titles, len_titles,
                  *, max_news_len, max_title_len):
    # host-side "take last history element" glue, mirroring the torch forward
    last_news = jnp.asarray(
        np.array([np.asarray(n[-1]) if len(n) > 0 else [0] * max_news_len
                  for n in news]), dtype=jnp.int32)
    last_len_news = jnp.asarray(
        [l[-1] if len(l) > 0 else 0 for l in len_news], dtype=jnp.int32)
    last_titles = jnp.asarray(
        np.array([np.asarray(t[-1]) if len(t) > 0 else [0] * max_title_len
                  for t in titles]), dtype=jnp.int32)
    last_len_titles = jnp.asarray(
        [l[-1] if len(l) > 0 else 0 for l in len_titles], dtype=jnp.int32)
    return _forward_device(prep, jnp.asarray(X, dtype=F32),
                           last_news, last_len_news,
                           last_titles, last_len_titles)


# ----------------------------------------------------------------------------
if __name__ == "__main__":
    B = 2
    T_X = 8
    INPUT_SIZE = 10
    HIDDEN_SIZE = 32       # 4H = 128 -> full lane width for fused gates
    FC_SIZE = 16
    EMB_SIZE = 16
    H_NEWS = 32
    H_TITLE = 24
    MAX_NEWS_LEN = 12
    MAX_TITLE_LEN = 6
    VOCAB = 50

    key = jax.random.PRNGKey(0)
    k_par, k_x, k_news, k_title, k_ln, k_lt = jax.random.split(key, 6)

    params = init_params(k_par, vocab=VOCAB, emb_size=EMB_SIZE,
                         input_size=INPUT_SIZE, hidden_size=HIDDEN_SIZE,
                         fc_size=FC_SIZE, h_news=H_NEWS, h_title=H_TITLE)
    prep = prepare_params(params)

    X = jax.random.normal(k_x, (B, T_X, INPUT_SIZE), F32)

    news_lens = np.array(jax.random.randint(k_ln, (B,), 3, MAX_NEWS_LEN + 1))
    title_lens = np.array(jax.random.randint(k_lt, (B,), 2, MAX_TITLE_LEN + 1))
    news_tok = np.array(jax.random.randint(k_news, (B, MAX_NEWS_LEN), 1, VOCAB))
    title_tok = np.array(jax.random.randint(k_title, (B, MAX_TITLE_LEN), 1, VOCAB))
    for b in range(B):
        news_tok[b, news_lens[b]:] = 0
        title_tok[b, title_lens[b]:] = 0

    # list-of-lists structure (per-sample history); forward takes the last entry
    news = [[news_tok[b]] for b in range(B)]
    len_news = [[int(news_lens[b])] for b in range(B)]
    titles = [[title_tok[b]] for b in range(B)]
    len_titles = [[int(title_lens[b])] for b in range(B)]

    out = model_forward(prep, X, news, len_news, titles, len_titles,
                        max_news_len=MAX_NEWS_LEN, max_title_len=MAX_TITLE_LEN)
    out = jax.block_until_ready(out)
    assert out.shape == (B, 1)
    assert bool(jnp.all(jnp.isfinite(out)))
    print("KERNEL_OK")
</pallas_src>

<mosaic_0001>
module attributes {stable_mosaic.version = 11 : i64} {
  func.func @_model_kernel(%arg0: memref<16x10xbf16, #tpu.memory_space<vmem>>, %arg1: memref<24x16xbf16, #tpu.memory_space<vmem>>, %arg2: memref<12x16xbf16, #tpu.memory_space<vmem>>, %arg3: memref<2x1xi32, #tpu.memory_space<vmem>>, %arg4: memref<2x1xi32, #tpu.memory_space<vmem>>, %arg5: memref<10x128xbf16, #tpu.memory_space<vmem>>, %arg6: memref<32x128xbf16, #tpu.memory_space<vmem>>, %arg7: memref<1x128xf32, #tpu.memory_space<vmem>>, %arg8: memref<2x16x128xbf16, #tpu.memory_space<vmem>>, %arg9: memref<2x32x128xbf16, #tpu.memory_space<vmem>>, %arg10: memref<2x1x128xf32, #tpu.memory_space<vmem>>, %arg11: memref<2x16x96xbf16, #tpu.memory_space<vmem>>, %arg12: memref<2x24x96xbf16, #tpu.memory_space<vmem>>, %arg13: memref<2x1x96xf32, #tpu.memory_space<vmem>>, %arg14: memref<32x16xf32, #tpu.memory_space<vmem>>, %arg15: memref<192x16xf32, #tpu.memory_space<vmem>>, %arg16: memref<144x16xf32, #tpu.memory_space<vmem>>, %arg17: memref<1x16xf32, #tpu.memory_space<vmem>>, %arg18: memref<1x16xf32, #tpu.memory_space<vmem>>, %arg19: memref<1x1xf32, #tpu.memory_space<vmem>>, %arg20: memref<2x1xf32, #tpu.memory_space<vmem>>) attributes {dimension_semantics = [], scalar_prefetch = 0 : i64, scratch_operands = 0 : i64, tpu.core_type = #tpu.core_type<tc>} {
    %c0 = arith.constant 0 : index
    %c0_0 = arith.constant 0 : index
    %0 = vector.load %arg0[%c0, %c0_0] : memref<16x10xbf16, #tpu.memory_space<vmem>>, vector<16x10xbf16>
    %c0_1 = arith.constant 0 : index
    %c0_2 = arith.constant 0 : index
    %1 = vector.load %arg5[%c0_1, %c0_2] : memref<10x128xbf16, #tpu.memory_space<vmem>>, vector<10x128xbf16>
    %c0_3 = arith.constant 0 : index
    %c0_4 = arith.constant 0 : index
    %2 = vector.load %arg6[%c0_3, %c0_4] : memref<32x128xbf16, #tpu.memory_space<vmem>>, vector<32x128xbf16>
    %c0_5 = arith.constant 0 : index
    %c0_6 = arith.constant 0 : index
    %3 = vector.load %arg7[%c0_5, %c0_6] : memref<1x128xf32, #tpu.memory_space<vmem>>, vector<1x128xf32>
    %cst = arith.constant dense<0.000000e+00> : vector<16x128xf32>
    %4 = tpu.matmul %0, %1, %cst {dimension_numbers = #tpu.dot_dimension_numbers<[1], [0], [0], [1], [0, 0, 1, 1], [], []>} : vector<16x10xbf16>, vector<10x128xbf16>, vector<16x128xf32> -> vector<16x128xf32>
    %5 = vector.broadcast %3 : vector<1x128xf32> to vector<16x128xf32>
    %6 = arith.addf %4, %5 : vector<16x128xf32>
    %cst_7 = arith.constant 0.000000e+00 : f32
    %7 = vector.broadcast %cst_7 : f32 to vector<2x32xf32>
    %cst_8 = arith.constant 0.000000e+00 : f32
    %8 = vector.broadcast %cst_8 : f32 to vector<2x32xf32>
    %9 = vector.extract_strided_slice %6 {offsets = [0, 0], sizes = [2, 128], strides = [1, 1]} : vector<16x128xf32> to vector<2x128xf32>
    %10 = arith.truncf %7 : vector<2x32xf32> to vector<2x32xbf16>
    %cst_9 = arith.constant dense<0.000000e+00> : vector<2x128xf32>
    %11 = tpu.matmul %10, %2, %cst_9 {dimension_numbers = #tpu.dot_dimension_numbers<[1], [0], [0], [1], [0, 0, 1, 1], [], []>} : vector<2x32xbf16>, vector<32x128xbf16>, vector<2x128xf32> -> vector<2x128xf32>
    %12 = arith.addf %9, %11 : vector<2x128xf32>
    %13 = arith.negf %12 : vector<2x128xf32>
    %14 = math.exp %13 : vector<2x128xf32>
    %cst_10 = arith.constant 1.000000e+00 : f32
    %15 = vector.broadcast %cst_10 : f32 to vector<2x128xf32>
    %16 = arith.addf %15, %14 : vector<2x128xf32>
    %17 = arith.divf %15, %16 : vector<2x128xf32>
    %18 = vector.extract_strided_slice %17 {offsets = [0, 0], sizes = [2, 32], strides = [1, 1]} : vector<2x128xf32> to vector<2x32xf32>
    %19 = vector.extract_strided_slice %17 {offsets = [0, 32], sizes = [2, 32], strides = [1, 1]} : vector<2x128xf32> to vector<2x32xf32>
    %20 = vector.extract_strided_slice %17 {offsets = [0, 96], sizes = [2, 32], strides = [1, 1]} : vector<2x128xf32> to vector<2x32xf32>
    %21 = vector.extract_strided_slice %12 {offsets = [0, 64], sizes = [2, 32], strides = [1, 1]} : vector<2x128xf32> to vector<2x32xf32>
    %22 = math.tanh %21 : vector<2x32xf32>
    %23 = arith.mulf %19, %8 : vector<2x32xf32>
    %24 = arith.mulf %18, %22 : vector<2x32xf32>
    %25 = arith.addf %23, %24 : vector<2x32xf32>
    %26 = math.tanh %25 : vector<2x32xf32>
    %27 = arith.mulf %20, %26 : vector<2x32xf32>
    %28 = vector.extract_strided_slice %6 {offsets = [2, 0], sizes = [2, 128], strides = [1, 1]} : vector<16x128xf32> to vector<2x128xf32>
    %29 = arith.truncf %27 : vector<2x32xf32> to vector<2x32xbf16>
    %cst_11 = arith.constant dense<0.000000e+00> : vector<2x128xf32>
    %30 = tpu.matmul %29, %2, %cst_11 {dimension_numbers = #tpu.dot_dimension_numbers<[1], [0], [0], [1], [0, 0, 1, 1], [], []>} : vector<2x32xbf16>, vector<32x128xbf16>, vector<2x128xf32> -> vector<2x128xf32>
    %31 = arith.addf %28, %30 : vector<2x128xf32>
    %32 = arith.negf %31 : vector<2x128xf32>
    %33 = math.exp %32 : vector<2x128xf32>
    %cst_12 = arith.constant 1.000000e+00 : f32
    %34 = vector.broadcast %cst_12 : f32 to vector<2x128xf32>
    %35 = arith.addf %34, %33 : vector<2x128xf32>
    %36 = arith.divf %34, %35 : vector<2x128xf32>
    %37 = vector.extract_strided_slice %36 {offsets = [0, 0], sizes = [2, 32], strides = [1, 1]} : vector<2x128xf32> to vector<2x32xf32>
    %38 = vector.extract_strided_slice %36 {offsets = [0, 32], sizes = [2, 32], strides = [1, 1]} : vector<2x128xf32> to vector<2x32xf32>
    %39 = vector.extract_strided_slice %36 {offsets = [0, 96], sizes = [2, 32], strides = [1, 1]} : vector<2x128xf32> to vector<2x32xf32>
    %40 = vector.extract_strided_slice %31 {offsets = [0, 64], sizes = [2, 32], strides = [1, 1]} : vector<2x128xf32> to vector<2x32xf32>
    %41 = math.tanh %40 : vector<2x32xf32>
    %42 = arith.mulf %38, %25 : vector<2x32xf32>
    %43 = arith.mulf %37, %41 : vector<2x32xf32>
    %44 = arith.addf %42, %43 : vector<2x32xf32>
    %45 = math.tanh %44 : vector<2x32xf32>
    %46 = arith.mulf %39, %45 : vector<2x32xf32>
    %47 = vector.extract_strided_slice %6 {offsets = [4, 0], sizes = [2, 128], strides = [1, 1]} : vector<16x128xf32> to vector<2x128xf32>
    %48 = arith.truncf %46 : vector<2x32xf32> to vector<2x32xbf16>
    %cst_13 = arith.constant dense<0.000000e+00> : vector<2x128xf32>
    %49 = tpu.matmul %48, %2, %cst_13 {dimension_numbers = #tpu.dot_dimension_numbers<[1], [0], [0], [1], [0, 0, 1, 1], [], []>} : vector<2x32xbf16>, vector<32x128xbf16>, vector<2x128xf32> -> vector<2x128xf32>
    %50 = arith.addf %47, %49 : vector<2x128xf32>
    %51 = arith.negf %50 : vector<2x128xf32>
    %52 = math.exp %51 : vector<2x128xf32>
    %cst_14 = arith.constant 1.000000e+00 : f32
    %53 = vector.broadcast %cst_14 : f32 to vector<2x128xf32>
    %54 = arith.addf %53, %52 : vector<2x128xf32>
    %55 = arith.divf %53, %54 : vector<2x128xf32>
    %56 = vector.extract_strided_slice %55 {offsets = [0, 0], sizes = [2, 32], strides = [1, 1]} : vector<2x128xf32> to vector<2x32xf32>
    %57 = vector.extract_strided_slice %55 {offsets = [0, 32], sizes = [2, 32], strides = [1, 1]} : vector<2x128xf32> to vector<2x32xf32>
    %58 = vector.extract_strided_slice %55 {offsets = [0, 96], sizes = [2, 32], strides = [1, 1]} : vector<2x128xf32> to vector<2x32xf32>
    %59 = vector.extract_strided_slice %50 {offsets = [0, 64], sizes = [2, 32], strides = [1, 1]} : vector<2x128xf32> to vector<2x32xf32>
    %60 = math.tanh %59 : vector<2x32xf32>
    %61 = arith.mulf %57, %44 : vector<2x32xf32>
    %62 = arith.mulf %56, %60 : vector<2x32xf32>
    %63 = arith.addf %61, %62 : vector<2x32xf32>
    %64 = math.tanh %63 : vector<2x32xf32>
    %65 = arith.mulf %58, %64 : vector<2x32xf32>
    %66 = vector.extract_strided_slice %6 {offsets = [6, 0], sizes = [2, 128], strides = [1, 1]} : vector<16x128xf32> to vector<2x128xf32>
    %67 = arith.truncf %65 : vector<2x32xf32> to vector<2x32xbf16>
    %cst_15 = arith.constant dense<0.000000e+00> : vector<2x128xf32>
    %68 = tpu.matmul %67, %2, %cst_15 {dimension_numbers = #tpu.dot_dimension_numbers<[1], [0], [0], [1], [0, 0, 1, 1], [], []>} : vector<2x32xbf16>, vector<32x128xbf16>, vector<2x128xf32> -> vector<2x128xf32>
    %69 = arith.addf %66, %68 : vector<2x128xf32>
    %70 = arith.negf %69 : vector<2x128xf32>
    %71 = math.exp %70 : vector<2x128xf32>
    %cst_16 = arith.constant 1.000000e+00 : f32
    %72 = vector.broadcast %cst_16 : f32 to vector<2x128xf32>
    %73 = arith.addf %72, %71 : vector<2x128xf32>
    %74 = arith.divf %72, %73 : vector<2x128xf32>
    %75 = vector.extract_strided_slice %74 {offsets = [0, 0], sizes = [2, 32], strides = [1, 1]} : vector<2x128xf32> to vector<2x32xf32>
    %76 = vector.extract_strided_slice %74 {offsets = [0, 32], sizes = [2, 32], strides = [1, 1]} : vector<2x128xf32> to vector<2x32xf32>
    %77 = vector.extract_strided_slice %74 {offsets = [0, 96], sizes = [2, 32], strides = [1, 1]} : vector<2x128xf32> to vector<2x32xf32>
    %78 = vector.extract_strided_slice %69 {offsets = [0, 64], sizes = [2, 32], strides = [1, 1]} : vector<2x128xf32> to vector<2x32xf32>
    %79 = math.tanh %78 : vector<2x32xf32>
    %80 = arith.mulf %76, %63 : vector<2x32xf32>
    %81 = arith.mulf %75, %79 : vector<2x32xf32>
    %82 = arith.addf %80, %81 : vector<2x32xf32>
    %83 = math.tanh %82 : vector<2x32xf32>
    %84 = arith.mulf %77, %83 : vector<2x32xf32>
    %85 = vector.extract_strided_slice %6 {offsets = [8, 0], sizes = [2, 128], strides = [1, 1]} : vector<16x128xf32> to vector<2x128xf32>
    %86 = arith.truncf %84 : vector<2x32xf32> to vector<2x32xbf16>
    %cst_17 = arith.constant dense<0.000000e+00> : vector<2x128xf32>
    %87 = tpu.matmul %86, %2, %cst_17 {dimension_numbers = #tpu.dot_dimension_numbers<[1], [0], [0], [1], [0, 0, 1, 1], [], []>} : vector<2x32xbf16>, vector<32x128xbf16>, vector<2x128xf32> -> vector<2x128xf32>
    %88 = arith.addf %85, %87 : vector<2x128xf32>
    %89 = arith.negf %88 : vector<2x128xf32>
    %90 = math.exp %89 : vector<2x128xf32>
    %cst_18 = arith.constant 1.000000e+00 : f32
    %91 = vector.broadcast %cst_18 : f32 to vector<2x128xf32>
    %92 = arith.addf %91, %90 : vector<2x128xf32>
    %93 = arith.divf %91, %92 : vector<2x128xf32>
    %94 = vector.extract_strided_slice %93 {offsets = [0, 0], sizes = [2, 32], strides = [1, 1]} : vector<2x128xf32> to vector<2x32xf32>
    %95 = vector.extract_strided_slice %93 {offsets = [0, 32], sizes = [2, 32], strides = [1, 1]} : vector<2x128xf32> to vector<2x32xf32>
    %96 = vector.extract_strided_slice %93 {offsets = [0, 96], sizes = [2, 32], strides = [1, 1]} : vector<2x128xf32> to vector<2x32xf32>
    %97 = vector.extract_strided_slice %88 {offsets = [0, 64], sizes = [2, 32], strides = [1, 1]} : vector<2x128xf32> to vector<2x32xf32>
    %98 = math.tanh %97 : vector<2x32xf32>
    %99 = arith.mulf %95, %82 : vector<2x32xf32>
    %100 = arith.mulf %94, %98 : vector<2x32xf32>
    %101 = arith.addf %99, %100 : vector<2x32xf32>
    %102 = math.tanh %101 : vector<2x32xf32>
    %103 = arith.mulf %96, %102 : vector<2x32xf32>
    %104 = vector.extract_strided_slice %6 {offsets = [10, 0], sizes = [2, 128], strides = [1, 1]} : vector<16x128xf32> to vector<2x128xf32>
    %105 = arith.truncf %103 : vector<2x32xf32> to vector<2x32xbf16>
    %cst_19 = arith.constant dense<0.000000e+00> : vector<2x128xf32>
    %106 = tpu.matmul %105, %2, %cst_19 {dimension_numbers = #tpu.dot_dimension_numbers<[1], [0], [0], [1], [0, 0, 1, 1], [], []>} : vector<2x32xbf16>, vector<32x128xbf16>, vector<2x128xf32> -> vector<2x128xf32>
    %107 = arith.addf %104, %106 : vector<2x128xf32>
    %108 = arith.negf %107 : vector<2x128xf32>
    %109 = math.exp %108 : vector<2x128xf32>
    %cst_20 = arith.constant 1.000000e+00 : f32
    %110 = vector.broadcast %cst_20 : f32 to vector<2x128xf32>
    %111 = arith.addf %110, %109 : vector<2x128xf32>
    %112 = arith.divf %110, %111 : vector<2x128xf32>
    %113 = vector.extract_strided_slice %112 {offsets = [0, 0], sizes = [2, 32], strides = [1, 1]} : vector<2x128xf32> to vector<2x32xf32>
    %114 = vector.extract_strided_slice %112 {offsets = [0, 32], sizes = [2, 32], strides = [1, 1]} : vector<2x128xf32> to vector<2x32xf32>
    %115 = vector.extract_strided_slice %112 {offsets = [0, 96], sizes = [2, 32], strides = [1, 1]} : vector<2x128xf32> to vector<2x32xf32>
    %116 = vector.extract_strided_slice %107 {offsets = [0, 64], sizes = [2, 32], strides = [1, 1]} : vector<2x128xf32> to vector<2x32xf32>
    %117 = math.tanh %116 : vector<2x32xf32>
    %118 = arith.mulf %114, %101 : vector<2x32xf32>
    %119 = arith.mulf %113, %117 : vector<2x32xf32>
    %120 = arith.addf %118, %119 : vector<2x32xf32>
    %121 = math.tanh %120 : vector<2x32xf32>
    %122 = arith.mulf %115, %121 : vector<2x32xf32>
    %123 = vector.extract_strided_slice %6 {offsets = [12, 0], sizes = [2, 128], strides = [1, 1]} : vector<16x128xf32> to vector<2x128xf32>
    %124 = arith.truncf %122 : vector<2x32xf32> to vector<2x32xbf16>
    %cst_21 = arith.constant dense<0.000000e+00> : vector<2x128xf32>
    %125 = tpu.matmul %124, %2, %cst_21 {dimension_numbers = #tpu.dot_dimension_numbers<[1], [0], [0], [1], [0, 0, 1, 1], [], []>} : vector<2x32xbf16>, vector<32x128xbf16>, vector<2x128xf32> -> vector<2x128xf32>
    %126 = arith.addf %123, %125 : vector<2x128xf32>
    %127 = arith.negf %126 : vector<2x128xf32>
    %128 = math.exp %127 : vector<2x128xf32>
    %cst_22 = arith.constant 1.000000e+00 : f32
    %129 = vector.broadcast %cst_22 : f32 to vector<2x128xf32>
    %130 = arith.addf %129, %128 : vector<2x128xf32>
    %131 = arith.divf %129, %130 : vector<2x128xf32>
    %132 = vector.extract_strided_slice %131 {offsets = [0, 0], sizes = [2, 32], strides = [1, 1]} : vector<2x128xf32> to vector<2x32xf32>
    %133 = vector.extract_strided_slice %131 {offsets = [0, 32], sizes = [2, 32], strides = [1, 1]} : vector<2x128xf32> to vector<2x32xf32>
    %134 = vector.extract_strided_slice %131 {offsets = [0, 96], sizes = [2, 32], strides = [1, 1]} : vector<2x128xf32> to vector<2x32xf32>
    %135 = vector.extract_strided_slice %126 {offsets = [0, 64], sizes = [2, 32], strides = [1, 1]} : vector<2x128xf32> to vector<2x32xf32>
    %136 = math.tanh %135 : vector<2x32xf32>
    %137 = arith.mulf %133, %120 : vector<2x32xf32>
    %138 = arith.mulf %132, %136 : vector<2x32xf32>
    %139 = arith.addf %137, %138 : vector<2x32xf32>
    %140 = math.tanh %139 : vector<2x32xf32>
    %141 = arith.mulf %134, %140 : vector<2x32xf32>
    %142 = vector.extract_strided_slice %6 {offsets = [14, 0], sizes = [2, 128], strides = [1, 1]} : vector<16x128xf32> to vector<2x128xf32>
    %143 = arith.truncf %141 : vector<2x32xf32> to vector<2x32xbf16>
    %cst_23 = arith.constant dense<0.000000e+00> : vector<2x128xf32>
    %144 = tpu.matmul %143, %2, %cst_23 {dimension_numbers = #tpu.dot_dimension_numbers<[1], [0], [0], [1], [0, 0, 1, 1], [], []>} : vector<2x32xbf16>, vector<32x128xbf16>, vector<2x128xf32> -> vector<2x128xf32>
    %145 = arith.addf %142, %144 : vector<2x128xf32>
    %146 = arith.negf %145 : vector<2x128xf32>
    %147 = math.exp %146 : vector<2x128xf32>
    %cst_24 = arith.constant 1.000000e+00 : f32
    %148 = vector.broadcast %cst_24 : f32 to vector<2x128xf32>
    %149 = arith.addf %148, %147 : vector<2x128xf32>
    %150 = arith.divf %148, %149 : vector<2x128xf32>
    %151 = vector.extract_strided_slice %150 {offsets = [0, 0], sizes = [2, 32], strides = [1, 1]} : vector<2x128xf32> to vector<2x32xf32>
    %152 = vector.extract_strided_slice %150 {offsets = [0, 32], sizes = [2, 32], strides = [1, 1]} : vector<2x128xf32> to vector<2x32xf32>
    %153 = vector.extract_strided_slice %150 {offsets = [0, 96], sizes = [2, 32], strides = [1, 1]} : vector<2x128xf32> to vector<2x32xf32>
    %154 = vector.extract_strided_slice %145 {offsets = [0, 64], sizes = [2, 32], strides = [1, 1]} : vector<2x128xf32> to vector<2x32xf32>
    %155 = math.tanh %154 : vector<2x32xf32>
    %156 = arith.mulf %152, %139 : vector<2x32xf32>
    %157 = arith.mulf %151, %155 : vector<2x32xf32>
    %158 = arith.addf %156, %157 : vector<2x32xf32>
    %159 = math.tanh %158 : vector<2x32xf32>
    %160 = arith.mulf %153, %159 : vector<2x32xf32>
    %c0_25 = arith.constant 0 : index
    %c0_26 = arith.constant 0 : index
    %161 = vector.load %arg1[%c0_25, %c0_26] : memref<24x16xbf16, #tpu.memory_space<vmem>>, vector<24x16xbf16>
    %c0_27 = arith.constant 0 : index
    %c0_28 = arith.constant 0 : index
    %c0_29 = arith.constant 0 : index
    %162 = vector.load %arg8[%c0_27, %c0_28, %c0_29] : memref<2x16x128xbf16, #tpu.memory_space<vmem>>, vector<2x16x128xbf16>
    %c0_30 = arith.constant 0 : index
    %c0_31 = arith.constant 0 : index
    %c0_32 = arith.constant 0 : index
    %163 = vector.load %arg9[%c0_30, %c0_31, %c0_32] : memref<2x32x128xbf16, #tpu.memory_space<vmem>>, vector<2x32x128xbf16>
    %c0_33 = arith.constant 0 : index
    %c0_34 = arith.constant 0 : index
    %c0_35 = arith.constant 0 : index
    %164 = vector.load %arg10[%c0_33, %c0_34, %c0_35] : memref<2x1x128xf32, #tpu.memory_space<vmem>>, vector<2x1x128xf32>
    %c0_36 = arith.constant 0 : index
    %c0_37 = arith.constant 0 : index
    %165 = vector.load %arg3[%c0_36, %c0_37] : memref<2x1xi32, #tpu.memory_space<vmem>>, vector<2x1xi32>
    %166 = vector.extract_strided_slice %162 {offsets = [0, 0, 0], sizes = [1, 16, 128], strides = [1, 1, 1]} : vector<2x16x128xbf16> to vector<1x16x128xbf16>
    %167 = vector.shape_cast %166 : vector<1x16x128xbf16> to vector<16x128xbf16>
    %cst_38 = arith.constant dense<0.000000e+00> : vector<24x128xf32>
    %168 = tpu.matmul %161, %167, %cst_38 {dimension_numbers = #tpu.dot_dimension_numbers<[1], [0], [0], [1], [0, 0, 1, 1], [], []>} : vector<24x16xbf16>, vector<16x128xbf16>, vector<24x128xf32> -> vector<24x128xf32>
    %169 = vector.extract_strided_slice %164 {offsets = [0, 0, 0], sizes = [1, 1, 128], strides = [1, 1, 1]} : vector<2x1x128xf32> to vector<1x1x128xf32>
    %170 = vector.shape_cast %169 : vector<1x1x128xf32> to vector<1x128xf32>
    %171 = vector.broadcast %170 : vector<1x128xf32> to vector<24x128xf32>
    %172 = arith.addf %168, %171 : vector<24x128xf32>
    %173 = vector.extract_strided_slice %162 {offsets = [1, 0, 0], sizes = [1, 16, 128], strides = [1, 1, 1]} : vector<2x16x128xbf16> to vector<1x16x128xbf16>
    %174 = vector.shape_cast %173 : vector<1x16x128xbf16> to vector<16x128xbf16>
    %cst_39 = arith.constant dense<0.000000e+00> : vector<24x128xf32>
    %175 = tpu.matmul %161, %174, %cst_39 {dimension_numbers = #tpu.dot_dimension_numbers<[1], [0], [0], [1], [0, 0, 1, 1], [], []>} : vector<24x16xbf16>, vector<16x128xbf16>, vector<24x128xf32> -> vector<24x128xf32>
    %176 = vector.extract_strided_slice %164 {offsets = [1, 0, 0], sizes = [1, 1, 128], strides = [1, 1, 1]} : vector<2x1x128xf32> to vector<1x1x128xf32>
    %177 = vector.shape_cast %176 : vector<1x1x128xf32> to vector<1x128xf32>
    %178 = vector.broadcast %177 : vector<1x128xf32> to vector<24x128xf32>
    %179 = arith.addf %175, %178 : vector<24x128xf32>
    %180 = vector.extract_strided_slice %163 {offsets = [0, 0, 0], sizes = [1, 32, 128], strides = [1, 1, 1]} : vector<2x32x128xbf16> to vector<1x32x128xbf16>
    %181 = vector.shape_cast %180 : vector<1x32x128xbf16> to vector<32x128xbf16>
    %182 = vector.extract_strided_slice %163 {offsets = [1, 0, 0], sizes = [1, 32, 128], strides = [1, 1, 1]} : vector<2x32x128xbf16> to vector<1x32x128xbf16>
    %183 = vector.shape_cast %182 : vector<1x32x128xbf16> to vector<32x128xbf16>
    %cst_40 = arith.constant 0.000000e+00 : f32
    %184 = vector.broadcast %cst_40 : f32 to vector<2x32xf32>
    %cst_41 = arith.constant 0xFF800000 : f32
    %185 = vector.broadcast %cst_41 : f32 to vector<2x32xf32>
    %186 = vector.extract_strided_slice %172 {offsets = [0, 0], sizes = [2, 128], strides = [1, 1]} : vector<24x128xf32> to vector<2x128xf32>
    %187 = arith.truncf %184 : vector<2x32xf32> to vector<2x32xbf16>
    %cst_42 = arith.constant dense<0.000000e+00> : vector<2x128xf32>
    %188 = tpu.matmul %187, %181, %cst_42 {dimension_numbers = #tpu.dot_dimension_numbers<[1], [0], [0], [1], [0, 0, 1, 1], [], []>} : vector<2x32xbf16>, vector<32x128xbf16>, vector<2x128xf32> -> vector<2x128xf32>
    %189 = arith.addf %186, %188 : vector<2x128xf32>
    %190 = vector.extract_strided_slice %179 {offsets = [22, 0], sizes = [2, 128], strides = [1, 1]} : vector<24x128xf32> to vector<2x128xf32>
    %191 = arith.truncf %184 : vector<2x32xf32> to vector<2x32xbf16>
    %cst_43 = arith.constant dense<0.000000e+00> : vector<2x128xf32>
    %192 = tpu.matmul %191, %183, %cst_43 {dimension_numbers = #tpu.dot_dimension_numbers<[1], [0], [0], [1], [0, 0, 1, 1], [], []>} : vector<2x32xbf16>, vector<32x128xbf16>, vector<2x128xf32> -> vector<2x128xf32>
    %193 = arith.addf %190, %192 : vector<2x128xf32>
    %194 = arith.negf %189 : vector<2x128xf32>
    %195 = math.exp %194 : vector<2x128xf32>
    %cst_44 = arith.constant 1.000000e+00 : f32
    %196 = vector.broadcast %cst_44 : f32 to vector<2x128xf32>
    %197 = arith.addf %196, %195 : vector<2x128xf32>
    %198 = arith.divf %196, %197 : vector<2x128xf32>
    %199 = vector.extract_strided_slice %198 {offsets = [0, 0], sizes = [2, 32], strides = [1, 1]} : vector<2x128xf32> to vector<2x32xf32>
    %200 = vector.extract_strided_slice %198 {offsets = [0, 32], sizes = [2, 32], strides = [1, 1]} : vector<2x128xf32> to vector<2x32xf32>
    %201 = vector.extract_strided_slice %198 {offsets = [0, 96], sizes = [2, 32], strides = [1, 1]} : vector<2x128xf32> to vector<2x32xf32>
    %202 = vector.extract_strided_slice %189 {offsets = [0, 64], sizes = [2, 32], strides = [1, 1]} : vector<2x128xf32> to vector<2x32xf32>
    %203 = math.tanh %202 : vector<2x32xf32>
    %204 = arith.mulf %200, %184 : vector<2x32xf32>
    %205 = arith.mulf %199, %203 : vector<2x32xf32>
    %206 = arith.addf %204, %205 : vector<2x32xf32>
    %207 = math.tanh %206 : vector<2x32xf32>
    %208 = arith.mulf %201, %207 : vector<2x32xf32>
    %209 = arith.negf %193 : vector<2x128xf32>
    %210 = math.exp %209 : vector<2x128xf32>
    %cst_45 = arith.constant 1.000000e+00 : f32
    %211 = vector.broadcast %cst_45 : f32 to vector<2x128xf32>
    %212 = arith.addf %211, %210 : vector<2x128xf32>
    %213 = arith.divf %211, %212 : vector<2x128xf32>
    %214 = vector.extract_strided_slice %213 {offsets = [0, 0], sizes = [2, 32], strides = [1, 1]} : vector<2x128xf32> to vector<2x32xf32>
    %215 = vector.extract_strided_slice %213 {offsets = [0, 32], sizes = [2, 32], strides = [1, 1]} : vector<2x128xf32> to vector<2x32xf32>
    %216 = vector.extract_strided_slice %213 {offsets = [0, 96], sizes = [2, 32], strides = [1, 1]} : vector<2x128xf32> to vector<2x32xf32>
    %217 = vector.extract_strided_slice %193 {offsets = [0, 64], sizes = [2, 32], strides = [1, 1]} : vector<2x128xf32> to vector<2x32xf32>
    %218 = math.tanh %217 : vector<2x32xf32>
    %219 = arith.mulf %215, %184 : vector<2x32xf32>
    %220 = arith.mulf %214, %218 : vector<2x32xf32>
    %221 = arith.addf %219, %220 : vector<2x32xf32>
    %222 = math.tanh %221 : vector<2x32xf32>
    %223 = arith.mulf %216, %222 : vector<2x32xf32>
    %c0_i32 = arith.constant 0 : i32
    %224 = vector.broadcast %c0_i32 : i32 to vector<2x1xi32>
    %225 = arith.cmpi sgt, %165, %224 : vector<2x1xi32>
    %c11_i32 = arith.constant 11 : i32
    %226 = vector.broadcast %c11_i32 : i32 to vector<2x1xi32>
    %227 = arith.cmpi sgt, %165, %226 : vector<2x1xi32>
    %228 = vector.shape_cast %225 : vector<2x1xi1> to vector<2x1xi1>
    %229 = vector.broadcast %228 : vector<2x1xi1> to vector<2x32xi1>
    %230 = arith.select %229, %208, %184 : vector<2x32xi1>, vector<2x32xf32>
    %231 = vector.shape_cast %225 : vector<2x1xi1> to vector<2x1xi1>
    %232 = vector.broadcast %231 : vector<2x1xi1> to vector<2x32xi1>
    %233 = arith.select %232, %206, %184 : vector<2x32xi1>, vector<2x32xf32>
    %234 = vector.shape_cast %227 : vector<2x1xi1> to vector<2x1xi1>
    %235 = vector.broadcast %234 : vector<2x1xi1> to vector<2x32xi1>
    %236 = arith.select %235, %223, %184 : vector<2x32xi1>, vector<2x32xf32>
    %237 = vector.shape_cast %227 : vector<2x1xi1> to vector<2x1xi1>
    %238 = vector.broadcast %237 : vector<2x1xi1> to vector<2x32xi1>
    %239 = arith.select %238, %221, %184 : vector<2x32xi1>, vector<2x32xf32>
    %cst_46 = arith.constant 0.000000e+00 : f32
    %240 = vector.shape_cast %225 : vector<2x1xi1> to vector<2x1xi1>
    %241 = vector.broadcast %240 : vector<2x1xi1> to vector<2x32xi1>
    %242 = vector.broadcast %cst_46 : f32 to vector<2x32xf32>
    %243 = arith.select %241, %208, %242 : vector<2x32xi1>, vector<2x32xf32>
    %244 = arith.addf %184, %243 : vector<2x32xf32>
    %cst_47 = arith.constant 0.000000e+00 : f32
    %245 = vector.shape_cast %227 : vector<2x1xi1> to vector<2x1xi1>
    %246 = vector.broadcast %245 : vector<2x1xi1> to vector<2x32xi1>
    %247 = vector.broadcast %cst_47 : f32 to vector<2x32xf32>
    %248 = arith.select %246, %223, %247 : vector<2x32xi1>, vector<2x32xf32>
    %249 = arith.addf %184, %248 : vector<2x32xf32>
    %cst_48 = arith.constant 0xFF800000 : f32
    %250 = vector.shape_cast %225 : vector<2x1xi1> to vector<2x1xi1>
    %251 = vector.broadcast %250 : vector<2x1xi1> to vector<2x32xi1>
    %252 = vector.broadcast %cst_48 : f32 to vector<2x32xf32>
    %253 = arith.select %251, %208, %252 : vector<2x32xi1>, vector<2x32xf32>
    %254 = arith.maximumf %185, %253 : vector<2x32xf32>
    %cst_49 = arith.constant 0xFF800000 : f32
    %255 = vector.shape_cast %227 : vector<2x1xi1> to vector<2x1xi1>
    %256 = vector.broadcast %255 : vector<2x1xi1> to vector<2x32xi1>
    %257 = vector.broadcast %cst_49 : f32 to vector<2x32xf32>
    %258 = arith.select %256, %223, %257 : vector<2x32xi1>, vector<2x32xf32>
    %259 = arith.maximumf %185, %258 : vector<2x32xf32>
    %260 = vector.extract_strided_slice %172 {offsets = [2, 0], sizes = [2, 128], strides = [1, 1]} : vector<24x128xf32> to vector<2x128xf32>
    %261 = arith.truncf %230 : vector<2x32xf32> to vector<2x32xbf16>
    %cst_50 = arith.constant dense<0.000000e+00> : vector<2x128xf32>
    %262 = tpu.matmul %261, %181, %cst_50 {dimension_numbers = #tpu.dot_dimension_numbers<[1], [0], [0], [1], [0, 0, 1, 1], [], []>} : vector<2x32xbf16>, vector<32x128xbf16>, vector<2x128xf32> -> vector<2x128xf32>
    %263 = arith.addf %260, %262 : vector<2x128xf32>
    %264 = vector.extract_strided_slice %179 {offsets = [20, 0], sizes = [2, 128], strides = [1, 1]} : vector<24x128xf32> to vector<2x128xf32>
    %265 = arith.truncf %236 : vector<2x32xf32> to vector<2x32xbf16>
    %cst_51 = arith.constant dense<0.000000e+00> : vector<2x128xf32>
    %266 = tpu.matmul %265, %183, %cst_51 {dimension_numbers = #tpu.dot_dimension_numbers<[1], [0], [0], [1], [0, 0, 1, 1], [], []>} : vector<2x32xbf16>, vector<32x128xbf16>, vector<2x128xf32> -> vector<2x128xf32>
    %267 = arith.addf %264, %266 : vector<2x128xf32>
    %268 = arith.negf %263 : vector<2x128xf32>
    %269 = math.exp %268 : vector<2x128xf32>
    %cst_52 = arith.constant 1.000000e+00 : f32
    %270 = vector.broadcast %cst_52 : f32 to vector<2x128xf32>
    %271 = arith.addf %270, %269 : vector<2x128xf32>
    %272 = arith.divf %270, %271 : vector<2x128xf32>
    %273 = vector.extract_strided_slice %272 {offsets = [0, 0], sizes = [2, 32], strides = [1, 1]} : vector<2x128xf32> to vector<2x32xf32>
    %274 = vector.extract_strided_slice %272 {offsets = [0, 32], sizes = [2, 32], strides = [1, 1]} : vector<2x128xf32> to vector<2x32xf32>
    %275 = vector.extract_strided_slice %272 {offsets = [0, 96], sizes = [2, 32], strides = [1, 1]} : vector<2x128xf32> to vector<2x32xf32>
    %276 = vector.extract_strided_slice %263 {offsets = [0, 64], sizes = [2, 32], strides = [1, 1]} : vector<2x128xf32> to vector<2x32xf32>
    %277 = math.tanh %276 : vector<2x32xf32>
    %278 = arith.mulf %274, %233 : vector<2x32xf32>
    %279 = arith.mulf %273, %277 : vector<2x32xf32>
    %280 = arith.addf %278, %279 : vector<2x32xf32>
    %281 = math.tanh %280 : vector<2x32xf32>
    %282 = arith.mulf %275, %281 : vector<2x32xf32>
    %283 = arith.negf %267 : vector<2x128xf32>
    %284 = math.exp %283 : vector<2x128xf32>
    %cst_53 = arith.constant 1.000000e+00 : f32
    %285 = vector.broadcast %cst_53 : f32 to vector<2x128xf32>
    %286 = arith.addf %285, %284 : vector<2x128xf32>
    %287 = arith.divf %285, %286 : vector<2x128xf32>
    %288 = vector.extract_strided_slice %287 {offsets = [0, 0], sizes = [2, 32], strides = [1, 1]} : vector<2x128xf32> to vector<2x32xf32>
    %289 = vector.extract_strided_slice %287 {offsets = [0, 32], sizes = [2, 32], strides = [1, 1]} : vector<2x128xf32> to vector<2x32xf32>
    %290 = vector.extract_strided_slice %287 {offsets = [0, 96], sizes = [2, 32], strides = [1, 1]} : vector<2x128xf32> to vector<2x32xf32>
    %291 = vector.extract_strided_slice %267 {offsets = [0, 64], sizes = [2, 32], strides = [1, 1]} : vector<2x128xf32> to vector<2x32xf32>
    %292 = math.tanh %291 : vector<2x32xf32>
    %293 = arith.mulf %289, %239 : vector<2x32xf32>
    %294 = arith.mulf %288, %292 : vector<2x32xf32>
    %295 = arith.addf %293, %294 : vector<2x32xf32>
    %296 = math.tanh %295 : vector<2x32xf32>
    %297 = arith.mulf %290, %296 : vector<2x32xf32>
    %c1_i32 = arith.constant 1 : i32
    %298 = vector.broadcast %c1_i32 : i32 to vector<2x1xi32>
    %299 = arith.cmpi sgt, %165, %298 : vector<2x1xi32>
    %c10_i32 = arith.constant 10 : i32
    %300 = vector.broadcast %c10_i32 : i32 to vector<2x1xi32>
    %301 = arith.cmpi sgt, %165, %300 : vector<2x1xi32>
    %302 = vector.shape_cast %299 : vector<2x1xi1> to vector<2x1xi1>
    %303 = vector.broadcast %302 : vector<2x1xi1> to vector<2x32xi1>
    %304 = arith.select %303, %282, %230 : vector<2x32xi1>, vector<2x32xf32>
    %305 = vector.shape_cast %299 : vector<2x1xi1> to vector<2x1xi1>
    %306 = vector.broadcast %305 : vector<2x1xi1> to vector<2x32xi1>
    %307 = arith.select %306, %280, %233 : vector<2x32xi1>, vector<2x32xf32>
    %308 = vector.shape_cast %301 : vector<2x1xi1> to vector<2x1xi1>
    %309 = vector.broadcast %308 : vector<2x1xi1> to vector<2x32xi1>
    %310 = arith.select %309, %297, %236 : vector<2x32xi1>, vector<2x32xf32>
    %311 = vector.shape_cast %301 : vector<2x1xi1> to vector<2x1xi1>
    %312 = vector.broadcast %311 : vector<2x1xi1> to vector<2x32xi1>
    %313 = arith.select %312, %295, %239 : vector<2x32xi1>, vector<2x32xf32>
    %cst_54 = arith.constant 0.000000e+00 : f32
    %314 = vector.shape_cast %299 : vector<2x1xi1> to vector<2x1xi1>
    %315 = vector.broadcast %314 : vector<2x1xi1> to vector<2x32xi1>
    %316 = vector.broadcast %cst_54 : f32 to vector<2x32xf32>
    %317 = arith.select %315, %282, %316 : vector<2x32xi1>, vector<2x32xf32>
    %318 = arith.addf %244, %317 : vector<2x32xf32>
    %cst_55 = arith.constant 0.000000e+00 : f32
    %319 = vector.shape_cast %301 : vector<2x1xi1> to vector<2x1xi1>
    %320 = vector.broadcast %319 : vector<2x1xi1> to vector<2x32xi1>
    %321 = vector.broadcast %cst_55 : f32 to vector<2x32xf32>
    %322 = arith.select %320, %297, %321 : vector<2x32xi1>, vector<2x32xf32>
    %323 = arith.addf %249, %322 : vector<2x32xf32>
    %cst_56 = arith.constant 0xFF800000 : f32
    %324 = vector.shape_cast %299 : vector<2x1xi1> to vector<2x1xi1>
    %325 = vector.broadcast %324 : vector<2x1xi1> to vector<2x32xi1>
    %326 = vector.broadcast %cst_56 : f32 to vector<2x32xf32>
    %327 = arith.select %325, %282, %326 : vector<2x32xi1>, vector<2x32xf32>
    %328 = arith.maximumf %254, %327 : vector<2x32xf32>
    %cst_57 = arith.constant 0xFF800000 : f32
    %329 = vector.shape_cast %301 : vector<2x1xi1> to vector<2x1xi1>
    %330 = vector.broadcast %329 : vector<2x1xi1> to vector<2x32xi1>
    %331 = vector.broadcast %cst_57 : f32 to vector<2x32xf32>
    %332 = arith.select %330, %297, %331 : vector<2x32xi1>, vector<2x32xf32>
    %333 = arith.maximumf %259, %332 : vector<2x32xf32>
    %334 = vector.extract_strided_slice %172 {offsets = [4, 0], sizes = [2, 128], strides = [1, 1]} : vector<24x128xf32> to vector<2x128xf32>
    %335 = arith.truncf %304 : vector<2x32xf32> to vector<2x32xbf16>
    %cst_58 = arith.constant dense<0.000000e+00> : vector<2x128xf32>
    %336 = tpu.matmul %335, %181, %cst_58 {dimension_numbers = #tpu.dot_dimension_numbers<[1], [0], [0], [1], [0, 0, 1, 1], [], []>} : vector<2x32xbf16>, vector<32x128xbf16>, vector<2x128xf32> -> vector<2x128xf32>
    %337 = arith.addf %334, %336 : vector<2x128xf32>
    %338 = vector.extract_strided_slice %179 {offsets = [18, 0], sizes = [2, 128], strides = [1, 1]} : vector<24x128xf32> to vector<2x128xf32>
    %339 = arith.truncf %310 : vector<2x32xf32> to vector<2x32xbf16>
    %cst_59 = arith.constant dense<0.000000e+00> : vector<2x128xf32>
    %340 = tpu.matmul %339, %183, %cst_59 {dimension_numbers = #tpu.dot_dimension_numbers<[1], [0], [0], [1], [0, 0, 1, 1], [], []>} : vector<2x32xbf16>, vector<32x128xbf16>, vector<2x128xf32> -> vector<2x128xf32>
    %341 = arith.addf %338, %340 : vector<2x128xf32>
    %342 = arith.negf %337 : vector<2x128xf32>
    %343 = math.exp %342 : vector<2x128xf32>
    %cst_60 = arith.constant 1.000000e+00 : f32
    %344 = vector.broadcast %cst_60 : f32 to vector<2x128xf32>
    %345 = arith.addf %344, %343 : vector<2x128xf32>
    %346 = arith.divf %344, %345 : vector<2x128xf32>
    %347 = vector.extract_strided_slice %346 {offsets = [0, 0], sizes = [2, 32], strides = [1, 1]} : vector<2x128xf32> to vector<2x32xf32>
    %348 = vector.extract_strided_slice %346 {offsets = [0, 32], sizes = [2, 32], strides = [1, 1]} : vector<2x128xf32> to vector<2x32xf32>
    %349 = vector.extract_strided_slice %346 {offsets = [0, 96], sizes = [2, 32], strides = [1, 1]} : vector<2x128xf32> to vector<2x32xf32>
    %350 = vector.extract_strided_slice %337 {offsets = [0, 64], sizes = [2, 32], strides = [1, 1]} : vector<2x128xf32> to vector<2x32xf32>
    %351 = math.tanh %350 : vector<2x32xf32>
    %352 = arith.mulf %348, %307 : vector<2x32xf32>
    %353 = arith.mulf %347, %351 : vector<2x32xf32>
    %354 = arith.addf %352, %353 : vector<2x32xf32>
    %355 = math.tanh %354 : vector<2x32xf32>
    %356 = arith.mulf %349, %355 : vector<2x32xf32>
    %357 = arith.negf %341 : vector<2x128xf32>
    %358 = math.exp %357 : vector<2x128xf32>
    %cst_61 = arith.constant 1.000000e+00 : f32
    %359 = vector.broadcast %cst_61 : f32 to vector<2x128xf32>
    %360 = arith.addf %359, %358 : vector<2x128xf32>
    %361 = arith.divf %359, %360 : vector<2x128xf32>
    %362 = vector.extract_strided_slice %361 {offsets = [0, 0], sizes = [2, 32], strides = [1, 1]} : vector<2x128xf32> to vector<2x32xf32>
    %363 = vector.extract_strided_slice %361 {offsets = [0, 32], sizes = [2, 32], strides = [1, 1]} : vector<2x128xf32> to vector<2x32xf32>
    %364 = vector.extract_strided_slice %361 {offsets = [0, 96], sizes = [2, 32], strides = [1, 1]} : vector<2x128xf32> to vector<2x32xf32>
    %365 = vector.extract_strided_slice %341 {offsets = [0, 64], sizes = [2, 32], strides = [1, 1]} : vector<2x128xf32> to vector<2x32xf32>
    %366 = math.tanh %365 : vector<2x32xf32>
    %367 = arith.mulf %363, %313 : vector<2x32xf32>
    %368 = arith.mulf %362, %366 : vector<2x32xf32>
    %369 = arith.addf %367, %368 : vector<2x32xf32>
    %370 = math.tanh %369 : vector<2x32xf32>
    %371 = arith.mulf %364, %370 : vector<2x32xf32>
    %c2_i32 = arith.constant 2 : i32
    %372 = vector.broadcast %c2_i32 : i32 to vector<2x1xi32>
    %373 = arith.cmpi sgt, %165, %372 : vector<2x1xi32>
    %c9_i32 = arith.constant 9 : i32
    %374 = vector.broadcast %c9_i32 : i32 to vector<2x1xi32>
    %375 = arith.cmpi sgt, %165, %374 : vector<2x1xi32>
    %376 = vector.shape_cast %373 : vector<2x1xi1> to vector<2x1xi1>
    %377 = vector.broadcast %376 : vector<2x1xi1> to vector<2x32xi1>
    %378 = arith.select %377, %356, %304 : vector<2x32xi1>, vector<2x32xf32>
    %379 = vector.shape_cast %373 : vector<2x1xi1> to vector<2x1xi1>
    %380 = vector.broadcast %379 : vector<2x1xi1> to vector<2x32xi1>
    %381 = arith.select %380, %354, %307 : vector<2x32xi1>, vector<2x32xf32>
    %382 = vector.shape_cast %375 : vector<2x1xi1> to vector<2x1xi1>
    %383 = vector.broadcast %382 : vector<2x1xi1> to vector<2x32xi1>
    %384 = arith.select %383, %371, %310 : vector<2x32xi1>, vector<2x32xf32>
    %385 = vector.shape_cast %375 : vector<2x1xi1> to vector<2x1xi1>
    %386 = vector.broadcast %385 : vector<2x1xi1> to vector<2x32xi1>
    %387 = arith.select %386, %369, %313 : vector<2x32xi1>, vector<2x32xf32>
    %cst_62 = arith.constant 0.000000e+00 : f32
    %388 = vector.shape_cast %373 : vector<2x1xi1> to vector<2x1xi1>
    %389 = vector.broadcast %388 : vector<2x1xi1> to vector<2x32xi1>
    %390 = vector.broadcast %cst_62 : f32 to vector<2x32xf32>
    %391 = arith.select %389, %356, %390 : vector<2x32xi1>, vector<2x32xf32>
    %392 = arith.addf %318, %391 : vector<2x32xf32>
    %cst_63 = arith.constant 0.000000e+00 : f32
    %393 = vector.shape_cast %375 : vector<2x1xi1> to vector<2x1xi1>
    %394 = vector.broadcast %393 : vector<2x1xi1> to vector<2x32xi1>
    %395 = vector.broadcast %cst_63 : f32 to vector<2x32xf32>
    %396 = arith.select %394, %371, %395 : vector<2x32xi1>, vector<2x32xf32>
    %397 = arith.addf %323, %396 : vector<2x32xf32>
    %cst_64 = arith.constant 0xFF800000 : f32
    %398 = vector.shape_cast %373 : vector<2x1xi1> to vector<2x1xi1>
    %399 = vector.broadcast %398 : vector<2x1xi1> to vector<2x32xi1>
    %400 = vector.broadcast %cst_64 : f32 to vector<2x32xf32>
    %401 = arith.select %399, %356, %400 : vector<2x32xi1>, vector<2x32xf32>
    %402 = arith.maximumf %328, %401 : vector<2x32xf32>
    %cst_65 = arith.constant 0xFF800000 : f32
    %403 = vector.shape_cast %375 : vector<2x1xi1> to vector<2x1xi1>
    %404 = vector.broadcast %403 : vector<2x1xi1> to vector<2x32xi1>
    %405 = vector.broadcast %cst_65 : f32 to vector<2x32xf32>
    %406 = arith.select %404, %371, %405 : vector<2x32xi1>, vector<2x32xf32>
    %407 = arith.maximumf %333, %406 : vector<2x32xf32>
    %408 = vector.extract_strided_slice %172 {offsets = [6, 0], sizes = [2, 128], strides = [1, 1]} : vector<24x128xf32> to vector<2x128xf32>
    %409 = arith.truncf %378 : vector<2x32xf32> to vector<2x32xbf16>
    %cst_66 = arith.constant dense<0.000000e+00> : vector<2x128xf32>
    %410 = tpu.matmul %409, %181, %cst_66 {dimension_numbers = #tpu.dot_dimension_numbers<[1], [0], [0], [1], [0, 0, 1, 1], [], []>} : vector<2x32xbf16>, vector<32x128xbf16>, vector<2x128xf32> -> vector<2x128xf32>
    %411 = arith.addf %408, %410 : vector<2x128xf32>
    %412 = vector.extract_strided_slice %179 {offsets = [16, 0], sizes = [2, 128], strides = [1, 1]} : vector<24x128xf32> to vector<2x128xf32>
    %413 = arith.truncf %384 : vector<2x32xf32> to vector<2x32xbf16>
    %cst_67 = arith.constant dense<0.000000e+00> : vector<2x128xf32>
    %414 = tpu.matmul %413, %183, %cst_67 {dimension_numbers = #tpu.dot_dimension_numbers<[1], [0], [0], [1], [0, 0, 1, 1], [], []>} : vector<2x32xbf16>, vector<32x128xbf16>, vector<2x128xf32> -> vector<2x128xf32>
    %415 = arith.addf %412, %414 : vector<2x128xf32>
    %416 = arith.negf %411 : vector<2x128xf32>
    %417 = math.exp %416 : vector<2x128xf32>
    %cst_68 = arith.constant 1.000000e+00 : f32
    %418 = vector.broadcast %cst_68 : f32 to vector<2x128xf32>
    %419 = arith.addf %418, %417 : vector<2x128xf32>
    %420 = arith.divf %418, %419 : vector<2x128xf32>
    %421 = vector.extract_strided_slice %420 {offsets = [0, 0], sizes = [2, 32], strides = [1, 1]} : vector<2x128xf32> to vector<2x32xf32>
    %422 = vector.extract_strided_slice %420 {offsets = [0, 32], sizes = [2, 32], strides = [1, 1]} : vector<2x128xf32> to vector<2x32xf32>
    %423 = vector.extract_strided_slice %420 {offsets = [0, 96], sizes = [2, 32], strides = [1, 1]} : vector<2x128xf32> to vector<2x32xf32>
    %424 = vector.extract_strided_slice %411 {offsets = [0, 64], sizes = [2, 32], strides = [1, 1]} : vector<2x128xf32> to vector<2x32xf32>
    %425 = math.tanh %424 : vector<2x32xf32>
    %426 = arith.mulf %422, %381 : vector<2x32xf32>
    %427 = arith.mulf %421, %425 : vector<2x32xf32>
    %428 = arith.addf %426, %427 : vector<2x32xf32>
    %429 = math.tanh %428 : vector<2x32xf32>
    %430 = arith.mulf %423, %429 : vector<2x32xf32>
    %431 = arith.negf %415 : vector<2x128xf32>
    %432 = math.exp %431 : vector<2x128xf32>
    %cst_69 = arith.constant 1.000000e+00 : f32
    %433 = vector.broadcast %cst_69 : f32 to vector<2x128xf32>
    %434 = arith.addf %433, %432 : vector<2x128xf32>
    %435 = arith.divf %433, %434 : vector<2x128xf32>
    %436 = vector.extract_strided_slice %435 {offsets = [0, 0], sizes = [2, 32], strides = [1, 1]} : vector<2x128xf32> to vector<2x32xf32>
    %437 = vector.extract_strided_slice %435 {offsets = [0, 32], sizes = [2, 32], strides = [1, 1]} : vector<2x128xf32> to vector<2x32xf32>
    %438 = vector.extract_strided_slice %435 {offsets = [0, 96], sizes = [2, 32], strides = [1, 1]} : vector<2x128xf32> to vector<2x32xf32>
    %439 = vector.extract_strided_slice %415 {offsets = [0, 64], sizes = [2, 32], strides = [1, 1]} : vector<2x128xf32> to vector<2x32xf32>
    %440 = math.tanh %439 : vector<2x32xf32>
    %441 = arith.mulf %437, %387 : vector<2x32xf32>
    %442 = arith.mulf %436, %440 : vector<2x32xf32>
    %443 = arith.addf %441, %442 : vector<2x32xf32>
    %444 = math.tanh %443 : vector<2x32xf32>
    %445 = arith.mulf %438, %444 : vector<2x32xf32>
    %c3_i32 = arith.constant 3 : i32
    %446 = vector.broadcast %c3_i32 : i32 to vector<2x1xi32>
    %447 = arith.cmpi sgt, %165, %446 : vector<2x1xi32>
    %c8_i32 = arith.constant 8 : i32
    %448 = vector.broadcast %c8_i32 : i32 to vector<2x1xi32>
    %449 = arith.cmpi sgt, %165, %448 : vector<2x1xi32>
    %450 = vector.shape_cast %447 : vector<2x1xi1> to vector<2x1xi1>
    %451 = vector.broadcast %450 : vector<2x1xi1> to vector<2x32xi1>
    %452 = arith.select %451, %430, %378 : vector<2x32xi1>, vector<2x32xf32>
    %453 = vector.shape_cast %447 : vector<2x1xi1> to vector<2x1xi1>
    %454 = vector.broadcast %453 : vector<2x1xi1> to vector<2x32xi1>
    %455 = arith.select %454, %428, %381 : vector<2x32xi1>, vector<2x32xf32>
    %456 = vector.shape_cast %449 : vector<2x1xi1> to vector<2x1xi1>
    %457 = vector.broadcast %456 : vector<2x1xi1> to vector<2x32xi1>
    %458 = arith.select %457, %445, %384 : vector<2x32xi1>, vector<2x32xf32>
    %459 = vector.shape_cast %449 : vector<2x1xi1> to vector<2x1xi1>
    %460 = vector.broadcast %459 : vector<2x1xi1> to vector<2x32xi1>
    %461 = arith.select %460, %443, %387 : vector<2x32xi1>, vector<2x32xf32>
    %cst_70 = arith.constant 0.000000e+00 : f32
    %462 = vector.shape_cast %447 : vector<2x1xi1> to vector<2x1xi1>
    %463 = vector.broadcast %462 : vector<2x1xi1> to vector<2x32xi1>
    %464 = vector.broadcast %cst_70 : f32 to vector<2x32xf32>
    %465 = arith.select %463, %430, %464 : vector<2x32xi1>, vector<2x32xf32>
    %466 = arith.addf %392, %465 : vector<2x32xf32>
    %cst_71 = arith.constant 0.000000e+00 : f32
    %467 = vector.shape_cast %449 : vector<2x1xi1> to vector<2x1xi1>
    %468 = vector.broadcast %467 : vector<2x1xi1> to vector<2x32xi1>
    %469 = vector.broadcast %cst_71 : f32 to vector<2x32xf32>
    %470 = arith.select %468, %445, %469 : vector<2x32xi1>, vector<2x32xf32>
    %471 = arith.addf %397, %470 : vector<2x32xf32>
    %cst_72 = arith.constant 0xFF800000 : f32
    %472 = vector.shape_cast %447 : vector<2x1xi1> to vector<2x1xi1>
    %473 = vector.broadcast %472 : vector<2x1xi1> to vector<2x32xi1>
    %474 = vector.broadcast %cst_72 : f32 to vector<2x32xf32>
    %475 = arith.select %473, %430, %474 : vector<2x32xi1>, vector<2x32xf32>
    %476 = arith.maximumf %402, %475 : vector<2x32xf32>
    %cst_73 = arith.constant 0xFF800000 : f32
    %477 = vector.shape_cast %449 : vector<2x1xi1> to vector<2x1xi1>
    %478 = vector.broadcast %477 : vector<2x1xi1> to vector<2x32xi1>
    %479 = vector.broadcast %cst_73 : f32 to vector<2x32xf32>
    %480 = arith.select %478, %445, %479 : vector<2x32xi1>, vector<2x32xf32>
    %481 = arith.maximumf %407, %480 : vector<2x32xf32>
    %482 = vector.extract_strided_slice %172 {offsets = [8, 0], sizes = [2, 128], strides = [1, 1]} : vector<24x128xf32> to vector<2x128xf32>
    %483 = arith.truncf %452 : vector<2x32xf32> to vector<2x32xbf16>
    %cst_74 = arith.constant dense<0.000000e+00> : vector<2x128xf32>
    %484 = tpu.matmul %483, %181, %cst_74 {dimension_numbers = #tpu.dot_dimension_numbers<[1], [0], [0], [1], [0, 0, 1, 1], [], []>} : vector<2x32xbf16>, vector<32x128xbf16>, vector<2x128xf32> -> vector<2x128xf32>
    %485 = arith.addf %482, %484 : vector<2x128xf32>
    %486 = vector.extract_strided_slice %179 {offsets = [14, 0], sizes = [2, 128], strides = [1, 1]} : vector<24x128xf32> to vector<2x128xf32>
    %487 = arith.truncf %458 : vector<2x32xf32> to vector<2x32xbf16>
    %cst_75 = arith.constant dense<0.000000e+00> : vector<2x128xf32>
    %488 = tpu.matmul %487, %183, %cst_75 {dimension_numbers = #tpu.dot_dimension_numbers<[1], [0], [0], [1], [0, 0, 1, 1], [], []>} : vector<2x32xbf16>, vector<32x128xbf16>, vector<2x128xf32> -> vector<2x128xf32>
    %489 = arith.addf %486, %488 : vector<2x128xf32>
    %490 = arith.negf %485 : vector<2x128xf32>
    %491 = math.exp %490 : vector<2x128xf32>
    %cst_76 = arith.constant 1.000000e+00 : f32
    %492 = vector.broadcast %cst_76 : f32 to vector<2x128xf32>
    %493 = arith.addf %492, %491 : vector<2x128xf32>
    %494 = arith.divf %492, %493 : vector<2x128xf32>
    %495 = vector.extract_strided_slice %494 {offsets = [0, 0], sizes = [2, 32], strides = [1, 1]} : vector<2x128xf32> to vector<2x32xf32>
    %496 = vector.extract_strided_slice %494 {offsets = [0, 32], sizes = [2, 32], strides = [1, 1]} : vector<2x128xf32> to vector<2x32xf32>
    %497 = vector.extract_strided_slice %494 {offsets = [0, 96], sizes = [2, 32], strides = [1, 1]} : vector<2x128xf32> to vector<2x32xf32>
    %498 = vector.extract_strided_slice %485 {offsets = [0, 64], sizes = [2, 32], strides = [1, 1]} : vector<2x128xf32> to vector<2x32xf32>
    %499 = math.tanh %498 : vector<2x32xf32>
    %500 = arith.mulf %496, %455 : vector<2x32xf32>
    %501 = arith.mulf %495, %499 : vector<2x32xf32>
    %502 = arith.addf %500, %501 : vector<2x32xf32>
    %503 = math.tanh %502 : vector<2x32xf32>
    %504 = arith.mulf %497, %503 : vector<2x32xf32>
    %505 = arith.negf %489 : vector<2x128xf32>
    %506 = math.exp %505 : vector<2x128xf32>
    %cst_77 = arith.constant 1.000000e+00 : f32
    %507 = vector.broadcast %cst_77 : f32 to vector<2x128xf32>
    %508 = arith.addf %507, %506 : vector<2x128xf32>
    %509 = arith.divf %507, %508 : vector<2x128xf32>
    %510 = vector.extract_strided_slice %509 {offsets = [0, 0], sizes = [2, 32], strides = [1, 1]} : vector<2x128xf32> to vector<2x32xf32>
    %511 = vector.extract_strided_slice %509 {offsets = [0, 32], sizes = [2, 32], strides = [1, 1]} : vector<2x128xf32> to vector<2x32xf32>
    %512 = vector.extract_strided_slice %509 {offsets = [0, 96], sizes = [2, 32], strides = [1, 1]} : vector<2x128xf32> to vector<2x32xf32>
    %513 = vector.extract_strided_slice %489 {offsets = [0, 64], sizes = [2, 32], strides = [1, 1]} : vector<2x128xf32> to vector<2x32xf32>
    %514 = math.tanh %513 : vector<2x32xf32>
    %515 = arith.mulf %511, %461 : vector<2x32xf32>
    %516 = arith.mulf %510, %514 : vector<2x32xf32>
    %517 = arith.addf %515, %516 : vector<2x32xf32>
    %518 = math.tanh %517 : vector<2x32xf32>
    %519 = arith.mulf %512, %518 : vector<2x32xf32>
    %c4_i32 = arith.constant 4 : i32
    %520 = vector.broadcast %c4_i32 : i32 to vector<2x1xi32>
    %521 = arith.cmpi sgt, %165, %520 : vector<2x1xi32>
    %c7_i32 = arith.constant 7 : i32
    %522 = vector.broadcast %c7_i32 : i32 to vector<2x1xi32>
    %523 = arith.cmpi sgt, %165, %522 : vector<2x1xi32>
    %524 = vector.shape_cast %521 : vector<2x1xi1> to vector<2x1xi1>
    %525 = vector.broadcast %524 : vector<2x1xi1> to vector<2x32xi1>
    %526 = arith.select %525, %504, %452 : vector<2x32xi1>, vector<2x32xf32>
    %527 = vector.shape_cast %521 : vector<2x1xi1> to vector<2x1xi1>
    %528 = vector.broadcast %527 : vector<2x1xi1> to vector<2x32xi1>
    %529 = arith.select %528, %502, %455 : vector<2x32xi1>, vector<2x32xf32>
    %530 = vector.shape_cast %523 : vector<2x1xi1> to vector<2x1xi1>
    %531 = vector.broadcast %530 : vector<2x1xi1> to vector<2x32xi1>
    %532 = arith.select %531, %519, %458 : vector<2x32xi1>, vector<2x32xf32>
    %533 = vector.shape_cast %523 : vector<2x1xi1> to vector<2x1xi1>
    %534 = vector.broadcast %533 : vector<2x1xi1> to vector<2x32xi1>
    %535 = arith.select %534, %517, %461 : vector<2x32xi1>, vector<2x32xf32>
    %cst_78 = arith.constant 0.000000e+00 : f32
    %536 = vector.shape_cast %521 : vector<2x1xi1> to vector<2x1xi1>
    %537 = vector.broadcast %536 : vector<2x1xi1> to vector<2x32xi1>
    %538 = vector.broadcast %cst_78 : f32 to vector<2x32xf32>
    %539 = arith.select %537, %504, %538 : vector<2x32xi1>, vector<2x32xf32>
    %540 = arith.addf %466, %539 : vector<2x32xf32>
    %cst_79 = arith.constant 0.000000e+00 : f32
    %541 = vector.shape_cast %523 : vector<2x1xi1> to vector<2x1xi1>
    %542 = vector.broadcast %541 : vector<2x1xi1> to vector<2x32xi1>
    %543 = vector.broadcast %cst_79 : f32 to vector<2x32xf32>
    %544 = arith.select %542, %519, %543 : vector<2x32xi1>, vector<2x32xf32>
    %545 = arith.addf %471, %544 : vector<2x32xf32>
    %cst_80 = arith.constant 0xFF800000 : f32
    %546 = vector.shape_cast %521 : vector<2x1xi1> to vector<2x1xi1>
    %547 = vector.broadcast %546 : vector<2x1xi1> to vector<2x32xi1>
    %548 = vector.broadcast %cst_80 : f32 to vector<2x32xf32>
    %549 = arith.select %547, %504, %548 : vector<2x32xi1>, vector<2x32xf32>
    %550 = arith.maximumf %476, %549 : vector<2x32xf32>
    %cst_81 = arith.constant 0xFF800000 : f32
    %551 = vector.shape_cast %523 : vector<2x1xi1> to vector<2x1xi1>
    %552 = vector.broadcast %551 : vector<2x1xi1> to vector<2x32xi1>
    %553 = vector.broadcast %cst_81 : f32 to vector<2x32xf32>
    %554 = arith.select %552, %519, %553 : vector<2x32xi1>, vector<2x32xf32>
    %555 = arith.maximumf %481, %554 : vector<2x32xf32>
    %556 = vector.extract_strided_slice %172 {offsets = [10, 0], sizes = [2, 128], strides = [1, 1]} : vector<24x128xf32> to vector<2x128xf32>
    %557 = arith.truncf %526 : vector<2x32xf32> to vector<2x32xbf16>
    %cst_82 = arith.constant dense<0.000000e+00> : vector<2x128xf32>
    %558 = tpu.matmul %557, %181, %cst_82 {dimension_numbers = #tpu.dot_dimension_numbers<[1], [0], [0], [1], [0, 0, 1, 1], [], []>} : vector<2x32xbf16>, vector<32x128xbf16>, vector<2x128xf32> -> vector<2x128xf32>
    %559 = arith.addf %556, %558 : vector<2x128xf32>
    %560 = vector.extract_strided_slice %179 {offsets = [12, 0], sizes = [2, 128], strides = [1, 1]} : vector<24x128xf32> to vector<2x128xf32>
    %561 = arith.truncf %532 : vector<2x32xf32> to vector<2x32xbf16>
    %cst_83 = arith.constant dense<0.000000e+00> : vector<2x128xf32>
    %562 = tpu.matmul %561, %183, %cst_83 {dimension_numbers = #tpu.dot_dimension_numbers<[1], [0], [0], [1], [0, 0, 1, 1], [], []>} : vector<2x32xbf16>, vector<32x128xbf16>, vector<2x128xf32> -> vector<2x128xf32>
    %563 = arith.addf %560, %562 : vector<2x128xf32>
    %564 = arith.negf %559 : vector<2x128xf32>
    %565 = math.exp %564 : vector<2x128xf32>
    %cst_84 = arith.constant 1.000000e+00 : f32
    %566 = vector.broadcast %cst_84 : f32 to vector<2x128xf32>
    %567 = arith.addf %566, %565 : vector<2x128xf32>
    %568 = arith.divf %566, %567 : vector<2x128xf32>
    %569 = vector.extract_strided_slice %568 {offsets = [0, 0], sizes = [2, 32], strides = [1, 1]} : vector<2x128xf32> to vector<2x32xf32>
    %570 = vector.extract_strided_slice %568 {offsets = [0, 32], sizes = [2, 32], strides = [1, 1]} : vector<2x128xf32> to vector<2x32xf32>
    %571 = vector.extract_strided_slice %568 {offsets = [0, 96], sizes = [2, 32], strides = [1, 1]} : vector<2x128xf32> to vector<2x32xf32>
    %572 = vector.extract_strided_slice %559 {offsets = [0, 64], sizes = [2, 32], strides = [1, 1]} : vector<2x128xf32> to vector<2x32xf32>
    %573 = math.tanh %572 : vector<2x32xf32>
    %574 = arith.mulf %570, %529 : vector<2x32xf32>
    %575 = arith.mulf %569, %573 : vector<2x32xf32>
    %576 = arith.addf %574, %575 : vector<2x32xf32>
    %577 = math.tanh %576 : vector<2x32xf32>
    %578 = arith.mulf %571, %577 : vector<2x32xf32>
    %579 = arith.negf %563 : vector<2x128xf32>
    %580 = math.exp %579 : vector<2x128xf32>
    %cst_85 = arith.constant 1.000000e+00 : f32
    %581 = vector.broadcast %cst_85 : f32 to vector<2x128xf32>
    %582 = arith.addf %581, %580 : vector<2x128xf32>
    %583 = arith.divf %581, %582 : vector<2x128xf32>
    %584 = vector.extract_strided_slice %583 {offsets = [0, 0], sizes = [2, 32], strides = [1, 1]} : vector<2x128xf32> to vector<2x32xf32>
    %585 = vector.extract_strided_slice %583 {offsets = [0, 32], sizes = [2, 32], strides = [1, 1]} : vector<2x128xf32> to vector<2x32xf32>
    %586 = vector.extract_strided_slice %583 {offsets = [0, 96], sizes = [2, 32], strides = [1, 1]} : vector<2x128xf32> to vector<2x32xf32>
    %587 = vector.extract_strided_slice %563 {offsets = [0, 64], sizes = [2, 32], strides = [1, 1]} : vector<2x128xf32> to vector<2x32xf32>
    %588 = math.tanh %587 : vector<2x32xf32>
    %589 = arith.mulf %585, %535 : vector<2x32xf32>
    %590 = arith.mulf %584, %588 : vector<2x32xf32>
    %591 = arith.addf %589, %590 : vector<2x32xf32>
    %592 = math.tanh %591 : vector<2x32xf32>
    %593 = arith.mulf %586, %592 : vector<2x32xf32>
    %c5_i32 = arith.constant 5 : i32
    %594 = vector.broadcast %c5_i32 : i32 to vector<2x1xi32>
    %595 = arith.cmpi sgt, %165, %594 : vector<2x1xi32>
    %c6_i32 = arith.constant 6 : i32
    %596 = vector.broadcast %c6_i32 : i32 to vector<2x1xi32>
    %597 = arith.cmpi sgt, %165, %596 : vector<2x1xi32>
    %598 = vector.shape_cast %595 : vector<2x1xi1> to vector<2x1xi1>
    %599 = vector.broadcast %598 : vector<2x1xi1> to vector<2x32xi1>
    %600 = arith.select %599, %578, %526 : vector<2x32xi1>, vector<2x32xf32>
    %601 = vector.shape_cast %595 : vector<2x1xi1> to vector<2x1xi1>
    %602 = vector.broadcast %601 : vector<2x1xi1> to vector<2x32xi1>
    %603 = arith.select %602, %576, %529 : vector<2x32xi1>, vector<2x32xf32>
    %604 = vector.shape_cast %597 : vector<2x1xi1> to vector<2x1xi1>
    %605 = vector.broadcast %604 : vector<2x1xi1> to vector<2x32xi1>
    %606 = arith.select %605, %593, %532 : vector<2x32xi1>, vector<2x32xf32>
    %607 = vector.shape_cast %597 : vector<2x1xi1> to vector<2x1xi1>
    %608 = vector.broadcast %607 : vector<2x1xi1> to vector<2x32xi1>
    %609 = arith.select %608, %591, %535 : vector<2x32xi1>, vector<2x32xf32>
    %cst_86 = arith.constant 0.000000e+00 : f32
    %610 = vector.shape_cast %595 : vector<2x1xi1> to vector<2x1xi1>
    %611 = vector.broadcast %610 : vector<2x1xi1> to vector<2x32xi1>
    %612 = vector.broadcast %cst_86 : f32 to vector<2x32xf32>
    %613 = arith.select %611, %578, %612 : vector<2x32xi1>, vector<2x32xf32>
    %614 = arith.addf %540, %613 : vector<2x32xf32>
    %cst_87 = arith.constant 0.000000e+00 : f32
    %615 = vector.shape_cast %597 : vector<2x1xi1> to vector<2x1xi1>
    %616 = vector.broadcast %615 : vector<2x1xi1> to vector<2x32xi1>
    %617 = vector.broadcast %cst_87 : f32 to vector<2x32xf32>
    %618 = arith.select %616, %593, %617 : vector<2x32xi1>, vector<2x32xf32>
    %619 = arith.addf %545, %618 : vector<2x32xf32>
    %cst_88 = arith.constant 0xFF800000 : f32
    %620 = vector.shape_cast %595 : vector<2x1xi1> to vector<2x1xi1>
    %621 = vector.broadcast %620 : vector<2x1xi1> to vector<2x32xi1>
    %622 = vector.broadcast %cst_88 : f32 to vector<2x32xf32>
    %623 = arith.select %621, %578, %622 : vector<2x32xi1>, vector<2x32xf32>
    %624 = arith.maximumf %550, %623 : vector<2x32xf32>
    %cst_89 = arith.constant 0xFF800000 : f32
    %625 = vector.shape_cast %597 : vector<2x1xi1> to vector<2x1xi1>
    %626 = vector.broadcast %625 : vector<2x1xi1> to vector<2x32xi1>
    %627 = vector.broadcast %cst_89 : f32 to vector<2x32xf32>
    %628 = arith.select %626, %593, %627 : vector<2x32xi1>, vector<2x32xf32>
    %629 = arith.maximumf %555, %628 : vector<2x32xf32>
    %630 = vector.extract_strided_slice %172 {offsets = [12, 0], sizes = [2, 128], strides = [1, 1]} : vector<24x128xf32> to vector<2x128xf32>
    %631 = arith.truncf %600 : vector<2x32xf32> to vector<2x32xbf16>
    %cst_90 = arith.constant dense<0.000000e+00> : vector<2x128xf32>
    %632 = tpu.matmul %631, %181, %cst_90 {dimension_numbers = #tpu.dot_dimension_numbers<[1], [0], [0], [1], [0, 0, 1, 1], [], []>} : vector<2x32xbf16>, vector<32x128xbf16>, vector<2x128xf32> -> vector<2x128xf32>
    %633 = arith.addf %630, %632 : vector<2x128xf32>
    %634 = vector.extract_strided_slice %179 {offsets = [10, 0], sizes = [2, 128], strides = [1, 1]} : vector<24x128xf32> to vector<2x128xf32>
    %635 = arith.truncf %606 : vector<2x32xf32> to vector<2x32xbf16>
    %cst_91 = arith.constant dense<0.000000e+00> : vector<2x128xf32>
    %636 = tpu.matmul %635, %183, %cst_91 {dimension_numbers = #tpu.dot_dimension_numbers<[1], [0], [0], [1], [0, 0, 1, 1], [], []>} : vector<2x32xbf16>, vector<32x128xbf16>, vector<2x128xf32> -> vector<2x128xf32>
    %637 = arith.addf %634, %636 : vector<2x128xf32>
    %638 = arith.negf %633 : vector<2x128xf32>
    %639 = math.exp %638 : vector<2x128xf32>
    %cst_92 = arith.constant 1.000000e+00 : f32
    %640 = vector.broadcast %cst_92 : f32 to vector<2x128xf32>
    %641 = arith.addf %640, %639 : vector<2x128xf32>
    %642 = arith.divf %640, %641 : vector<2x128xf32>
    %643 = vector.extract_strided_slice %642 {offsets = [0, 0], sizes = [2, 32], strides = [1, 1]} : vector<2x128xf32> to vector<2x32xf32>
    %644 = vector.extract_strided_slice %642 {offsets = [0, 32], sizes = [2, 32], strides = [1, 1]} : vector<2x128xf32> to vector<2x32xf32>
    %645 = vector.extract_strided_slice %642 {offsets = [0, 96], sizes = [2, 32], strides = [1, 1]} : vector<2x128xf32> to vector<2x32xf32>
    %646 = vector.extract_strided_slice %633 {offsets = [0, 64], sizes = [2, 32], strides = [1, 1]} : vector<2x128xf32> to vector<2x32xf32>
    %647 = math.tanh %646 : vector<2x32xf32>
    %648 = arith.mulf %644, %603 : vector<2x32xf32>
    %649 = arith.mulf %643, %647 : vector<2x32xf32>
    %650 = arith.addf %648, %649 : vector<2x32xf32>
    %651 = math.tanh %650 : vector<2x32xf32>
    %652 = arith.mulf %645, %651 : vector<2x32xf32>
    %653 = arith.negf %637 : vector<2x128xf32>
    %654 = math.exp %653 : vector<2x128xf32>
    %cst_93 = arith.constant 1.000000e+00 : f32
    %655 = vector.broadcast %cst_93 : f32 to vector<2x128xf32>
    %656 = arith.addf %655, %654 : vector<2x128xf32>
    %657 = arith.divf %655, %656 : vector<2x128xf32>
    %658 = vector.extract_strided_slice %657 {offsets = [0, 0], sizes = [2, 32], strides = [1, 1]} : vector<2x128xf32> to vector<2x32xf32>
    %659 = vector.extract_strided_slice %657 {offsets = [0, 32], sizes = [2, 32], strides = [1, 1]} : vector<2x128xf32> to vector<2x32xf32>
    %660 = vector.extract_strided_slice %657 {offsets = [0, 96], sizes = [2, 32], strides = [1, 1]} : vector<2x128xf32> to vector<2x32xf32>
    %661 = vector.extract_strided_slice %637 {offsets = [0, 64], sizes = [2, 32], strides = [1, 1]} : vector<2x128xf32> to vector<2x32xf32>
    %662 = math.tanh %661 : vector<2x32xf32>
    %663 = arith.mulf %659, %609 : vector<2x32xf32>
    %664 = arith.mulf %658, %662 : vector<2x32xf32>
    %665 = arith.addf %663, %664 : vector<2x32xf32>
    %666 = math.tanh %665 : vector<2x32xf32>
    %667 = arith.mulf %660, %666 : vector<2x32xf32>
    %c6_i32_94 = arith.constant 6 : i32
    %668 = vector.broadcast %c6_i32_94 : i32 to vector<2x1xi32>
    %669 = arith.cmpi sgt, %165, %668 : vector<2x1xi32>
    %c5_i32_95 = arith.constant 5 : i32
    %670 = vector.broadcast %c5_i32_95 : i32 to vector<2x1xi32>
    %671 = arith.cmpi sgt, %165, %670 : vector<2x1xi32>
    %672 = vector.shape_cast %669 : vector<2x1xi1> to vector<2x1xi1>
    %673 = vector.broadcast %672 : vector<2x1xi1> to vector<2x32xi1>
    %674 = arith.select %673, %652, %600 : vector<2x32xi1>, vector<2x32xf32>
    %675 = vector.shape_cast %669 : vector<2x1xi1> to vector<2x1xi1>
    %676 = vector.broadcast %675 : vector<2x1xi1> to vector<2x32xi1>
    %677 = arith.select %676, %650, %603 : vector<2x32xi1>, vector<2x32xf32>
    %678 = vector.shape_cast %671 : vector<2x1xi1> to vector<2x1xi1>
    %679 = vector.broadcast %678 : vector<2x1xi1> to vector<2x32xi1>
    %680 = arith.select %679, %667, %606 : vector<2x32xi1>, vector<2x32xf32>
    %681 = vector.shape_cast %671 : vector<2x1xi1> to vector<2x1xi1>
    %682 = vector.broadcast %681 : vector<2x1xi1> to vector<2x32xi1>
    %683 = arith.select %682, %665, %609 : vector<2x32xi1>, vector<2x32xf32>
    %cst_96 = arith.constant 0.000000e+00 : f32
    %684 = vector.shape_cast %669 : vector<2x1xi1> to vector<2x1xi1>
    %685 = vector.broadcast %684 : vector<2x1xi1> to vector<2x32xi1>
    %686 = vector.broadcast %cst_96 : f32 to vector<2x32xf32>
    %687 = arith.select %685, %652, %686 : vector<2x32xi1>, vector<2x32xf32>
    %688 = arith.addf %614, %687 : vector<2x32xf32>
    %cst_97 = arith.constant 0.000000e+00 : f32
    %689 = vector.shape_cast %671 : vector<2x1xi1> to vector<2x1xi1>
    %690 = vector.broadcast %689 : vector<2x1xi1> to vector<2x32xi1>
    %691 = vector.broadcast %cst_97 : f32 to vector<2x32xf32>
    %692 = arith.select %690, %667, %691 : vector<2x32xi1>, vector<2x32xf32>
    %693 = arith.addf %619, %692 : vector<2x32xf32>
    %cst_98 = arith.constant 0xFF800000 : f32
    %694 = vector.shape_cast %669 : vector<2x1xi1> to vector<2x1xi1>
    %695 = vector.broadcast %694 : vector<2x1xi1> to vector<2x32xi1>
    %696 = vector.broadcast %cst_98 : f32 to vector<2x32xf32>
    %697 = arith.select %695, %652, %696 : vector<2x32xi1>, vector<2x32xf32>
    %698 = arith.maximumf %624, %697 : vector<2x32xf32>
    %cst_99 = arith.constant 0xFF800000 : f32
    %699 = vector.shape_cast %671 : vector<2x1xi1> to vector<2x1xi1>
    %700 = vector.broadcast %699 : vector<2x1xi1> to vector<2x32xi1>
    %701 = vector.broadcast %cst_99 : f32 to vector<2x32xf32>
    %702 = arith.select %700, %667, %701 : vector<2x32xi1>, vector<2x32xf32>
    %703 = arith.maximumf %629, %702 : vector<2x32xf32>
    %704 = vector.extract_strided_slice %172 {offsets = [14, 0], sizes = [2, 128], strides = [1, 1]} : vector<24x128xf32> to vector<2x128xf32>
    %705 = arith.truncf %674 : vector<2x32xf32> to vector<2x32xbf16>
    %cst_100 = arith.constant dense<0.000000e+00> : vector<2x128xf32>
    %706 = tpu.matmul %705, %181, %cst_100 {dimension_numbers = #tpu.dot_dimension_numbers<[1], [0], [0], [1], [0, 0, 1, 1], [], []>} : vector<2x32xbf16>, vector<32x128xbf16>, vector<2x128xf32> -> vector<2x128xf32>
    %707 = arith.addf %704, %706 : vector<2x128xf32>
    %708 = vector.extract_strided_slice %179 {offsets = [8, 0], sizes = [2, 128], strides = [1, 1]} : vector<24x128xf32> to vector<2x128xf32>
    %709 = arith.truncf %680 : vector<2x32xf32> to vector<2x32xbf16>
    %cst_101 = arith.constant dense<0.000000e+00> : vector<2x128xf32>
    %710 = tpu.matmul %709, %183, %cst_101 {dimension_numbers = #tpu.dot_dimension_numbers<[1], [0], [0], [1], [0, 0, 1, 1], [], []>} : vector<2x32xbf16>, vector<32x128xbf16>, vector<2x128xf32> -> vector<2x128xf32>
    %711 = arith.addf %708, %710 : vector<2x128xf32>
    %712 = arith.negf %707 : vector<2x128xf32>
    %713 = math.exp %712 : vector<2x128xf32>
    %cst_102 = arith.constant 1.000000e+00 : f32
    %714 = vector.broadcast %cst_102 : f32 to vector<2x128xf32>
    %715 = arith.addf %714, %713 : vector<2x128xf32>
    %716 = arith.divf %714, %715 : vector<2x128xf32>
    %717 = vector.extract_strided_slice %716 {offsets = [0, 0], sizes = [2, 32], strides = [1, 1]} : vector<2x128xf32> to vector<2x32xf32>
    %718 = vector.extract_strided_slice %716 {offsets = [0, 32], sizes = [2, 32], strides = [1, 1]} : vector<2x128xf32> to vector<2x32xf32>
    %719 = vector.extract_strided_slice %716 {offsets = [0, 96], sizes = [2, 32], strides = [1, 1]} : vector<2x128xf32> to vector<2x32xf32>
    %720 = vector.extract_strided_slice %707 {offsets = [0, 64], sizes = [2, 32], strides = [1, 1]} : vector<2x128xf32> to vector<2x32xf32>
    %721 = math.tanh %720 : vector<2x32xf32>
    %722 = arith.mulf %718, %677 : vector<2x32xf32>
    %723 = arith.mulf %717, %721 : vector<2x32xf32>
    %724 = arith.addf %722, %723 : vector<2x32xf32>
    %725 = math.tanh %724 : vector<2x32xf32>
    %726 = arith.mulf %719, %725 : vector<2x32xf32>
    %727 = arith.negf %711 : vector<2x128xf32>
    %728 = math.exp %727 : vector<2x128xf32>
    %cst_103 = arith.constant 1.000000e+00 : f32
    %729 = vector.broadcast %cst_103 : f32 to vector<2x128xf32>
    %730 = arith.addf %729, %728 : vector<2x128xf32>
    %731 = arith.divf %729, %730 : vector<2x128xf32>
    %732 = vector.extract_strided_slice %731 {offsets = [0, 0], sizes = [2, 32], strides = [1, 1]} : vector<2x128xf32> to vector<2x32xf32>
    %733 = vector.extract_strided_slice %731 {offsets = [0, 32], sizes = [2, 32], strides = [1, 1]} : vector<2x128xf32> to vector<2x32xf32>
    %734 = vector.extract_strided_slice %731 {offsets = [0, 96], sizes = [2, 32], strides = [1, 1]} : vector<2x128xf32> to vector<2x32xf32>
    %735 = vector.extract_strided_slice %711 {offsets = [0, 64], sizes = [2, 32], strides = [1, 1]} : vector<2x128xf32> to vector<2x32xf32>
    %736 = math.tanh %735 : vector<2x32xf32>
    %737 = arith.mulf %733, %683 : vector<2x32xf32>
    %738 = arith.mulf %732, %736 : vector<2x32xf32>
    %739 = arith.addf %737, %738 : vector<2x32xf32>
    %740 = math.tanh %739 : vector<2x32xf32>
    %741 = arith.mulf %734, %740 : vector<2x32xf32>
    %c7_i32_104 = arith.constant 7 : i32
    %742 = vector.broadcast %c7_i32_104 : i32 to vector<2x1xi32>
    %743 = arith.cmpi sgt, %165, %742 : vector<2x1xi32>
    %c4_i32_105 = arith.constant 4 : i32
    %744 = vector.broadcast %c4_i32_105 : i32 to vector<2x1xi32>
    %745 = arith.cmpi sgt, %165, %744 : vector<2x1xi32>
    %746 = vector.shape_cast %743 : vector<2x1xi1> to vector<2x1xi1>
    %747 = vector.broadcast %746 : vector<2x1xi1> to vector<2x32xi1>
    %748 = arith.select %747, %726, %674 : vector<2x32xi1>, vector<2x32xf32>
    %749 = vector.shape_cast %743 : vector<2x1xi1> to vector<2x1xi1>
    %750 = vector.broadcast %749 : vector<2x1xi1> to vector<2x32xi1>
    %751 = arith.select %750, %724, %677 : vector<2x32xi1>, vector<2x32xf32>
    %752 = vector.shape_cast %745 : vector<2x1xi1> to vector<2x1xi1>
    %753 = vector.broadcast %752 : vector<2x1xi1> to vector<2x32xi1>
    %754 = arith.select %753, %741, %680 : vector<2x32xi1>, vector<2x32xf32>
    %755 = vector.shape_cast %745 : vector<2x1xi1> to vector<2x1xi1>
    %756 = vector.broadcast %755 : vector<2x1xi1> to vector<2x32xi1>
    %757 = arith.select %756, %739, %683 : vector<2x32xi1>, vector<2x32xf32>
    %cst_106 = arith.constant 0.000000e+00 : f32
    %758 = vector.shape_cast %743 : vector<2x1xi1> to vector<2x1xi1>
    %759 = vector.broadcast %758 : vector<2x1xi1> to vector<2x32xi1>
    %760 = vector.broadcast %cst_106 : f32 to vector<2x32xf32>
    %761 = arith.select %759, %726, %760 : vector<2x32xi1>, vector<2x32xf32>
    %762 = arith.addf %688, %761 : vector<2x32xf32>
    %cst_107 = arith.constant 0.000000e+00 : f32
    %763 = vector.shape_cast %745 : vector<2x1xi1> to vector<2x1xi1>
    %764 = vector.broadcast %763 : vector<2x1xi1> to vector<2x32xi1>
    %765 = vector.broadcast %cst_107 : f32 to vector<2x32xf32>
    %766 = arith.select %764, %741, %765 : vector<2x32xi1>, vector<2x32xf32>
    %767 = arith.addf %693, %766 : vector<2x32xf32>
    %cst_108 = arith.constant 0xFF800000 : f32
    %768 = vector.shape_cast %743 : vector<2x1xi1> to vector<2x1xi1>
    %769 = vector.broadcast %768 : vector<2x1xi1> to vector<2x32xi1>
    %770 = vector.broadcast %cst_108 : f32 to vector<2x32xf32>
    %771 = arith.select %769, %726, %770 : vector<2x32xi1>, vector<2x32xf32>
    %772 = arith.maximumf %698, %771 : vector<2x32xf32>
    %cst_109 = arith.constant 0xFF800000 : f32
    %773 = vector.shape_cast %745 : vector<2x1xi1> to vector<2x1xi1>
    %774 = vector.broadcast %773 : vector<2x1xi1> to vector<2x32xi1>
    %775 = vector.broadcast %cst_109 : f32 to vector<2x32xf32>
    %776 = arith.select %774, %741, %775 : vector<2x32xi1>, vector<2x32xf32>
    %777 = arith.maximumf %703, %776 : vector<2x32xf32>
    %778 = vector.extract_strided_slice %172 {offsets = [16, 0], sizes = [2, 128], strides = [1, 1]} : vector<24x128xf32> to vector<2x128xf32>
    %779 = arith.truncf %748 : vector<2x32xf32> to vector<2x32xbf16>
    %cst_110 = arith.constant dense<0.000000e+00> : vector<2x128xf32>
    %780 = tpu.matmul %779, %181, %cst_110 {dimension_numbers = #tpu.dot_dimension_numbers<[1], [0], [0], [1], [0, 0, 1, 1], [], []>} : vector<2x32xbf16>, vector<32x128xbf16>, vector<2x128xf32> -> vector<2x128xf32>
    %781 = arith.addf %778, %780 : vector<2x128xf32>
    %782 = vector.extract_strided_slice %179 {offsets = [6, 0], sizes = [2, 128], strides = [1, 1]} : vector<24x128xf32> to vector<2x128xf32>
    %783 = arith.truncf %754 : vector<2x32xf32> to vector<2x32xbf16>
    %cst_111 = arith.constant dense<0.000000e+00> : vector<2x128xf32>
    %784 = tpu.matmul %783, %183, %cst_111 {dimension_numbers = #tpu.dot_dimension_numbers<[1], [0], [0], [1], [0, 0, 1, 1], [], []>} : vector<2x32xbf16>, vector<32x128xbf16>, vector<2x128xf32> -> vector<2x128xf32>
    %785 = arith.addf %782, %784 : vector<2x128xf32>
    %786 = arith.negf %781 : vector<2x128xf32>
    %787 = math.exp %786 : vector<2x128xf32>
    %cst_112 = arith.constant 1.000000e+00 : f32
    %788 = vector.broadcast %cst_112 : f32 to vector<2x128xf32>
    %789 = arith.addf %788, %787 : vector<2x128xf32>
    %790 = arith.divf %788, %789 : vector<2x128xf32>
    %791 = vector.extract_strided_slice %790 {offsets = [0, 0], sizes = [2, 32], strides = [1, 1]} : vector<2x128xf32> to vector<2x32xf32>
    %792 = vector.extract_strided_slice %790 {offsets = [0, 32], sizes = [2, 32], strides = [1, 1]} : vector<2x128xf32> to vector<2x32xf32>
    %793 = vector.extract_strided_slice %790 {offsets = [0, 96], sizes = [2, 32], strides = [1, 1]} : vector<2x128xf32> to vector<2x32xf32>
    %794 = vector.extract_strided_slice %781 {offsets = [0, 64], sizes = [2, 32], strides = [1, 1]} : vector<2x128xf32> to vector<2x32xf32>
    %795 = math.tanh %794 : vector<2x32xf32>
    %796 = arith.mulf %792, %751 : vector<2x32xf32>
    %797 = arith.mulf %791, %795 : vector<2x32xf32>
    %798 = arith.addf %796, %797 : vector<2x32xf32>
    %799 = math.tanh %798 : vector<2x32xf32>
    %800 = arith.mulf %793, %799 : vector<2x32xf32>
    %801 = arith.negf %785 : vector<2x128xf32>
    %802 = math.exp %801 : vector<2x128xf32>
    %cst_113 = arith.constant 1.000000e+00 : f32
    %803 = vector.broadcast %cst_113 : f32 to vector<2x128xf32>
    %804 = arith.addf %803, %802 : vector<2x128xf32>
    %805 = arith.divf %803, %804 : vector<2x128xf32>
    %806 = vector.extract_strided_slice %805 {offsets = [0, 0], sizes = [2, 32], strides = [1, 1]} : vector<2x128xf32> to vector<2x32xf32>
    %807 = vector.extract_strided_slice %805 {offsets = [0, 32], sizes = [2, 32], strides = [1, 1]} : vector<2x128xf32> to vector<2x32xf32>
    %808 = vector.extract_strided_slice %805 {offsets = [0, 96], sizes = [2, 32], strides = [1, 1]} : vector<2x128xf32> to vector<2x32xf32>
    %809 = vector.extract_strided_slice %785 {offsets = [0, 64], sizes = [2, 32], strides = [1, 1]} : vector<2x128xf32> to vector<2x32xf32>
    %810 = math.tanh %809 : vector<2x32xf32>
    %811 = arith.mulf %807, %757 : vector<2x32xf32>
    %812 = arith.mulf %806, %810 : vector<2x32xf32>
    %813 = arith.addf %811, %812 : vector<2x32xf32>
    %814 = math.tanh %813 : vector<2x32xf32>
    %815 = arith.mulf %808, %814 : vector<2x32xf32>
    %c8_i32_114 = arith.constant 8 : i32
    %816 = vector.broadcast %c8_i32_114 : i32 to vector<2x1xi32>
    %817 = arith.cmpi sgt, %165, %816 : vector<2x1xi32>
    %c3_i32_115 = arith.constant 3 : i32
    %818 = vector.broadcast %c3_i32_115 : i32 to vector<2x1xi32>
    %819 = arith.cmpi sgt, %165, %818 : vector<2x1xi32>
    %820 = vector.shape_cast %817 : vector<2x1xi1> to vector<2x1xi1>
    %821 = vector.broadcast %820 : vector<2x1xi1> to vector<2x32xi1>
    %822 = arith.select %821, %800, %748 : vector<2x32xi1>, vector<2x32xf32>
    %823 = vector.shape_cast %817 : vector<2x1xi1> to vector<2x1xi1>
    %824 = vector.broadcast %823 : vector<2x1xi1> to vector<2x32xi1>
    %825 = arith.select %824, %798, %751 : vector<2x32xi1>, vector<2x32xf32>
    %826 = vector.shape_cast %819 : vector<2x1xi1> to vector<2x1xi1>
    %827 = vector.broadcast %826 : vector<2x1xi1> to vector<2x32xi1>
    %828 = arith.select %827, %815, %754 : vector<2x32xi1>, vector<2x32xf32>
    %829 = vector.shape_cast %819 : vector<2x1xi1> to vector<2x1xi1>
    %830 = vector.broadcast %829 : vector<2x1xi1> to vector<2x32xi1>
    %831 = arith.select %830, %813, %757 : vector<2x32xi1>, vector<2x32xf32>
    %cst_116 = arith.constant 0.000000e+00 : f32
    %832 = vector.shape_cast %817 : vector<2x1xi1> to vector<2x1xi1>
    %833 = vector.broadcast %832 : vector<2x1xi1> to vector<2x32xi1>
    %834 = vector.broadcast %cst_116 : f32 to vector<2x32xf32>
    %835 = arith.select %833, %800, %834 : vector<2x32xi1>, vector<2x32xf32>
    %836 = arith.addf %762, %835 : vector<2x32xf32>
    %cst_117 = arith.constant 0.000000e+00 : f32
    %837 = vector.shape_cast %819 : vector<2x1xi1> to vector<2x1xi1>
    %838 = vector.broadcast %837 : vector<2x1xi1> to vector<2x32xi1>
    %839 = vector.broadcast %cst_117 : f32 to vector<2x32xf32>
    %840 = arith.select %838, %815, %839 : vector<2x32xi1>, vector<2x32xf32>
    %841 = arith.addf %767, %840 : vector<2x32xf32>
    %cst_118 = arith.constant 0xFF800000 : f32
    %842 = vector.shape_cast %817 : vector<2x1xi1> to vector<2x1xi1>
    %843 = vector.broadcast %842 : vector<2x1xi1> to vector<2x32xi1>
    %844 = vector.broadcast %cst_118 : f32 to vector<2x32xf32>
    %845 = arith.select %843, %800, %844 : vector<2x32xi1>, vector<2x32xf32>
    %846 = arith.maximumf %772, %845 : vector<2x32xf32>
    %cst_119 = arith.constant 0xFF800000 : f32
    %847 = vector.shape_cast %819 : vector<2x1xi1> to vector<2x1xi1>
    %848 = vector.broadcast %847 : vector<2x1xi1> to vector<2x32xi1>
    %849 = vector.broadcast %cst_119 : f32 to vector<2x32xf32>
    %850 = arith.select %848, %815, %849 : vector<2x32xi1>, vector<2x32xf32>
    %851 = arith.maximumf %777, %850 : vector<2x32xf32>
    %852 = vector.extract_strided_slice %172 {offsets = [18, 0], sizes = [2, 128], strides = [1, 1]} : vector<24x128xf32> to vector<2x128xf32>
    %853 = arith.truncf %822 : vector<2x32xf32> to vector<2x32xbf16>
    %cst_120 = arith.constant dense<0.000000e+00> : vector<2x128xf32>
    %854 = tpu.matmul %853, %181, %cst_120 {dimension_numbers = #tpu.dot_dimension_numbers<[1], [0], [0], [1], [0, 0, 1, 1], [], []>} : vector<2x32xbf16>, vector<32x128xbf16>, vector<2x128xf32> -> vector<2x128xf32>
    %855 = arith.addf %852, %854 : vector<2x128xf32>
    %856 = vector.extract_strided_slice %179 {offsets = [4, 0], sizes = [2, 128], strides = [1, 1]} : vector<24x128xf32> to vector<2x128xf32>
    %857 = arith.truncf %828 : vector<2x32xf32> to vector<2x32xbf16>
    %cst_121 = arith.constant dense<0.000000e+00> : vector<2x128xf32>
    %858 = tpu.matmul %857, %183, %cst_121 {dimension_numbers = #tpu.dot_dimension_numbers<[1], [0], [0], [1], [0, 0, 1, 1], [], []>} : vector<2x32xbf16>, vector<32x128xbf16>, vector<2x128xf32> -> vector<2x128xf32>
    %859 = arith.addf %856, %858 : vector<2x128xf32>
    %860 = arith.negf %855 : vector<2x128xf32>
    %861 = math.exp %860 : vector<2x128xf32>
    %cst_122 = arith.constant 1.000000e+00 : f32
    %862 = vector.broadcast %cst_122 : f32 to vector<2x128xf32>
    %863 = arith.addf %862, %861 : vector<2x128xf32>
    %864 = arith.divf %862, %863 : vector<2x128xf32>
    %865 = vector.extract_strided_slice %864 {offsets = [0, 0], sizes = [2, 32], strides = [1, 1]} : vector<2x128xf32> to vector<2x32xf32>
    %866 = vector.extract_strided_slice %864 {offsets = [0, 32], sizes = [2, 32], strides = [1, 1]} : vector<2x128xf32> to vector<2x32xf32>
    %867 = vector.extract_strided_slice %864 {offsets = [0, 96], sizes = [2, 32], strides = [1, 1]} : vector<2x128xf32> to vector<2x32xf32>
    %868 = vector.extract_strided_slice %855 {offsets = [0, 64], sizes = [2, 32], strides = [1, 1]} : vector<2x128xf32> to vector<2x32xf32>
    %869 = math.tanh %868 : vector<2x32xf32>
    %870 = arith.mulf %866, %825 : vector<2x32xf32>
    %871 = arith.mulf %865, %869 : vector<2x32xf32>
    %872 = arith.addf %870, %871 : vector<2x32xf32>
    %873 = math.tanh %872 : vector<2x32xf32>
    %874 = arith.mulf %867, %873 : vector<2x32xf32>
    %875 = arith.negf %859 : vector<2x128xf32>
    %876 = math.exp %875 : vector<2x128xf32>
    %cst_123 = arith.constant 1.000000e+00 : f32
    %877 = vector.broadcast %cst_123 : f32 to vector<2x128xf32>
    %878 = arith.addf %877, %876 : vector<2x128xf32>
    %879 = arith.divf %877, %878 : vector<2x128xf32>
    %880 = vector.extract_strided_slice %879 {offsets = [0, 0], sizes = [2, 32], strides = [1, 1]} : vector<2x128xf32> to vector<2x32xf32>
    %881 = vector.extract_strided_slice %879 {offsets = [0, 32], sizes = [2, 32], strides = [1, 1]} : vector<2x128xf32> to vector<2x32xf32>
    %882 = vector.extract_strided_slice %879 {offsets = [0, 96], sizes = [2, 32], strides = [1, 1]} : vector<2x128xf32> to vector<2x32xf32>
    %883 = vector.extract_strided_slice %859 {offsets = [0, 64], sizes = [2, 32], strides = [1, 1]} : vector<2x128xf32> to vector<2x32xf32>
    %884 = math.tanh %883 : vector<2x32xf32>
    %885 = arith.mulf %881, %831 : vector<2x32xf32>
    %886 = arith.mulf %880, %884 : vector<2x32xf32>
    %887 = arith.addf %885, %886 : vector<2x32xf32>
    %888 = math.tanh %887 : vector<2x32xf32>
    %889 = arith.mulf %882, %888 : vector<2x32xf32>
    %c9_i32_124 = arith.constant 9 : i32
    %890 = vector.broadcast %c9_i32_124 : i32 to vector<2x1xi32>
    %891 = arith.cmpi sgt, %165, %890 : vector<2x1xi32>
    %c2_i32_125 = arith.constant 2 : i32
    %892 = vector.broadcast %c2_i32_125 : i32 to vector<2x1xi32>
    %893 = arith.cmpi sgt, %165, %892 : vector<2x1xi32>
    %894 = vector.shape_cast %891 : vector<2x1xi1> to vector<2x1xi1>
    %895 = vector.broadcast %894 : vector<2x1xi1> to vector<2x32xi1>
    %896 = arith.select %895, %874, %822 : vector<2x32xi1>, vector<2x32xf32>
    %897 = vector.shape_cast %891 : vector<2x1xi1> to vector<2x1xi1>
    %898 = vector.broadcast %897 : vector<2x1xi1> to vector<2x32xi1>
    %899 = arith.select %898, %872, %825 : vector<2x32xi1>, vector<2x32xf32>
    %900 = vector.shape_cast %893 : vector<2x1xi1> to vector<2x1xi1>
    %901 = vector.broadcast %900 : vector<2x1xi1> to vector<2x32xi1>
    %902 = arith.select %901, %889, %828 : vector<2x32xi1>, vector<2x32xf32>
    %903 = vector.shape_cast %893 : vector<2x1xi1> to vector<2x1xi1>
    %904 = vector.broadcast %903 : vector<2x1xi1> to vector<2x32xi1>
    %905 = arith.select %904, %887, %831 : vector<2x32xi1>, vector<2x32xf32>
    %cst_126 = arith.constant 0.000000e+00 : f32
    %906 = vector.shape_cast %891 : vector<2x1xi1> to vector<2x1xi1>
    %907 = vector.broadcast %906 : vector<2x1xi1> to vector<2x32xi1>
    %908 = vector.broadcast %cst_126 : f32 to vector<2x32xf32>
    %909 = arith.select %907, %874, %908 : vector<2x32xi1>, vector<2x32xf32>
    %910 = arith.addf %836, %909 : vector<2x32xf32>
    %cst_127 = arith.constant 0.000000e+00 : f32
    %911 = vector.shape_cast %893 : vector<2x1xi1> to vector<2x1xi1>
    %912 = vector.broadcast %911 : vector<2x1xi1> to vector<2x32xi1>
    %913 = vector.broadcast %cst_127 : f32 to vector<2x32xf32>
    %914 = arith.select %912, %889, %913 : vector<2x32xi1>, vector<2x32xf32>
    %915 = arith.addf %841, %914 : vector<2x32xf32>
    %cst_128 = arith.constant 0xFF800000 : f32
    %916 = vector.shape_cast %891 : vector<2x1xi1> to vector<2x1xi1>
    %917 = vector.broadcast %916 : vector<2x1xi1> to vector<2x32xi1>
    %918 = vector.broadcast %cst_128 : f32 to vector<2x32xf32>
    %919 = arith.select %917, %874, %918 : vector<2x32xi1>, vector<2x32xf32>
    %920 = arith.maximumf %846, %919 : vector<2x32xf32>
    %cst_129 = arith.constant 0xFF800000 : f32
    %921 = vector.shape_cast %893 : vector<2x1xi1> to vector<2x1xi1>
    %922 = vector.broadcast %921 : vector<2x1xi1> to vector<2x32xi1>
    %923 = vector.broadcast %cst_129 : f32 to vector<2x32xf32>
    %924 = arith.select %922, %889, %923 : vector<2x32xi1>, vector<2x32xf32>
    %925 = arith.maximumf %851, %924 : vector<2x32xf32>
    %926 = vector.extract_strided_slice %172 {offsets = [20, 0], sizes = [2, 128], strides = [1, 1]} : vector<24x128xf32> to vector<2x128xf32>
    %927 = arith.truncf %896 : vector<2x32xf32> to vector<2x32xbf16>
    %cst_130 = arith.constant dense<0.000000e+00> : vector<2x128xf32>
    %928 = tpu.matmul %927, %181, %cst_130 {dimension_numbers = #tpu.dot_dimension_numbers<[1], [0], [0], [1], [0, 0, 1, 1], [], []>} : vector<2x32xbf16>, vector<32x128xbf16>, vector<2x128xf32> -> vector<2x128xf32>
    %929 = arith.addf %926, %928 : vector<2x128xf32>
    %930 = vector.extract_strided_slice %179 {offsets = [2, 0], sizes = [2, 128], strides = [1, 1]} : vector<24x128xf32> to vector<2x128xf32>
    %931 = arith.truncf %902 : vector<2x32xf32> to vector<2x32xbf16>
    %cst_131 = arith.constant dense<0.000000e+00> : vector<2x128xf32>
    %932 = tpu.matmul %931, %183, %cst_131 {dimension_numbers = #tpu.dot_dimension_numbers<[1], [0], [0], [1], [0, 0, 1, 1], [], []>} : vector<2x32xbf16>, vector<32x128xbf16>, vector<2x128xf32> -> vector<2x128xf32>
    %933 = arith.addf %930, %932 : vector<2x128xf32>
    %934 = arith.negf %929 : vector<2x128xf32>
    %935 = math.exp %934 : vector<2x128xf32>
    %cst_132 = arith.constant 1.000000e+00 : f32
    %936 = vector.broadcast %cst_132 : f32 to vector<2x128xf32>
    %937 = arith.addf %936, %935 : vector<2x128xf32>
    %938 = arith.divf %936, %937 : vector<2x128xf32>
    %939 = vector.extract_strided_slice %938 {offsets = [0, 0], sizes = [2, 32], strides = [1, 1]} : vector<2x128xf32> to vector<2x32xf32>
    %940 = vector.extract_strided_slice %938 {offsets = [0, 32], sizes = [2, 32], strides = [1, 1]} : vector<2x128xf32> to vector<2x32xf32>
    %941 = vector.extract_strided_slice %938 {offsets = [0, 96], sizes = [2, 32], strides = [1, 1]} : vector<2x128xf32> to vector<2x32xf32>
    %942 = vector.extract_strided_slice %929 {offsets = [0, 64], sizes = [2, 32], strides = [1, 1]} : vector<2x128xf32> to vector<2x32xf32>
    %943 = math.tanh %942 : vector<2x32xf32>
    %944 = arith.mulf %940, %899 : vector<2x32xf32>
    %945 = arith.mulf %939, %943 : vector<2x32xf32>
    %946 = arith.addf %944, %945 : vector<2x32xf32>
    %947 = math.tanh %946 : vector<2x32xf32>
    %948 = arith.mulf %941, %947 : vector<2x32xf32>
    %949 = arith.negf %933 : vector<2x128xf32>
    %950 = math.exp %949 : vector<2x128xf32>
    %cst_133 = arith.constant 1.000000e+00 : f32
    %951 = vector.broadcast %cst_133 : f32 to vector<2x128xf32>
    %952 = arith.addf %951, %950 : vector<2x128xf32>
    %953 = arith.divf %951, %952 : vector<2x128xf32>
    %954 = vector.extract_strided_slice %953 {offsets = [0, 0], sizes = [2, 32], strides = [1, 1]} : vector<2x128xf32> to vector<2x32xf32>
    %955 = vector.extract_strided_slice %953 {offsets = [0, 32], sizes = [2, 32], strides = [1, 1]} : vector<2x128xf32> to vector<2x32xf32>
    %956 = vector.extract_strided_slice %953 {offsets = [0, 96], sizes = [2, 32], strides = [1, 1]} : vector<2x128xf32> to vector<2x32xf32>
    %957 = vector.extract_strided_slice %933 {offsets = [0, 64], sizes = [2, 32], strides = [1, 1]} : vector<2x128xf32> to vector<2x32xf32>
    %958 = math.tanh %957 : vector<2x32xf32>
    %959 = arith.mulf %955, %905 : vector<2x32xf32>
    %960 = arith.mulf %954, %958 : vector<2x32xf32>
    %961 = arith.addf %959, %960 : vector<2x32xf32>
    %962 = math.tanh %961 : vector<2x32xf32>
    %963 = arith.mulf %956, %962 : vector<2x32xf32>
    %c10_i32_134 = arith.constant 10 : i32
    %964 = vector.broadcast %c10_i32_134 : i32 to vector<2x1xi32>
    %965 = arith.cmpi sgt, %165, %964 : vector<2x1xi32>
    %c1_i32_135 = arith.constant 1 : i32
    %966 = vector.broadcast %c1_i32_135 : i32 to vector<2x1xi32>
    %967 = arith.cmpi sgt, %165, %966 : vector<2x1xi32>
    %968 = vector.shape_cast %965 : vector<2x1xi1> to vector<2x1xi1>
    %969 = vector.broadcast %968 : vector<2x1xi1> to vector<2x32xi1>
    %970 = arith.select %969, %948, %896 : vector<2x32xi1>, vector<2x32xf32>
    %971 = vector.shape_cast %965 : vector<2x1xi1> to vector<2x1xi1>
    %972 = vector.broadcast %971 : vector<2x1xi1> to vector<2x32xi1>
    %973 = arith.select %972, %946, %899 : vector<2x32xi1>, vector<2x32xf32>
    %974 = vector.shape_cast %967 : vector<2x1xi1> to vector<2x1xi1>
    %975 = vector.broadcast %974 : vector<2x1xi1> to vector<2x32xi1>
    %976 = arith.select %975, %963, %902 : vector<2x32xi1>, vector<2x32xf32>
    %977 = vector.shape_cast %967 : vector<2x1xi1> to vector<2x1xi1>
    %978 = vector.broadcast %977 : vector<2x1xi1> to vector<2x32xi1>
    %979 = arith.select %978, %961, %905 : vector<2x32xi1>, vector<2x32xf32>
    %cst_136 = arith.constant 0.000000e+00 : f32
    %980 = vector.shape_cast %965 : vector<2x1xi1> to vector<2x1xi1>
    %981 = vector.broadcast %980 : vector<2x1xi1> to vector<2x32xi1>
    %982 = vector.broadcast %cst_136 : f32 to vector<2x32xf32>
    %983 = arith.select %981, %948, %982 : vector<2x32xi1>, vector<2x32xf32>
    %984 = arith.addf %910, %983 : vector<2x32xf32>
    %cst_137 = arith.constant 0.000000e+00 : f32
    %985 = vector.shape_cast %967 : vector<2x1xi1> to vector<2x1xi1>
    %986 = vector.broadcast %985 : vector<2x1xi1> to vector<2x32xi1>
    %987 = vector.broadcast %cst_137 : f32 to vector<2x32xf32>
    %988 = arith.select %986, %963, %987 : vector<2x32xi1>, vector<2x32xf32>
    %989 = arith.addf %915, %988 : vector<2x32xf32>
    %cst_138 = arith.constant 0xFF800000 : f32
    %990 = vector.shape_cast %965 : vector<2x1xi1> to vector<2x1xi1>
    %991 = vector.broadcast %990 : vector<2x1xi1> to vector<2x32xi1>
    %992 = vector.broadcast %cst_138 : f32 to vector<2x32xf32>
    %993 = arith.select %991, %948, %992 : vector<2x32xi1>, vector<2x32xf32>
    %994 = arith.maximumf %920, %993 : vector<2x32xf32>
    %cst_139 = arith.constant 0xFF800000 : f32
    %995 = vector.shape_cast %967 : vector<2x1xi1> to vector<2x1xi1>
    %996 = vector.broadcast %995 : vector<2x1xi1> to vector<2x32xi1>
    %997 = vector.broadcast %cst_139 : f32 to vector<2x32xf32>
    %998 = arith.select %996, %963, %997 : vector<2x32xi1>, vector<2x32xf32>
    %999 = arith.maximumf %925, %998 : vector<2x32xf32>
    %1000 = vector.extract_strided_slice %172 {offsets = [22, 0], sizes = [2, 128], strides = [1, 1]} : vector<24x128xf32> to vector<2x128xf32>
    %1001 = arith.truncf %970 : vector<2x32xf32> to vector<2x32xbf16>
    %cst_140 = arith.constant dense<0.000000e+00> : vector<2x128xf32>
    %1002 = tpu.matmul %1001, %181, %cst_140 {dimension_numbers = #tpu.dot_dimension_numbers<[1], [0], [0], [1], [0, 0, 1, 1], [], []>} : vector<2x32xbf16>, vector<32x128xbf16>, vector<2x128xf32> -> vector<2x128xf32>
    %1003 = arith.addf %1000, %1002 : vector<2x128xf32>
    %1004 = vector.extract_strided_slice %179 {offsets = [0, 0], sizes = [2, 128], strides = [1, 1]} : vector<24x128xf32> to vector<2x128xf32>
    %1005 = arith.truncf %976 : vector<2x32xf32> to vector<2x32xbf16>
    %cst_141 = arith.constant dense<0.000000e+00> : vector<2x128xf32>
    %1006 = tpu.matmul %1005, %183, %cst_141 {dimension_numbers = #tpu.dot_dimension_numbers<[1], [0], [0], [1], [0, 0, 1, 1], [], []>} : vector<2x32xbf16>, vector<32x128xbf16>, vector<2x128xf32> -> vector<2x128xf32>
    %1007 = arith.addf %1004, %1006 : vector<2x128xf32>
    %1008 = arith.negf %1003 : vector<2x128xf32>
    %1009 = math.exp %1008 : vector<2x128xf32>
    %cst_142 = arith.constant 1.000000e+00 : f32
    %1010 = vector.broadcast %cst_142 : f32 to vector<2x128xf32>
    %1011 = arith.addf %1010, %1009 : vector<2x128xf32>
    %1012 = arith.divf %1010, %1011 : vector<2x128xf32>
    %1013 = vector.extract_strided_slice %1012 {offsets = [0, 0], sizes = [2, 32], strides = [1, 1]} : vector<2x128xf32> to vector<2x32xf32>
    %1014 = vector.extract_strided_slice %1012 {offsets = [0, 32], sizes = [2, 32], strides = [1, 1]} : vector<2x128xf32> to vector<2x32xf32>
    %1015 = vector.extract_strided_slice %1012 {offsets = [0, 96], sizes = [2, 32], strides = [1, 1]} : vector<2x128xf32> to vector<2x32xf32>
    %1016 = vector.extract_strided_slice %1003 {offsets = [0, 64], sizes = [2, 32], strides = [1, 1]} : vector<2x128xf32> to vector<2x32xf32>
    %1017 = math.tanh %1016 : vector<2x32xf32>
    %1018 = arith.mulf %1014, %973 : vector<2x32xf32>
    %1019 = arith.mulf %1013, %1017 : vector<2x32xf32>
    %1020 = arith.addf %1018, %1019 : vector<2x32xf32>
    %1021 = math.tanh %1020 : vector<2x32xf32>
    %1022 = arith.mulf %1015, %1021 : vector<2x32xf32>
    %1023 = arith.negf %1007 : vector<2x128xf32>
    %1024 = math.exp %1023 : vector<2x128xf32>
    %cst_143 = arith.constant 1.000000e+00 : f32
    %1025 = vector.broadcast %cst_143 : f32 to vector<2x128xf32>
    %1026 = arith.addf %1025, %1024 : vector<2x128xf32>
    %1027 = arith.divf %1025, %1026 : vector<2x128xf32>
    %1028 = vector.extract_strided_slice %1027 {offsets = [0, 0], sizes = [2, 32], strides = [1, 1]} : vector<2x128xf32> to vector<2x32xf32>
    %1029 = vector.extract_strided_slice %1027 {offsets = [0, 32], sizes = [2, 32], strides = [1, 1]} : vector<2x128xf32> to vector<2x32xf32>
    %1030 = vector.extract_strided_slice %1027 {offsets = [0, 96], sizes = [2, 32], strides = [1, 1]} : vector<2x128xf32> to vector<2x32xf32>
    %1031 = vector.extract_strided_slice %1007 {offsets = [0, 64], sizes = [2, 32], strides = [1, 1]} : vector<2x128xf32> to vector<2x32xf32>
    %1032 = math.tanh %1031 : vector<2x32xf32>
    %1033 = arith.mulf %1029, %979 : vector<2x32xf32>
    %1034 = arith.mulf %1028, %1032 : vector<2x32xf32>
    %1035 = arith.addf %1033, %1034 : vector<2x32xf32>
    %1036 = math.tanh %1035 : vector<2x32xf32>
    %1037 = arith.mulf %1030, %1036 : vector<2x32xf32>
    %c11_i32_144 = arith.constant 11 : i32
    %1038 = vector.broadcast %c11_i32_144 : i32 to vector<2x1xi32>
    %1039 = arith.cmpi sgt, %165, %1038 : vector<2x1xi32>
    %c0_i32_145 = arith.constant 0 : i32
    %1040 = vector.broadcast %c0_i32_145 : i32 to vector<2x1xi32>
    %1041 = arith.cmpi sgt, %165, %1040 : vector<2x1xi32>
    %1042 = vector.shape_cast %1039 : vector<2x1xi1> to vector<2x1xi1>
    %1043 = vector.broadcast %1042 : vector<2x1xi1> to vector<2x32xi1>
    %1044 = arith.select %1043, %1022, %970 : vector<2x32xi1>, vector<2x32xf32>
    %1045 = vector.shape_cast %1041 : vector<2x1xi1> to vector<2x1xi1>
    %1046 = vector.broadcast %1045 : vector<2x1xi1> to vector<2x32xi1>
    %1047 = arith.select %1046, %1037, %976 : vector<2x32xi1>, vector<2x32xf32>
    %cst_146 = arith.constant 0.000000e+00 : f32
    %1048 = vector.shape_cast %1039 : vector<2x1xi1> to vector<2x1xi1>
    %1049 = vector.broadcast %1048 : vector<2x1xi1> to vector<2x32xi1>
    %1050 = vector.broadcast %cst_146 : f32 to vector<2x32xf32>
    %1051 = arith.select %1049, %1022, %1050 : vector<2x32xi1>, vector<2x32xf32>
    %1052 = arith.addf %984, %1051 : vector<2x32xf32>
    %cst_147 = arith.constant 0.000000e+00 : f32
    %1053 = vector.shape_cast %1041 : vector<2x1xi1> to vector<2x1xi1>
    %1054 = vector.broadcast %1053 : vector<2x1xi1> to vector<2x32xi1>
    %1055 = vector.broadcast %cst_147 : f32 to vector<2x32xf32>
    %1056 = arith.select %1054, %1037, %1055 : vector<2x32xi1>, vector<2x32xf32>
    %1057 = arith.addf %989, %1056 : vector<2x32xf32>
    %cst_148 = arith.constant 0xFF800000 : f32
    %1058 = vector.shape_cast %1039 : vector<2x1xi1> to vector<2x1xi1>
    %1059 = vector.broadcast %1058 : vector<2x1xi1> to vector<2x32xi1>
    %1060 = vector.broadcast %cst_148 : f32 to vector<2x32xf32>
    %1061 = arith.select %1059, %1022, %1060 : vector<2x32xi1>, vector<2x32xf32>
    %1062 = arith.maximumf %994, %1061 : vector<2x32xf32>
    %cst_149 = arith.constant 0xFF800000 : f32
    %1063 = vector.shape_cast %1041 : vector<2x1xi1> to vector<2x1xi1>
    %1064 = vector.broadcast %1063 : vector<2x1xi1> to vector<2x32xi1>
    %1065 = vector.broadcast %cst_149 : f32 to vector<2x32xf32>
    %1066 = arith.select %1064, %1037, %1065 : vector<2x32xi1>, vector<2x32xf32>
    %1067 = arith.maximumf %999, %1066 : vector<2x32xf32>
    %1068 = arith.sitofp %165 : vector<2x1xi32> to vector<2x1xf32>
    %cst_150 = arith.constant 1.000000e+00 : f32
    %1069 = vector.broadcast %cst_150 : f32 to vector<2x1xf32>
    %1070 = arith.divf %1069, %1068 : vector<2x1xf32>
    %1071 = vector.broadcast %1070 : vector<2x1xf32> to vector<2x32xf32>
    %1072 = arith.mulf %1052, %1071 : vector<2x32xf32>
    %1073 = vector.broadcast %1070 : vector<2x1xf32> to vector<2x32xf32>
    %1074 = arith.mulf %1057, %1073 : vector<2x32xf32>
    %1075 = tpu.concatenate %1047, %1044, %1072, %1074, %1062, %1067 in 1 : vector<2x32xf32>, vector<2x32xf32>, vector<2x32xf32>, vector<2x32xf32>, vector<2x32xf32>, vector<2x32xf32> -> vector<2x192xf32>
    %c0_151 = arith.constant 0 : index
    %c0_152 = arith.constant 0 : index
    %1076 = vector.load %arg2[%c0_151, %c0_152] : memref<12x16xbf16, #tpu.memory_space<vmem>>, vector<12x16xbf16>
    %c0_153 = arith.constant 0 : index
    %c0_154 = arith.constant 0 : index
    %c0_155 = arith.constant 0 : index
    %1077 = vector.load %arg11[%c0_153, %c0_154, %c0_155] : memref<2x16x96xbf16, #tpu.memory_space<vmem>>, vector<2x16x96xbf16>
    %c0_156 = arith.constant 0 : index
    %c0_157 = arith.constant 0 : index
    %c0_158 = arith.constant 0 : index
    %1078 = vector.load %arg12[%c0_156, %c0_157, %c0_158] : memref<2x24x96xbf16, #tpu.memory_space<vmem>>, vector<2x24x96xbf16>
    %c0_159 = arith.constant 0 : index
    %c0_160 = arith.constant 0 : index
    %c0_161 = arith.constant 0 : index
    %1079 = vector.load %arg13[%c0_159, %c0_160, %c0_161] : memref<2x1x96xf32, #tpu.memory_space<vmem>>, vector<2x1x96xf32>
    %c0_162 = arith.constant 0 : index
    %c0_163 = arith.constant 0 : index
    %1080 = vector.load %arg4[%c0_162, %c0_163] : memref<2x1xi32, #tpu.memory_space<vmem>>, vector<2x1xi32>
    %1081 = vector.extract_strided_slice %1077 {offsets = [0, 0, 0], sizes = [1, 16, 96], strides = [1, 1, 1]} : vector<2x16x96xbf16> to vector<1x16x96xbf16>
    %1082 = vector.shape_cast %1081 : vector<1x16x96xbf16> to vector<16x96xbf16>
    %cst_164 = arith.constant dense<0.000000e+00> : vector<12x96xf32>
    %1083 = tpu.matmul %1076, %1082, %cst_164 {dimension_numbers = #tpu.dot_dimension_numbers<[1], [0], [0], [1], [0, 0, 1, 1], [], []>} : vector<12x16xbf16>, vector<16x96xbf16>, vector<12x96xf32> -> vector<12x96xf32>
    %1084 = vector.extract_strided_slice %1079 {offsets = [0, 0, 0], sizes = [1, 1, 96], strides = [1, 1, 1]} : vector<2x1x96xf32> to vector<1x1x96xf32>
    %1085 = vector.shape_cast %1084 : vector<1x1x96xf32> to vector<1x96xf32>
    %1086 = vector.broadcast %1085 : vector<1x96xf32> to vector<12x96xf32>
    %1087 = arith.addf %1083, %1086 : vector<12x96xf32>
    %1088 = vector.extract_strided_slice %1077 {offsets = [1, 0, 0], sizes = [1, 16, 96], strides = [1, 1, 1]} : vector<2x16x96xbf16> to vector<1x16x96xbf16>
    %1089 = vector.shape_cast %1088 : vector<1x16x96xbf16> to vector<16x96xbf16>
    %cst_165 = arith.constant dense<0.000000e+00> : vector<12x96xf32>
    %1090 = tpu.matmul %1076, %1089, %cst_165 {dimension_numbers = #tpu.dot_dimension_numbers<[1], [0], [0], [1], [0, 0, 1, 1], [], []>} : vector<12x16xbf16>, vector<16x96xbf16>, vector<12x96xf32> -> vector<12x96xf32>
    %1091 = vector.extract_strided_slice %1079 {offsets = [1, 0, 0], sizes = [1, 1, 96], strides = [1, 1, 1]} : vector<2x1x96xf32> to vector<1x1x96xf32>
    %1092 = vector.shape_cast %1091 : vector<1x1x96xf32> to vector<1x96xf32>
    %1093 = vector.broadcast %1092 : vector<1x96xf32> to vector<12x96xf32>
    %1094 = arith.addf %1090, %1093 : vector<12x96xf32>
    %1095 = vector.extract_strided_slice %1078 {offsets = [0, 0, 0], sizes = [1, 24, 96], strides = [1, 1, 1]} : vector<2x24x96xbf16> to vector<1x24x96xbf16>
    %1096 = vector.shape_cast %1095 : vector<1x24x96xbf16> to vector<24x96xbf16>
    %1097 = vector.extract_strided_slice %1078 {offsets = [1, 0, 0], sizes = [1, 24, 96], strides = [1, 1, 1]} : vector<2x24x96xbf16> to vector<1x24x96xbf16>
    %1098 = vector.shape_cast %1097 : vector<1x24x96xbf16> to vector<24x96xbf16>
    %cst_166 = arith.constant 0.000000e+00 : f32
    %1099 = vector.broadcast %cst_166 : f32 to vector<2x24xf32>
    %cst_167 = arith.constant 0xFF800000 : f32
    %1100 = vector.broadcast %cst_167 : f32 to vector<2x24xf32>
    %1101 = vector.extract_strided_slice %1087 {offsets = [0, 0], sizes = [2, 96], strides = [1, 1]} : vector<12x96xf32> to vector<2x96xf32>
    %1102 = arith.truncf %1099 : vector<2x24xf32> to vector<2x24xbf16>
    %cst_168 = arith.constant dense<0.000000e+00> : vector<2x96xf32>
    %1103 = tpu.matmul %1102, %1096, %cst_168 {dimension_numbers = #tpu.dot_dimension_numbers<[1], [0], [0], [1], [0, 0, 1, 1], [], []>} : vector<2x24xbf16>, vector<24x96xbf16>, vector<2x96xf32> -> vector<2x96xf32>
    %1104 = arith.addf %1101, %1103 : vector<2x96xf32>
    %1105 = vector.extract_strided_slice %1094 {offsets = [10, 0], sizes = [2, 96], strides = [1, 1]} : vector<12x96xf32> to vector<2x96xf32>
    %1106 = arith.truncf %1099 : vector<2x24xf32> to vector<2x24xbf16>
    %cst_169 = arith.constant dense<0.000000e+00> : vector<2x96xf32>
    %1107 = tpu.matmul %1106, %1098, %cst_169 {dimension_numbers = #tpu.dot_dimension_numbers<[1], [0], [0], [1], [0, 0, 1, 1], [], []>} : vector<2x24xbf16>, vector<24x96xbf16>, vector<2x96xf32> -> vector<2x96xf32>
    %1108 = arith.addf %1105, %1107 : vector<2x96xf32>
    %1109 = arith.negf %1104 : vector<2x96xf32>
    %1110 = math.exp %1109 : vector<2x96xf32>
    %cst_170 = arith.constant 1.000000e+00 : f32
    %1111 = vector.broadcast %cst_170 : f32 to vector<2x96xf32>
    %1112 = arith.addf %1111, %1110 : vector<2x96xf32>
    %1113 = arith.divf %1111, %1112 : vector<2x96xf32>
    %1114 = vector.extract_strided_slice %1113 {offsets = [0, 0], sizes = [2, 24], strides = [1, 1]} : vector<2x96xf32> to vector<2x24xf32>
    %1115 = vector.extract_strided_slice %1113 {offsets = [0, 24], sizes = [2, 24], strides = [1, 1]} : vector<2x96xf32> to vector<2x24xf32>
    %1116 = vector.extract_strided_slice %1113 {offsets = [0, 72], sizes = [2, 24], strides = [1, 1]} : vector<2x96xf32> to vector<2x24xf32>
    %1117 = vector.extract_strided_slice %1104 {offsets = [0, 48], sizes = [2, 24], strides = [1, 1]} : vector<2x96xf32> to vector<2x24xf32>
    %1118 = math.tanh %1117 : vector<2x24xf32>
    %1119 = arith.mulf %1115, %1099 : vector<2x24xf32>
    %1120 = arith.mulf %1114, %1118 : vector<2x24xf32>
    %1121 = arith.addf %1119, %1120 : vector<2x24xf32>
    %1122 = math.tanh %1121 : vector<2x24xf32>
    %1123 = arith.mulf %1116, %1122 : vector<2x24xf32>
    %1124 = arith.negf %1108 : vector<2x96xf32>
    %1125 = math.exp %1124 : vector<2x96xf32>
    %cst_171 = arith.constant 1.000000e+00 : f32
    %1126 = vector.broadcast %cst_171 : f32 to vector<2x96xf32>
    %1127 = arith.addf %1126, %1125 : vector<2x96xf32>
    %1128 = arith.divf %1126, %1127 : vector<2x96xf32>
    %1129 = vector.extract_strided_slice %1128 {offsets = [0, 0], sizes = [2, 24], strides = [1, 1]} : vector<2x96xf32> to vector<2x24xf32>
    %1130 = vector.extract_strided_slice %1128 {offsets = [0, 24], sizes = [2, 24], strides = [1, 1]} : vector<2x96xf32> to vector<2x24xf32>
    %1131 = vector.extract_strided_slice %1128 {offsets = [0, 72], sizes = [2, 24], strides = [1, 1]} : vector<2x96xf32> to vector<2x24xf32>
    %1132 = vector.extract_strided_slice %1108 {offsets = [0, 48], sizes = [2, 24], strides = [1, 1]} : vector<2x96xf32> to vector<2x24xf32>
    %1133 = math.tanh %1132 : vector<2x24xf32>
    %1134 = arith.mulf %1130, %1099 : vector<2x24xf32>
    %1135 = arith.mulf %1129, %1133 : vector<2x24xf32>
    %1136 = arith.addf %1134, %1135 : vector<2x24xf32>
    %1137 = math.tanh %1136 : vector<2x24xf32>
    %1138 = arith.mulf %1131, %1137 : vector<2x24xf32>
    %c0_i32_172 = arith.constant 0 : i32
    %1139 = vector.broadcast %c0_i32_172 : i32 to vector<2x1xi32>
    %1140 = arith.cmpi sgt, %1080, %1139 : vector<2x1xi32>
    %c5_i32_173 = arith.constant 5 : i32
    %1141 = vector.broadcast %c5_i32_173 : i32 to vector<2x1xi32>
    %1142 = arith.cmpi sgt, %1080, %1141 : vector<2x1xi32>
    %1143 = vector.shape_cast %1140 : vector<2x1xi1> to vector<2x1xi1>
    %1144 = vector.broadcast %1143 : vector<2x1xi1> to vector<2x24xi1>
    %1145 = arith.select %1144, %1123, %1099 : vector<2x24xi1>, vector<2x24xf32>
    %1146 = vector.shape_cast %1140 : vector<2x1xi1> to vector<2x1xi1>
    %1147 = vector.broadcast %1146 : vector<2x1xi1> to vector<2x24xi1>
    %1148 = arith.select %1147, %1121, %1099 : vector<2x24xi1>, vector<2x24xf32>
    %1149 = vector.shape_cast %1142 : vector<2x1xi1> to vector<2x1xi1>
    %1150 = vector.broadcast %1149 : vector<2x1xi1> to vector<2x24xi1>
    %1151 = arith.select %1150, %1138, %1099 : vector<2x24xi1>, vector<2x24xf32>
    %1152 = vector.shape_cast %1142 : vector<2x1xi1> to vector<2x1xi1>
    %1153 = vector.broadcast %1152 : vector<2x1xi1> to vector<2x24xi1>
    %1154 = arith.select %1153, %1136, %1099 : vector<2x24xi1>, vector<2x24xf32>
    %cst_174 = arith.constant 0.000000e+00 : f32
    %1155 = vector.shape_cast %1140 : vector<2x1xi1> to vector<2x1xi1>
    %1156 = vector.broadcast %1155 : vector<2x1xi1> to vector<2x24xi1>
    %1157 = vector.broadcast %cst_174 : f32 to vector<2x24xf32>
    %1158 = arith.select %1156, %1123, %1157 : vector<2x24xi1>, vector<2x24xf32>
    %1159 = arith.addf %1099, %1158 : vector<2x24xf32>
    %cst_175 = arith.constant 0.000000e+00 : f32
    %1160 = vector.shape_cast %1142 : vector<2x1xi1> to vector<2x1xi1>
    %1161 = vector.broadcast %1160 : vector<2x1xi1> to vector<2x24xi1>
    %1162 = vector.broadcast %cst_175 : f32 to vector<2x24xf32>
    %1163 = arith.select %1161, %1138, %1162 : vector<2x24xi1>, vector<2x24xf32>
    %1164 = arith.addf %1099, %1163 : vector<2x24xf32>
    %cst_176 = arith.constant 0xFF800000 : f32
    %1165 = vector.shape_cast %1140 : vector<2x1xi1> to vector<2x1xi1>
    %1166 = vector.broadcast %1165 : vector<2x1xi1> to vector<2x24xi1>
    %1167 = vector.broadcast %cst_176 : f32 to vector<2x24xf32>
    %1168 = arith.select %1166, %1123, %1167 : vector<2x24xi1>, vector<2x24xf32>
    %1169 = arith.maximumf %1100, %1168 : vector<2x24xf32>
    %cst_177 = arith.constant 0xFF800000 : f32
    %1170 = vector.shape_cast %1142 : vector<2x1xi1> to vector<2x1xi1>
    %1171 = vector.broadcast %1170 : vector<2x1xi1> to vector<2x24xi1>
    %1172 = vector.broadcast %cst_177 : f32 to vector<2x24xf32>
    %1173 = arith.select %1171, %1138, %1172 : vector<2x24xi1>, vector<2x24xf32>
    %1174 = arith.maximumf %1100, %1173 : vector<2x24xf32>
    %1175 = vector.extract_strided_slice %1087 {offsets = [2, 0], sizes = [2, 96], strides = [1, 1]} : vector<12x96xf32> to vector<2x96xf32>
    %1176 = arith.truncf %1145 : vector<2x24xf32> to vector<2x24xbf16>
    %cst_178 = arith.constant dense<0.000000e+00> : vector<2x96xf32>
    %1177 = tpu.matmul %1176, %1096, %cst_178 {dimension_numbers = #tpu.dot_dimension_numbers<[1], [0], [0], [1], [0, 0, 1, 1], [], []>} : vector<2x24xbf16>, vector<24x96xbf16>, vector<2x96xf32> -> vector<2x96xf32>
    %1178 = arith.addf %1175, %1177 : vector<2x96xf32>
    %1179 = vector.extract_strided_slice %1094 {offsets = [8, 0], sizes = [2, 96], strides = [1, 1]} : vector<12x96xf32> to vector<2x96xf32>
    %1180 = arith.truncf %1151 : vector<2x24xf32> to vector<2x24xbf16>
    %cst_179 = arith.constant dense<0.000000e+00> : vector<2x96xf32>
    %1181 = tpu.matmul %1180, %1098, %cst_179 {dimension_numbers = #tpu.dot_dimension_numbers<[1], [0], [0], [1], [0, 0, 1, 1], [], []>} : vector<2x24xbf16>, vector<24x96xbf16>, vector<2x96xf32> -> vector<2x96xf32>
    %1182 = arith.addf %1179, %1181 : vector<2x96xf32>
    %1183 = arith.negf %1178 : vector<2x96xf32>
    %1184 = math.exp %1183 : vector<2x96xf32>
    %cst_180 = arith.constant 1.000000e+00 : f32
    %1185 = vector.broadcast %cst_180 : f32 to vector<2x96xf32>
    %1186 = arith.addf %1185, %1184 : vector<2x96xf32>
    %1187 = arith.divf %1185, %1186 : vector<2x96xf32>
    %1188 = vector.extract_strided_slice %1187 {offsets = [0, 0], sizes = [2, 24], strides = [1, 1]} : vector<2x96xf32> to vector<2x24xf32>
    %1189 = vector.extract_strided_slice %1187 {offsets = [0, 24], sizes = [2, 24], strides = [1, 1]} : vector<2x96xf32> to vector<2x24xf32>
    %1190 = vector.extract_strided_slice %1187 {offsets = [0, 72], sizes = [2, 24], strides = [1, 1]} : vector<2x96xf32> to vector<2x24xf32>
    %1191 = vector.extract_strided_slice %1178 {offsets = [0, 48], sizes = [2, 24], strides = [1, 1]} : vector<2x96xf32> to vector<2x24xf32>
    %1192 = math.tanh %1191 : vector<2x24xf32>
    %1193 = arith.mulf %1189, %1148 : vector<2x24xf32>
    %1194 = arith.mulf %1188, %1192 : vector<2x24xf32>
    %1195 = arith.addf %1193, %1194 : vector<2x24xf32>
    %1196 = math.tanh %1195 : vector<2x24xf32>
    %1197 = arith.mulf %1190, %1196 : vector<2x24xf32>
    %1198 = arith.negf %1182 : vector<2x96xf32>
    %1199 = math.exp %1198 : vector<2x96xf32>
    %cst_181 = arith.constant 1.000000e+00 : f32
    %1200 = vector.broadcast %cst_181 : f32 to vector<2x96xf32>
    %1201 = arith.addf %1200, %1199 : vector<2x96xf32>
    %1202 = arith.divf %1200, %1201 : vector<2x96xf32>
    %1203 = vector.extract_strided_slice %1202 {offsets = [0, 0], sizes = [2, 24], strides = [1, 1]} : vector<2x96xf32> to vector<2x24xf32>
    %1204 = vector.extract_strided_slice %1202 {offsets = [0, 24], sizes = [2, 24], strides = [1, 1]} : vector<2x96xf32> to vector<2x24xf32>
    %1205 = vector.extract_strided_slice %1202 {offsets = [0, 72], sizes = [2, 24], strides = [1, 1]} : vector<2x96xf32> to vector<2x24xf32>
    %1206 = vector.extract_strided_slice %1182 {offsets = [0, 48], sizes = [2, 24], strides = [1, 1]} : vector<2x96xf32> to vector<2x24xf32>
    %1207 = math.tanh %1206 : vector<2x24xf32>
    %1208 = arith.mulf %1204, %1154 : vector<2x24xf32>
    %1209 = arith.mulf %1203, %1207 : vector<2x24xf32>
    %1210 = arith.addf %1208, %1209 : vector<2x24xf32>
    %1211 = math.tanh %1210 : vector<2x24xf32>
    %1212 = arith.mulf %1205, %1211 : vector<2x24xf32>
    %c1_i32_182 = arith.constant 1 : i32
    %1213 = vector.broadcast %c1_i32_182 : i32 to vector<2x1xi32>
    %1214 = arith.cmpi sgt, %1080, %1213 : vector<2x1xi32>
    %c4_i32_183 = arith.constant 4 : i32
    %1215 = vector.broadcast %c4_i32_183 : i32 to vector<2x1xi32>
    %1216 = arith.cmpi sgt, %1080, %1215 : vector<2x1xi32>
    %1217 = vector.shape_cast %1214 : vector<2x1xi1> to vector<2x1xi1>
    %1218 = vector.broadcast %1217 : vector<2x1xi1> to vector<2x24xi1>
    %1219 = arith.select %1218, %1197, %1145 : vector<2x24xi1>, vector<2x24xf32>
    %1220 = vector.shape_cast %1214 : vector<2x1xi1> to vector<2x1xi1>
    %1221 = vector.broadcast %1220 : vector<2x1xi1> to vector<2x24xi1>
    %1222 = arith.select %1221, %1195, %1148 : vector<2x24xi1>, vector<2x24xf32>
    %1223 = vector.shape_cast %1216 : vector<2x1xi1> to vector<2x1xi1>
    %1224 = vector.broadcast %1223 : vector<2x1xi1> to vector<2x24xi1>
    %1225 = arith.select %1224, %1212, %1151 : vector<2x24xi1>, vector<2x24xf32>
    %1226 = vector.shape_cast %1216 : vector<2x1xi1> to vector<2x1xi1>
    %1227 = vector.broadcast %1226 : vector<2x1xi1> to vector<2x24xi1>
    %1228 = arith.select %1227, %1210, %1154 : vector<2x24xi1>, vector<2x24xf32>
    %cst_184 = arith.constant 0.000000e+00 : f32
    %1229 = vector.shape_cast %1214 : vector<2x1xi1> to vector<2x1xi1>
    %1230 = vector.broadcast %1229 : vector<2x1xi1> to vector<2x24xi1>
    %1231 = vector.broadcast %cst_184 : f32 to vector<2x24xf32>
    %1232 = arith.select %1230, %1197, %1231 : vector<2x24xi1>, vector<2x24xf32>
    %1233 = arith.addf %1159, %1232 : vector<2x24xf32>
    %cst_185 = arith.constant 0.000000e+00 : f32
    %1234 = vector.shape_cast %1216 : vector<2x1xi1> to vector<2x1xi1>
    %1235 = vector.broadcast %1234 : vector<2x1xi1> to vector<2x24xi1>
    %1236 = vector.broadcast %cst_185 : f32 to vector<2x24xf32>
    %1237 = arith.select %1235, %1212, %1236 : vector<2x24xi1>, vector<2x24xf32>
    %1238 = arith.addf %1164, %1237 : vector<2x24xf32>
    %cst_186 = arith.constant 0xFF800000 : f32
    %1239 = vector.shape_cast %1214 : vector<2x1xi1> to vector<2x1xi1>
    %1240 = vector.broadcast %1239 : vector<2x1xi1> to vector<2x24xi1>
    %1241 = vector.broadcast %cst_186 : f32 to vector<2x24xf32>
    %1242 = arith.select %1240, %1197, %1241 : vector<2x24xi1>, vector<2x24xf32>
    %1243 = arith.maximumf %1169, %1242 : vector<2x24xf32>
    %cst_187 = arith.constant 0xFF800000 : f32
    %1244 = vector.shape_cast %1216 : vector<2x1xi1> to vector<2x1xi1>
    %1245 = vector.broadcast %1244 : vector<2x1xi1> to vector<2x24xi1>
    %1246 = vector.broadcast %cst_187 : f32 to vector<2x24xf32>
    %1247 = arith.select %1245, %1212, %1246 : vector<2x24xi1>, vector<2x24xf32>
    %1248 = arith.maximumf %1174, %1247 : vector<2x24xf32>
    %1249 = vector.extract_strided_slice %1087 {offsets = [4, 0], sizes = [2, 96], strides = [1, 1]} : vector<12x96xf32> to vector<2x96xf32>
    %1250 = arith.truncf %1219 : vector<2x24xf32> to vector<2x24xbf16>
    %cst_188 = arith.constant dense<0.000000e+00> : vector<2x96xf32>
    %1251 = tpu.matmul %1250, %1096, %cst_188 {dimension_numbers = #tpu.dot_dimension_numbers<[1], [0], [0], [1], [0, 0, 1, 1], [], []>} : vector<2x24xbf16>, vector<24x96xbf16>, vector<2x96xf32> -> vector<2x96xf32>
    %1252 = arith.addf %1249, %1251 : vector<2x96xf32>
    %1253 = vector.extract_strided_slice %1094 {offsets = [6, 0], sizes = [2, 96], strides = [1, 1]} : vector<12x96xf32> to vector<2x96xf32>
    %1254 = arith.truncf %1225 : vector<2x24xf32> to vector<2x24xbf16>
    %cst_189 = arith.constant dense<0.000000e+00> : vector<2x96xf32>
    %1255 = tpu.matmul %1254, %1098, %cst_189 {dimension_numbers = #tpu.dot_dimension_numbers<[1], [0], [0], [1], [0, 0, 1, 1], [], []>} : vector<2x24xbf16>, vector<24x96xbf16>, vector<2x96xf32> -> vector<2x96xf32>
    %1256 = arith.addf %1253, %1255 : vector<2x96xf32>
    %1257 = arith.negf %1252 : vector<2x96xf32>
    %1258 = math.exp %1257 : vector<2x96xf32>
    %cst_190 = arith.constant 1.000000e+00 : f32
    %1259 = vector.broadcast %cst_190 : f32 to vector<2x96xf32>
    %1260 = arith.addf %1259, %1258 : vector<2x96xf32>
    %1261 = arith.divf %1259, %1260 : vector<2x96xf32>
    %1262 = vector.extract_strided_slice %1261 {offsets = [0, 0], sizes = [2, 24], strides = [1, 1]} : vector<2x96xf32> to vector<2x24xf32>
    %1263 = vector.extract_strided_slice %1261 {offsets = [0, 24], sizes = [2, 24], strides = [1, 1]} : vector<2x96xf32> to vector<2x24xf32>
    %1264 = vector.extract_strided_slice %1261 {offsets = [0, 72], sizes = [2, 24], strides = [1, 1]} : vector<2x96xf32> to vector<2x24xf32>
    %1265 = vector.extract_strided_slice %1252 {offsets = [0, 48], sizes = [2, 24], strides = [1, 1]} : vector<2x96xf32> to vector<2x24xf32>
    %1266 = math.tanh %1265 : vector<2x24xf32>
    %1267 = arith.mulf %1263, %1222 : vector<2x24xf32>
    %1268 = arith.mulf %1262, %1266 : vector<2x24xf32>
    %1269 = arith.addf %1267, %1268 : vector<2x24xf32>
    %1270 = math.tanh %1269 : vector<2x24xf32>
    %1271 = arith.mulf %1264, %1270 : vector<2x24xf32>
    %1272 = arith.negf %1256 : vector<2x96xf32>
    %1273 = math.exp %1272 : vector<2x96xf32>
    %cst_191 = arith.constant 1.000000e+00 : f32
    %1274 = vector.broadcast %cst_191 : f32 to vector<2x96xf32>
    %1275 = arith.addf %1274, %1273 : vector<2x96xf32>
    %1276 = arith.divf %1274, %1275 : vector<2x96xf32>
    %1277 = vector.extract_strided_slice %1276 {offsets = [0, 0], sizes = [2, 24], strides = [1, 1]} : vector<2x96xf32> to vector<2x24xf32>
    %1278 = vector.extract_strided_slice %1276 {offsets = [0, 24], sizes = [2, 24], strides = [1, 1]} : vector<2x96xf32> to vector<2x24xf32>
    %1279 = vector.extract_strided_slice %1276 {offsets = [0, 72], sizes = [2, 24], strides = [1, 1]} : vector<2x96xf32> to vector<2x24xf32>
    %1280 = vector.extract_strided_slice %1256 {offsets = [0, 48], sizes = [2, 24], strides = [1, 1]} : vector<2x96xf32> to vector<2x24xf32>
    %1281 = math.tanh %1280 : vector<2x24xf32>
    %1282 = arith.mulf %1278, %1228 : vector<2x24xf32>
    %1283 = arith.mulf %1277, %1281 : vector<2x24xf32>
    %1284 = arith.addf %1282, %1283 : vector<2x24xf32>
    %1285 = math.tanh %1284 : vector<2x24xf32>
    %1286 = arith.mulf %1279, %1285 : vector<2x24xf32>
    %c2_i32_192 = arith.constant 2 : i32
    %1287 = vector.broadcast %c2_i32_192 : i32 to vector<2x1xi32>
    %1288 = arith.cmpi sgt, %1080, %1287 : vector<2x1xi32>
    %c3_i32_193 = arith.constant 3 : i32
    %1289 = vector.broadcast %c3_i32_193 : i32 to vector<2x1xi32>
    %1290 = arith.cmpi sgt, %1080, %1289 : vector<2x1xi32>
    %1291 = vector.shape_cast %1288 : vector<2x1xi1> to vector<2x1xi1>
    %1292 = vector.broadcast %1291 : vector<2x1xi1> to vector<2x24xi1>
    %1293 = arith.select %1292, %1271, %1219 : vector<2x24xi1>, vector<2x24xf32>
    %1294 = vector.shape_cast %1288 : vector<2x1xi1> to vector<2x1xi1>
    %1295 = vector.broadcast %1294 : vector<2x1xi1> to vector<2x24xi1>
    %1296 = arith.select %1295, %1269, %1222 : vector<2x24xi1>, vector<2x24xf32>
    %1297 = vector.shape_cast %1290 : vector<2x1xi1> to vector<2x1xi1>
    %1298 = vector.broadcast %1297 : vector<2x1xi1> to vector<2x24xi1>
    %1299 = arith.select %1298, %1286, %1225 : vector<2x24xi1>, vector<2x24xf32>
    %1300 = vector.shape_cast %1290 : vector<2x1xi1> to vector<2x1xi1>
    %1301 = vector.broadcast %1300 : vector<2x1xi1> to vector<2x24xi1>
    %1302 = arith.select %1301, %1284, %1228 : vector<2x24xi1>, vector<2x24xf32>
    %cst_194 = arith.constant 0.000000e+00 : f32
    %1303 = vector.shape_cast %1288 : vector<2x1xi1> to vector<2x1xi1>
    %1304 = vector.broadcast %1303 : vector<2x1xi1> to vector<2x24xi1>
    %1305 = vector.broadcast %cst_194 : f32 to vector<2x24xf32>
    %1306 = arith.select %1304, %1271, %1305 : vector<2x24xi1>, vector<2x24xf32>
    %1307 = arith.addf %1233, %1306 : vector<2x24xf32>
    %cst_195 = arith.constant 0.000000e+00 : f32
    %1308 = vector.shape_cast %1290 : vector<2x1xi1> to vector<2x1xi1>
    %1309 = vector.broadcast %1308 : vector<2x1xi1> to vector<2x24xi1>
    %1310 = vector.broadcast %cst_195 : f32 to vector<2x24xf32>
    %1311 = arith.select %1309, %1286, %1310 : vector<2x24xi1>, vector<2x24xf32>
    %1312 = arith.addf %1238, %1311 : vector<2x24xf32>
    %cst_196 = arith.constant 0xFF800000 : f32
    %1313 = vector.shape_cast %1288 : vector<2x1xi1> to vector<2x1xi1>
    %1314 = vector.broadcast %1313 : vector<2x1xi1> to vector<2x24xi1>
    %1315 = vector.broadcast %cst_196 : f32 to vector<2x24xf32>
    %1316 = arith.select %1314, %1271, %1315 : vector<2x24xi1>, vector<2x24xf32>
    %1317 = arith.maximumf %1243, %1316 : vector<2x24xf32>
    %cst_197 = arith.constant 0xFF800000 : f32
    %1318 = vector.shape_cast %1290 : vector<2x1xi1> to vector<2x1xi1>
    %1319 = vector.broadcast %1318 : vector<2x1xi1> to vector<2x24xi1>
    %1320 = vector.broadcast %cst_197 : f32 to vector<2x24xf32>
    %1321 = arith.select %1319, %1286, %1320 : vector<2x24xi1>, vector<2x24xf32>
    %1322 = arith.maximumf %1248, %1321 : vector<2x24xf32>
    %1323 = vector.extract_strided_slice %1087 {offsets = [6, 0], sizes = [2, 96], strides = [1, 1]} : vector<12x96xf32> to vector<2x96xf32>
    %1324 = arith.truncf %1293 : vector<2x24xf32> to vector<2x24xbf16>
    %cst_198 = arith.constant dense<0.000000e+00> : vector<2x96xf32>
    %1325 = tpu.matmul %1324, %1096, %cst_198 {dimension_numbers = #tpu.dot_dimension_numbers<[1], [0], [0], [1], [0, 0, 1, 1], [], []>} : vector<2x24xbf16>, vector<24x96xbf16>, vector<2x96xf32> -> vector<2x96xf32>
    %1326 = arith.addf %1323, %1325 : vector<2x96xf32>
    %1327 = vector.extract_strided_slice %1094 {offsets = [4, 0], sizes = [2, 96], strides = [1, 1]} : vector<12x96xf32> to vector<2x96xf32>
    %1328 = arith.truncf %1299 : vector<2x24xf32> to vector<2x24xbf16>
    %cst_199 = arith.constant dense<0.000000e+00> : vector<2x96xf32>
    %1329 = tpu.matmul %1328, %1098, %cst_199 {dimension_numbers = #tpu.dot_dimension_numbers<[1], [0], [0], [1], [0, 0, 1, 1], [], []>} : vector<2x24xbf16>, vector<24x96xbf16>, vector<2x96xf32> -> vector<2x96xf32>
    %1330 = arith.addf %1327, %1329 : vector<2x96xf32>
    %1331 = arith.negf %1326 : vector<2x96xf32>
    %1332 = math.exp %1331 : vector<2x96xf32>
    %cst_200 = arith.constant 1.000000e+00 : f32
    %1333 = vector.broadcast %cst_200 : f32 to vector<2x96xf32>
    %1334 = arith.addf %1333, %1332 : vector<2x96xf32>
    %1335 = arith.divf %1333, %1334 : vector<2x96xf32>
    %1336 = vector.extract_strided_slice %1335 {offsets = [0, 0], sizes = [2, 24], strides = [1, 1]} : vector<2x96xf32> to vector<2x24xf32>
    %1337 = vector.extract_strided_slice %1335 {offsets = [0, 24], sizes = [2, 24], strides = [1, 1]} : vector<2x96xf32> to vector<2x24xf32>
    %1338 = vector.extract_strided_slice %1335 {offsets = [0, 72], sizes = [2, 24], strides = [1, 1]} : vector<2x96xf32> to vector<2x24xf32>
    %1339 = vector.extract_strided_slice %1326 {offsets = [0, 48], sizes = [2, 24], strides = [1, 1]} : vector<2x96xf32> to vector<2x24xf32>
    %1340 = math.tanh %1339 : vector<2x24xf32>
    %1341 = arith.mulf %1337, %1296 : vector<2x24xf32>
    %1342 = arith.mulf %1336, %1340 : vector<2x24xf32>
    %1343 = arith.addf %1341, %1342 : vector<2x24xf32>
    %1344 = math.tanh %1343 : vector<2x24xf32>
    %1345 = arith.mulf %1338, %1344 : vector<2x24xf32>
    %1346 = arith.negf %1330 : vector<2x96xf32>
    %1347 = math.exp %1346 : vector<2x96xf32>
    %cst_201 = arith.constant 1.000000e+00 : f32
    %1348 = vector.broadcast %cst_201 : f32 to vector<2x96xf32>
    %1349 = arith.addf %1348, %1347 : vector<2x96xf32>
    %1350 = arith.divf %1348, %1349 : vector<2x96xf32>
    %1351 = vector.extract_strided_slice %1350 {offsets = [0, 0], sizes = [2, 24], strides = [1, 1]} : vector<2x96xf32> to vector<2x24xf32>
    %1352 = vector.extract_strided_slice %1350 {offsets = [0, 24], sizes = [2, 24], strides = [1, 1]} : vector<2x96xf32> to vector<2x24xf32>
    %1353 = vector.extract_strided_slice %1350 {offsets = [0, 72], sizes = [2, 24], strides = [1, 1]} : vector<2x96xf32> to vector<2x24xf32>
    %1354 = vector.extract_strided_slice %1330 {offsets = [0, 48], sizes = [2, 24], strides = [1, 1]} : vector<2x96xf32> to vector<2x24xf32>
    %1355 = math.tanh %1354 : vector<2x24xf32>
    %1356 = arith.mulf %1352, %1302 : vector<2x24xf32>
    %1357 = arith.mulf %1351, %1355 : vector<2x24xf32>
    %1358 = arith.addf %1356, %1357 : vector<2x24xf32>
    %1359 = math.tanh %1358 : vector<2x24xf32>
    %1360 = arith.mulf %1353, %1359 : vector<2x24xf32>
    %c3_i32_202 = arith.constant 3 : i32
    %1361 = vector.broadcast %c3_i32_202 : i32 to vector<2x1xi32>
    %1362 = arith.cmpi sgt, %1080, %1361 : vector<2x1xi32>
    %c2_i32_203 = arith.constant 2 : i32
    %1363 = vector.broadcast %c2_i32_203 : i32 to vector<2x1xi32>
    %1364 = arith.cmpi sgt, %1080, %1363 : vector<2x1xi32>
    %1365 = vector.shape_cast %1362 : vector<2x1xi1> to vector<2x1xi1>
    %1366 = vector.broadcast %1365 : vector<2x1xi1> to vector<2x24xi1>
    %1367 = arith.select %1366, %1345, %1293 : vector<2x24xi1>, vector<2x24xf32>
    %1368 = vector.shape_cast %1362 : vector<2x1xi1> to vector<2x1xi1>
    %1369 = vector.broadcast %1368 : vector<2x1xi1> to vector<2x24xi1>
    %1370 = arith.select %1369, %1343, %1296 : vector<2x24xi1>, vector<2x24xf32>
    %1371 = vector.shape_cast %1364 : vector<2x1xi1> to vector<2x1xi1>
    %1372 = vector.broadcast %1371 : vector<2x1xi1> to vector<2x24xi1>
    %1373 = arith.select %1372, %1360, %1299 : vector<2x24xi1>, vector<2x24xf32>
    %1374 = vector.shape_cast %1364 : vector<2x1xi1> to vector<2x1xi1>
    %1375 = vector.broadcast %1374 : vector<2x1xi1> to vector<2x24xi1>
    %1376 = arith.select %1375, %1358, %1302 : vector<2x24xi1>, vector<2x24xf32>
    %cst_204 = arith.constant 0.000000e+00 : f32
    %1377 = vector.shape_cast %1362 : vector<2x1xi1> to vector<2x1xi1>
    %1378 = vector.broadcast %1377 : vector<2x1xi1> to vector<2x24xi1>
    %1379 = vector.broadcast %cst_204 : f32 to vector<2x24xf32>
    %1380 = arith.select %1378, %1345, %1379 : vector<2x24xi1>, vector<2x24xf32>
    %1381 = arith.addf %1307, %1380 : vector<2x24xf32>
    %cst_205 = arith.constant 0.000000e+00 : f32
    %1382 = vector.shape_cast %1364 : vector<2x1xi1> to vector<2x1xi1>
    %1383 = vector.broadcast %1382 : vector<2x1xi1> to vector<2x24xi1>
    %1384 = vector.broadcast %cst_205 : f32 to vector<2x24xf32>
    %1385 = arith.select %1383, %1360, %1384 : vector<2x24xi1>, vector<2x24xf32>
    %1386 = arith.addf %1312, %1385 : vector<2x24xf32>
    %cst_206 = arith.constant 0xFF800000 : f32
    %1387 = vector.shape_cast %1362 : vector<2x1xi1> to vector<2x1xi1>
    %1388 = vector.broadcast %1387 : vector<2x1xi1> to vector<2x24xi1>
    %1389 = vector.broadcast %cst_206 : f32 to vector<2x24xf32>
    %1390 = arith.select %1388, %1345, %1389 : vector<2x24xi1>, vector<2x24xf32>
    %1391 = arith.maximumf %1317, %1390 : vector<2x24xf32>
    %cst_207 = arith.constant 0xFF800000 : f32
    %1392 = vector.shape_cast %1364 : vector<2x1xi1> to vector<2x1xi1>
    %1393 = vector.broadcast %1392 : vector<2x1xi1> to vector<2x24xi1>
    %1394 = vector.broadcast %cst_207 : f32 to vector<2x24xf32>
    %1395 = arith.select %1393, %1360, %1394 : vector<2x24xi1>, vector<2x24xf32>
    %1396 = arith.maximumf %1322, %1395 : vector<2x24xf32>
    %1397 = vector.extract_strided_slice %1087 {offsets = [8, 0], sizes = [2, 96], strides = [1, 1]} : vector<12x96xf32> to vector<2x96xf32>
    %1398 = arith.truncf %1367 : vector<2x24xf32> to vector<2x24xbf16>
    %cst_208 = arith.constant dense<0.000000e+00> : vector<2x96xf32>
    %1399 = tpu.matmul %1398, %1096, %cst_208 {dimension_numbers = #tpu.dot_dimension_numbers<[1], [0], [0], [1], [0, 0, 1, 1], [], []>} : vector<2x24xbf16>, vector<24x96xbf16>, vector<2x96xf32> -> vector<2x96xf32>
    %1400 = arith.addf %1397, %1399 : vector<2x96xf32>
    %1401 = vector.extract_strided_slice %1094 {offsets = [2, 0], sizes = [2, 96], strides = [1, 1]} : vector<12x96xf32> to vector<2x96xf32>
    %1402 = arith.truncf %1373 : vector<2x24xf32> to vector<2x24xbf16>
    %cst_209 = arith.constant dense<0.000000e+00> : vector<2x96xf32>
    %1403 = tpu.matmul %1402, %1098, %cst_209 {dimension_numbers = #tpu.dot_dimension_numbers<[1], [0], [0], [1], [0, 0, 1, 1], [], []>} : vector<2x24xbf16>, vector<24x96xbf16>, vector<2x96xf32> -> vector<2x96xf32>
    %1404 = arith.addf %1401, %1403 : vector<2x96xf32>
    %1405 = arith.negf %1400 : vector<2x96xf32>
    %1406 = math.exp %1405 : vector<2x96xf32>
    %cst_210 = arith.constant 1.000000e+00 : f32
    %1407 = vector.broadcast %cst_210 : f32 to vector<2x96xf32>
    %1408 = arith.addf %1407, %1406 : vector<2x96xf32>
    %1409 = arith.divf %1407, %1408 : vector<2x96xf32>
    %1410 = vector.extract_strided_slice %1409 {offsets = [0, 0], sizes = [2, 24], strides = [1, 1]} : vector<2x96xf32> to vector<2x24xf32>
    %1411 = vector.extract_strided_slice %1409 {offsets = [0, 24], sizes = [2, 24], strides = [1, 1]} : vector<2x96xf32> to vector<2x24xf32>
    %1412 = vector.extract_strided_slice %1409 {offsets = [0, 72], sizes = [2, 24], strides = [1, 1]} : vector<2x96xf32> to vector<2x24xf32>
    %1413 = vector.extract_strided_slice %1400 {offsets = [0, 48], sizes = [2, 24], strides = [1, 1]} : vector<2x96xf32> to vector<2x24xf32>
    %1414 = math.tanh %1413 : vector<2x24xf32>
    %1415 = arith.mulf %1411, %1370 : vector<2x24xf32>
    %1416 = arith.mulf %1410, %1414 : vector<2x24xf32>
    %1417 = arith.addf %1415, %1416 : vector<2x24xf32>
    %1418 = math.tanh %1417 : vector<2x24xf32>
    %1419 = arith.mulf %1412, %1418 : vector<2x24xf32>
    %1420 = arith.negf %1404 : vector<2x96xf32>
    %1421 = math.exp %1420 : vector<2x96xf32>
    %cst_211 = arith.constant 1.000000e+00 : f32
    %1422 = vector.broadcast %cst_211 : f32 to vector<2x96xf32>
    %1423 = arith.addf %1422, %1421 : vector<2x96xf32>
    %1424 = arith.divf %1422, %1423 : vector<2x96xf32>
    %1425 = vector.extract_strided_slice %1424 {offsets = [0, 0], sizes = [2, 24], strides = [1, 1]} : vector<2x96xf32> to vector<2x24xf32>
    %1426 = vector.extract_strided_slice %1424 {offsets = [0, 24], sizes = [2, 24], strides = [1, 1]} : vector<2x96xf32> to vector<2x24xf32>
    %1427 = vector.extract_strided_slice %1424 {offsets = [0, 72], sizes = [2, 24], strides = [1, 1]} : vector<2x96xf32> to vector<2x24xf32>
    %1428 = vector.extract_strided_slice %1404 {offsets = [0, 48], sizes = [2, 24], strides = [1, 1]} : vector<2x96xf32> to vector<2x24xf32>
    %1429 = math.tanh %1428 : vector<2x24xf32>
    %1430 = arith.mulf %1426, %1376 : vector<2x24xf32>
    %1431 = arith.mulf %1425, %1429 : vector<2x24xf32>
    %1432 = arith.addf %1430, %1431 : vector<2x24xf32>
    %1433 = math.tanh %1432 : vector<2x24xf32>
    %1434 = arith.mulf %1427, %1433 : vector<2x24xf32>
    %c4_i32_212 = arith.constant 4 : i32
    %1435 = vector.broadcast %c4_i32_212 : i32 to vector<2x1xi32>
    %1436 = arith.cmpi sgt, %1080, %1435 : vector<2x1xi32>
    %c1_i32_213 = arith.constant 1 : i32
    %1437 = vector.broadcast %c1_i32_213 : i32 to vector<2x1xi32>
    %1438 = arith.cmpi sgt, %1080, %1437 : vector<2x1xi32>
    %1439 = vector.shape_cast %1436 : vector<2x1xi1> to vector<2x1xi1>
    %1440 = vector.broadcast %1439 : vector<2x1xi1> to vector<2x24xi1>
    %1441 = arith.select %1440, %1419, %1367 : vector<2x24xi1>, vector<2x24xf32>
    %1442 = vector.shape_cast %1436 : vector<2x1xi1> to vector<2x1xi1>
    %1443 = vector.broadcast %1442 : vector<2x1xi1> to vector<2x24xi1>
    %1444 = arith.select %1443, %1417, %1370 : vector<2x24xi1>, vector<2x24xf32>
    %1445 = vector.shape_cast %1438 : vector<2x1xi1> to vector<2x1xi1>
    %1446 = vector.broadcast %1445 : vector<2x1xi1> to vector<2x24xi1>
    %1447 = arith.select %1446, %1434, %1373 : vector<2x24xi1>, vector<2x24xf32>
    %1448 = vector.shape_cast %1438 : vector<2x1xi1> to vector<2x1xi1>
    %1449 = vector.broadcast %1448 : vector<2x1xi1> to vector<2x24xi1>
    %1450 = arith.select %1449, %1432, %1376 : vector<2x24xi1>, vector<2x24xf32>
    %cst_214 = arith.constant 0.000000e+00 : f32
    %1451 = vector.shape_cast %1436 : vector<2x1xi1> to vector<2x1xi1>
    %1452 = vector.broadcast %1451 : vector<2x1xi1> to vector<2x24xi1>
    %1453 = vector.broadcast %cst_214 : f32 to vector<2x24xf32>
    %1454 = arith.select %1452, %1419, %1453 : vector<2x24xi1>, vector<2x24xf32>
    %1455 = arith.addf %1381, %1454 : vector<2x24xf32>
    %cst_215 = arith.constant 0.000000e+00 : f32
    %1456 = vector.shape_cast %1438 : vector<2x1xi1> to vector<2x1xi1>
    %1457 = vector.broadcast %1456 : vector<2x1xi1> to vector<2x24xi1>
    %1458 = vector.broadcast %cst_215 : f32 to vector<2x24xf32>
    %1459 = arith.select %1457, %1434, %1458 : vector<2x24xi1>, vector<2x24xf32>
    %1460 = arith.addf %1386, %1459 : vector<2x24xf32>
    %cst_216 = arith.constant 0xFF800000 : f32
    %1461 = vector.shape_cast %1436 : vector<2x1xi1> to vector<2x1xi1>
    %1462 = vector.broadcast %1461 : vector<2x1xi1> to vector<2x24xi1>
    %1463 = vector.broadcast %cst_216 : f32 to vector<2x24xf32>
    %1464 = arith.select %1462, %1419, %1463 : vector<2x24xi1>, vector<2x24xf32>
    %1465 = arith.maximumf %1391, %1464 : vector<2x24xf32>
    %cst_217 = arith.constant 0xFF800000 : f32
    %1466 = vector.shape_cast %1438 : vector<2x1xi1> to vector<2x1xi1>
    %1467 = vector.broadcast %1466 : vector<2x1xi1> to vector<2x24xi1>
    %1468 = vector.broadcast %cst_217 : f32 to vector<2x24xf32>
    %1469 = arith.select %1467, %1434, %1468 : vector<2x24xi1>, vector<2x24xf32>
    %1470 = arith.maximumf %1396, %1469 : vector<2x24xf32>
    %1471 = vector.extract_strided_slice %1087 {offsets = [10, 0], sizes = [2, 96], strides = [1, 1]} : vector<12x96xf32> to vector<2x96xf32>
    %1472 = arith.truncf %1441 : vector<2x24xf32> to vector<2x24xbf16>
    %cst_218 = arith.constant dense<0.000000e+00> : vector<2x96xf32>
    %1473 = tpu.matmul %1472, %1096, %cst_218 {dimension_numbers = #tpu.dot_dimension_numbers<[1], [0], [0], [1], [0, 0, 1, 1], [], []>} : vector<2x24xbf16>, vector<24x96xbf16>, vector<2x96xf32> -> vector<2x96xf32>
    %1474 = arith.addf %1471, %1473 : vector<2x96xf32>
    %1475 = vector.extract_strided_slice %1094 {offsets = [0, 0], sizes = [2, 96], strides = [1, 1]} : vector<12x96xf32> to vector<2x96xf32>
    %1476 = arith.truncf %1447 : vector<2x24xf32> to vector<2x24xbf16>
    %cst_219 = arith.constant dense<0.000000e+00> : vector<2x96xf32>
    %1477 = tpu.matmul %1476, %1098, %cst_219 {dimension_numbers = #tpu.dot_dimension_numbers<[1], [0], [0], [1], [0, 0, 1, 1], [], []>} : vector<2x24xbf16>, vector<24x96xbf16>, vector<2x96xf32> -> vector<2x96xf32>
    %1478 = arith.addf %1475, %1477 : vector<2x96xf32>
    %1479 = arith.negf %1474 : vector<2x96xf32>
    %1480 = math.exp %1479 : vector<2x96xf32>
    %cst_220 = arith.constant 1.000000e+00 : f32
    %1481 = vector.broadcast %cst_220 : f32 to vector<2x96xf32>
    %1482 = arith.addf %1481, %1480 : vector<2x96xf32>
    %1483 = arith.divf %1481, %1482 : vector<2x96xf32>
    %1484 = vector.extract_strided_slice %1483 {offsets = [0, 0], sizes = [2, 24], strides = [1, 1]} : vector<2x96xf32> to vector<2x24xf32>
    %1485 = vector.extract_strided_slice %1483 {offsets = [0, 24], sizes = [2, 24], strides = [1, 1]} : vector<2x96xf32> to vector<2x24xf32>
    %1486 = vector.extract_strided_slice %1483 {offsets = [0, 72], sizes = [2, 24], strides = [1, 1]} : vector<2x96xf32> to vector<2x24xf32>
    %1487 = vector.extract_strided_slice %1474 {offsets = [0, 48], sizes = [2, 24], strides = [1, 1]} : vector<2x96xf32> to vector<2x24xf32>
    %1488 = math.tanh %1487 : vector<2x24xf32>
    %1489 = arith.mulf %1485, %1444 : vector<2x24xf32>
    %1490 = arith.mulf %1484, %1488 : vector<2x24xf32>
    %1491 = arith.addf %1489, %1490 : vector<2x24xf32>
    %1492 = math.tanh %1491 : vector<2x24xf32>
    %1493 = arith.mulf %1486, %1492 : vector<2x24xf32>
    %1494 = arith.negf %1478 : vector<2x96xf32>
    %1495 = math.exp %1494 : vector<2x96xf32>
    %cst_221 = arith.constant 1.000000e+00 : f32
    %1496 = vector.broadcast %cst_221 : f32 to vector<2x96xf32>
    %1497 = arith.addf %1496, %1495 : vector<2x96xf32>
    %1498 = arith.divf %1496, %1497 : vector<2x96xf32>
    %1499 = vector.extract_strided_slice %1498 {offsets = [0, 0], sizes = [2, 24], strides = [1, 1]} : vector<2x96xf32> to vector<2x24xf32>
    %1500 = vector.extract_strided_slice %1498 {offsets = [0, 24], sizes = [2, 24], strides = [1, 1]} : vector<2x96xf32> to vector<2x24xf32>
    %1501 = vector.extract_strided_slice %1498 {offsets = [0, 72], sizes = [2, 24], strides = [1, 1]} : vector<2x96xf32> to vector<2x24xf32>
    %1502 = vector.extract_strided_slice %1478 {offsets = [0, 48], sizes = [2, 24], strides = [1, 1]} : vector<2x96xf32> to vector<2x24xf32>
    %1503 = math.tanh %1502 : vector<2x24xf32>
    %1504 = arith.mulf %1500, %1450 : vector<2x24xf32>
    %1505 = arith.mulf %1499, %1503 : vector<2x24xf32>
    %1506 = arith.addf %1504, %1505 : vector<2x24xf32>
    %1507 = math.tanh %1506 : vector<2x24xf32>
    %1508 = arith.mulf %1501, %1507 : vector<2x24xf32>
    %c5_i32_222 = arith.constant 5 : i32
    %1509 = vector.broadcast %c5_i32_222 : i32 to vector<2x1xi32>
    %1510 = arith.cmpi sgt, %1080, %1509 : vector<2x1xi32>
    %c0_i32_223 = arith.constant 0 : i32
    %1511 = vector.broadcast %c0_i32_223 : i32 to vector<2x1xi32>
    %1512 = arith.cmpi sgt, %1080, %1511 : vector<2x1xi32>
    %1513 = vector.shape_cast %1510 : vector<2x1xi1> to vector<2x1xi1>
    %1514 = vector.broadcast %1513 : vector<2x1xi1> to vector<2x24xi1>
    %1515 = arith.select %1514, %1493, %1441 : vector<2x24xi1>, vector<2x24xf32>
    %1516 = vector.shape_cast %1512 : vector<2x1xi1> to vector<2x1xi1>
    %1517 = vector.broadcast %1516 : vector<2x1xi1> to vector<2x24xi1>
    %1518 = arith.select %1517, %1508, %1447 : vector<2x24xi1>, vector<2x24xf32>
    %cst_224 = arith.constant 0.000000e+00 : f32
    %1519 = vector.shape_cast %1510 : vector<2x1xi1> to vector<2x1xi1>
    %1520 = vector.broadcast %1519 : vector<2x1xi1> to vector<2x24xi1>
    %1521 = vector.broadcast %cst_224 : f32 to vector<2x24xf32>
    %1522 = arith.select %1520, %1493, %1521 : vector<2x24xi1>, vector<2x24xf32>
    %1523 = arith.addf %1455, %1522 : vector<2x24xf32>
    %cst_225 = arith.constant 0.000000e+00 : f32
    %1524 = vector.shape_cast %1512 : vector<2x1xi1> to vector<2x1xi1>
    %1525 = vector.broadcast %1524 : vector<2x1xi1> to vector<2x24xi1>
    %1526 = vector.broadcast %cst_225 : f32 to vector<2x24xf32>
    %1527 = arith.select %1525, %1508, %1526 : vector<2x24xi1>, vector<2x24xf32>
    %1528 = arith.addf %1460, %1527 : vector<2x24xf32>
    %cst_226 = arith.constant 0xFF800000 : f32
    %1529 = vector.shape_cast %1510 : vector<2x1xi1> to vector<2x1xi1>
    %1530 = vector.broadcast %1529 : vector<2x1xi1> to vector<2x24xi1>
    %1531 = vector.broadcast %cst_226 : f32 to vector<2x24xf32>
    %1532 = arith.select %1530, %1493, %1531 : vector<2x24xi1>, vector<2x24xf32>
    %1533 = arith.maximumf %1465, %1532 : vector<2x24xf32>
    %cst_227 = arith.constant 0xFF800000 : f32
    %1534 = vector.shape_cast %1512 : vector<2x1xi1> to vector<2x1xi1>
    %1535 = vector.broadcast %1534 : vector<2x1xi1> to vector<2x24xi1>
    %1536 = vector.broadcast %cst_227 : f32 to vector<2x24xf32>
    %1537 = arith.select %1535, %1508, %1536 : vector<2x24xi1>, vector<2x24xf32>
    %1538 = arith.maximumf %1470, %1537 : vector<2x24xf32>
    %1539 = arith.sitofp %1080 : vector<2x1xi32> to vector<2x1xf32>
    %cst_228 = arith.constant 1.000000e+00 : f32
    %1540 = vector.broadcast %cst_228 : f32 to vector<2x1xf32>
    %1541 = arith.divf %1540, %1539 : vector<2x1xf32>
    %1542 = vector.broadcast %1541 : vector<2x1xf32> to vector<2x24xf32>
    %1543 = arith.mulf %1523, %1542 : vector<2x24xf32>
    %1544 = vector.broadcast %1541 : vector<2x1xf32> to vector<2x24xf32>
    %1545 = arith.mulf %1528, %1544 : vector<2x24xf32>
    %1546 = tpu.concatenate %1518, %1515, %1543, %1545, %1533, %1538 in 1 : vector<2x24xf32>, vector<2x24xf32>, vector<2x24xf32>, vector<2x24xf32>, vector<2x24xf32>, vector<2x24xf32> -> vector<2x144xf32>
    %c0_229 = arith.constant 0 : index
    %c0_230 = arith.constant 0 : index
    %1547 = vector.load %arg14[%c0_229, %c0_230] : memref<32x16xf32, #tpu.memory_space<vmem>>, vector<32x16xf32>
    %cst_231 = arith.constant dense<0.000000e+00> : vector<2x16xf32>
    %1548 = tpu.matmul %160, %1547, %cst_231 {dimension_numbers = #tpu.dot_dimension_numbers<[1], [0], [0], [1], [0, 0, 1, 1], [], []>} : vector<2x32xf32>, vector<32x16xf32>, vector<2x16xf32> -> vector<2x16xf32>
    %c0_232 = arith.constant 0 : index
    %c0_233 = arith.constant 0 : index
    %1549 = vector.load %arg15[%c0_232, %c0_233] : memref<192x16xf32, #tpu.memory_space<vmem>>, vector<192x16xf32>
    %cst_234 = arith.constant dense<0.000000e+00> : vector<2x16xf32>
    %1550 = tpu.matmul %1075, %1549, %cst_234 {dimension_numbers = #tpu.dot_dimension_numbers<[1], [0], [0], [1], [0, 0, 1, 1], [], []>} : vector<2x192xf32>, vector<192x16xf32>, vector<2x16xf32> -> vector<2x16xf32>
    %1551 = arith.addf %1548, %1550 : vector<2x16xf32>
    %c0_235 = arith.constant 0 : index
    %c0_236 = arith.constant 0 : index
    %1552 = vector.load %arg16[%c0_235, %c0_236] : memref<144x16xf32, #tpu.memory_space<vmem>>, vector<144x16xf32>
    %cst_237 = arith.constant dense<0.000000e+00> : vector<2x16xf32>
    %1553 = tpu.matmul %1546, %1552, %cst_237 {dimension_numbers = #tpu.dot_dimension_numbers<[1], [0], [0], [1], [0, 0, 1, 1], [], []>} : vector<2x144xf32>, vector<144x16xf32>, vector<2x16xf32> -> vector<2x16xf32>
    %1554 = arith.addf %1551, %1553 : vector<2x16xf32>
    %c0_238 = arith.constant 0 : index
    %c0_239 = arith.constant 0 : index
    %1555 = vector.load %arg17[%c0_238, %c0_239] : memref<1x16xf32, #tpu.memory_space<vmem>>, vector<1x16xf32>
    %1556 = vector.broadcast %1555 : vector<1x16xf32> to vector<2x16xf32>
    %1557 = arith.addf %1554, %1556 : vector<2x16xf32>
    %cst_240 = arith.constant 0.000000e+00 : f32
    %1558 = vector.broadcast %cst_240 : f32 to vector<2x16xf32>
    %1559 = arith.maximumf %1557, %1558 : vector<2x16xf32>
    %c0_241 = arith.constant 0 : index
    %c0_242 = arith.constant 0 : index
    %1560 = vector.load %arg18[%c0_241, %c0_242] : memref<1x16xf32, #tpu.memory_space<vmem>>, vector<1x16xf32>
    %1561 = vector.broadcast %1560 : vector<1x16xf32> to vector<2x16xf32>
    %1562 = arith.mulf %1559, %1561 : vector<2x16xf32>
    %cst_243 = arith.constant dense<0.000000e+00> : vector<2xf32>
    %1563 = vector.multi_reduction <add>, %1562, %cst_243 [1] : vector<2x16xf32> to vector<2xf32>
    %1564 = vector.shape_cast %1563 : vector<2xf32> to vector<2x1xf32>
    %c0_244 = arith.constant 0 : index
    %c0_245 = arith.constant 0 : index
    %1565 = vector.load %arg19[%c0_244, %c0_245] : memref<1x1xf32, #tpu.memory_space<vmem>>, vector<1x1xf32>
    %1566 = vector.broadcast %1565 : vector<1x1xf32> to vector<2x1xf32>
    %1567 = arith.addf %1564, %1566 : vector<2x1xf32>
    %c0_246 = arith.constant 0 : index
    %c0_247 = arith.constant 0 : index
    %1568 = vector.load %arg20[%c0_246, %c0_247] : memref<2x1xf32, #tpu.memory_space<vmem>>, vector<2x1xf32>
    tpu.vector_store %arg20[%c0_246, %c0_247], %1567 {strides = array<i32>} : memref<2x1xf32, #tpu.memory_space<vmem>>, vector<2x1xf32>,
    return
  }
}

</mosaic_0001>

<llo_original>
// kernel: _forward_device.1
$region0: #{_forward_device.1}
  #allocation0 [shape = 'u32[]', space=smem, size = 0x4, offset = 0x4, fixed_abs, tag = 'smem constant byte address 0x4 - core index']
  #allocation1 [shape = 'u32[72,128]{1,0:T(1,128)}', space=vmem, size = 0x9000, scoped, tag = 'internal scratch']
  #allocation2 [shape = 'f32[1,1]{1,0:T(1,128)S(1)}', space=vmem, size = 0x200, scoped, tag = 'scoped memory for _forward_device.1']
  %s0 = inlined_call_operand.vmem [shape: bf16[16,10], index: 0, kind: input, shape index: {}]
  %s1 = inlined_call_operand.vmem [shape: bf16[24,16], index: 1, kind: input, shape index: {}]
  %s2 = inlined_call_operand.vmem [shape: bf16[12,16], index: 2, kind: input, shape index: {}]
  %s3 = inlined_call_operand.vmem [shape: s32[2,1], index: 3, kind: input, shape index: {}]
  %s4 = inlined_call_operand.vmem [shape: s32[2,1], index: 4, kind: input, shape index: {}]
  %s5 = inlined_call_operand.vmem [shape: bf16[10,128], index: 5, kind: input, shape index: {}]
  %s6 = inlined_call_operand.vmem [shape: bf16[32,128], index: 6, kind: input, shape index: {}]
  %s7 = inlined_call_operand.vmem [shape: f32[1,128], index: 7, kind: input, shape index: {}]
  %s8 = inlined_call_operand.vmem [shape: bf16[2,16,128], index: 8, kind: input, shape index: {}]
  %s9 = inlined_call_operand.vmem [shape: bf16[2,32,128], index: 9, kind: input, shape index: {}]
  %s10 = inlined_call_operand.vmem [shape: f32[2,1,128], index: 10, kind: input, shape index: {}]
  %s11 = inlined_call_operand.vmem [shape: bf16[2,16,96], index: 11, kind: input, shape index: {}]
  %s12 = inlined_call_operand.vmem [shape: bf16[2,24,96], index: 12, kind: input, shape index: {}]
  %s13 = inlined_call_operand.vmem [shape: f32[2,1,96], index: 13, kind: input, shape index: {}]
  %s14 = inlined_call_operand.vmem [shape: f32[32,16], index: 14, kind: input, shape index: {}]
  %s15 = inlined_call_operand.vmem [shape: f32[192,16], index: 15, kind: input, shape index: {}]
  %s16 = inlined_call_operand.vmem [shape: f32[144,16], index: 16, kind: input, shape index: {}]
  %s17 = inlined_call_operand.vmem [shape: f32[1,16], index: 17, kind: input, shape index: {}]
  %s18 = inlined_call_operand.vmem [shape: f32[1,16], index: 18, kind: input, shape index: {}]
  %s19 = inlined_call_operand.<no memory space> [shape: f32[1,1], index: 19, kind: input, shape index: {}]
  %s20 = inlined_call_operand.vmem [shape: f32[2,1], index: 20, kind: output, shape index: {}]
  %s21 = sld [smem:[#allocation0]]
  $region90: #{_forward_device.1} parent=0
    _
  %s23 = ssub.s32 1, %s21
  %s24 = scalar_select 0, %s23, %s21
  %v25 = vstv %s19
  %26 = vst [vmem:[#allocation2] sm:$0x1] %v25
  // Predicated region
  $region2: #{_forward_device.1} parent=0 // pred_check
    _
  $region3: #{_forward_device.1} parent=0 // pred_check_branch
    %28 = sbr.rel (0) target = $region5
  $region4: #{_forward_device.1} parent=0 // pred_region
    _
  $region5: #{_forward_device.1} parent=0 // pred_fallthru
    _
  // Predicated region
  $region6: #{_forward_device.1} parent=0 // pred_check
    _
  $region7: #{_forward_device.1} parent=0 // pred_check_branch
    %30 = sbr.rel (0) target = $region9
  $region8: #{_forward_device.1} parent=0 // pred_region
    _
  $region9: #{_forward_device.1} parent=0 // pred_fallthru
    _
  // Predicated region
  $region10: #{_forward_device.1} parent=0 // pred_check
    _
  $region11: #{_forward_device.1} parent=0 // pred_check_branch
    %32 = sbr.rel (0) target = $region13
  $region12: #{_forward_device.1} parent=0 // pred_region
    _
  $region13: #{_forward_device.1} parent=0 // pred_fallthru
    _
  // Predicated region
  $region14: #{_forward_device.1} parent=0 // pred_check
    _
  $region15: #{_forward_device.1} parent=0 // pred_check_branch
    %34 = sbr.rel (0) target = $region17
  $region16: #{_forward_device.1} parent=0 // pred_region
    _
  $region17: #{_forward_device.1} parent=0 // pred_fallthru
    _
  // Predicated region
  $region18: #{_forward_device.1} parent=0 // pred_check
    _
  $region19: #{_forward_device.1} parent=0 // pred_check_branch
    %36 = sbr.rel (0) target = $region21
  $region20: #{_forward_device.1} parent=0 // pred_region
    _
  $region21: #{_forward_device.1} parent=0 // pred_fallthru
    _
  // Predicated region
  $region22: #{_forward_device.1} parent=0 // pred_check
    _
  $region23: #{_forward_device.1} parent=0 // pred_check_branch
    %38 = sbr.rel (0) target = $region25
  $region24: #{_forward_device.1} parent=0 // pred_region
    _
  $region25: #{_forward_device.1} parent=0 // pred_fallthru
    _
  // Predicated region
  $region26: #{_forward_device.1} parent=0 // pred_check
    _
  $region27: #{_forward_device.1} parent=0 // pred_check_branch
    %40 = sbr.rel (0) target = $region29
  $region28: #{_forward_device.1} parent=0 // pred_region
    _
  $region29: #{_forward_device.1} parent=0 // pred_fallthru
    _
  // Predicated region
  $region30: #{_forward_device.1} parent=0 // pred_check
    _
  $region31: #{_forward_device.1} parent=0 // pred_check_branch
    %42 = sbr.rel (0) target = $region33
  $region32: #{_forward_device.1} parent=0 // pred_region
    _
  $region33: #{_forward_device.1} parent=0 // pred_fallthru
    _
  // Predicated region
  $region34: #{_forward_device.1} parent=0 // pred_check
    _
  $region35: #{_forward_device.1} parent=0 // pred_check_branch
    %44 = sbr.rel (0) target = $region37
  $region36: #{_forward_device.1} parent=0 // pred_region
    _
  $region37: #{_forward_device.1} parent=0 // pred_fallthru
    _
  // Predicated region
  $region38: #{_forward_device.1} parent=0 // pred_check
    _
  $region39: #{_forward_device.1} parent=0 // pred_check_branch
    %46 = sbr.rel (0) target = $region41
  $region40: #{_forward_device.1} parent=0 // pred_region
    _
  $region41: #{_forward_device.1} parent=0 // pred_fallthru
    _
  // Predicated region
  $region42: #{_forward_device.1} parent=0 // pred_check
    _
  $region43: #{_forward_device.1} parent=0 // pred_check_branch
    %48 = sbr.rel (0) target = $region45
  $region44: #{_forward_device.1} parent=0 // pred_region
    _
  $region45: #{_forward_device.1} parent=0 // pred_fallthru
    _
  // Predicated region
  $region46: #{_forward_device.1} parent=0 // pred_check
    _
  $region47: #{_forward_device.1} parent=0 // pred_check_branch
    %50 = sbr.rel (0) target = $region49
  $region48: #{_forward_device.1} parent=0 // pred_region
    _
  $region49: #{_forward_device.1} parent=0 // pred_fallthru
    _
  // Predicated region
  $region50: #{_forward_device.1} parent=0 // pred_check
    _
  $region51: #{_forward_device.1} parent=0 // pred_check_branch
    %52 = sbr.rel (0) target = $region53
  $region52: #{_forward_device.1} parent=0 // pred_region
    _
  $region53: #{_forward_device.1} parent=0 // pred_fallthru
    _
  // Predicated region
  $region54: #{_forward_device.1} parent=0 // pred_check
    _
  $region55: #{_forward_device.1} parent=0 // pred_check_branch
    %54 = sbr.rel (0) target = $region57
  $region56: #{_forward_device.1} parent=0 // pred_region
    _
  $region57: #{_forward_device.1} parent=0 // pred_fallthru
    _
  // Predicated region
  $region58: #{_forward_device.1} parent=0 // pred_check
    _
  $region59: #{_forward_device.1} parent=0 // pred_check_branch
    %56 = sbr.rel (0) target = $region61
  $region60: #{_forward_device.1} parent=0 // pred_region
    _
  $region61: #{_forward_device.1} parent=0 // pred_fallthru
    _
  // Predicated region
  $region62: #{_forward_device.1} parent=0 // pred_check
    _
  $region63: #{_forward_device.1} parent=0 // pred_check_branch
    %58 = sbr.rel (0) target = $region65
  $region64: #{_forward_device.1} parent=0 // pred_region
    _
  $region65: #{_forward_device.1} parent=0 // pred_fallthru
    _
  // Predicated region
  $region66: #{_forward_device.1} parent=0 // pred_check
    _
  $region67: #{_forward_device.1} parent=0 // pred_check_branch
    %60 = sbr.rel (0) target = $region69
  $region68: #{_forward_device.1} parent=0 // pred_region
    _
  $region69: #{_forward_device.1} parent=0 // pred_fallthru
    _
  // Predicated region
  $region70: #{_forward_device.1} parent=0 // pred_check
    _
  $region71: #{_forward_device.1} parent=0 // pred_check_branch
    %62 = sbr.rel (0) target = $region73
  $region72: #{_forward_device.1} parent=0 // pred_region
    _
  $region73: #{_forward_device.1} parent=0 // pred_fallthru
    _
  // Predicated region
  $region74: #{_forward_device.1} parent=0 // pred_check
    _
  $region75: #{_forward_device.1} parent=0 // pred_check_branch
    %64 = sbr.rel (0) target = $region77
  $region76: #{_forward_device.1} parent=0 // pred_region
    _
  $region77: #{_forward_device.1} parent=0 // pred_fallthru
    _
  // Predicated region
  $region78: #{_forward_device.1} parent=0 // pred_check
    _
  $region79: #{_forward_device.1} parent=0 // pred_check_branch
    %66 = sbr.rel (0) target = $region81
  $region80: #{_forward_device.1} parent=0 // pred_region
    _
  $region81: #{_forward_device.1} parent=0 // pred_fallthru
    _
  %v68 = vld [vmem:[%s0] sm:$0xf]
  %v69 = vld [vmem:[%s0 + $0x4] sm:$0xf]
  %v70 = vld [vmem:[%s5] sm:$0xf]
  %v71 = vld [vmem:[%s5 + $0x4] sm:$0x1]
  %v72 = vld [vmem:[%s6] sm:$0xf]
  %v73 = vld [vmem:[%s6 + $0x4] sm:$0xf]
  %v74 = vld [vmem:[%s6 + $0x8] sm:$0xf]
  %v75 = vld [vmem:[%s6 + $0xc] sm:$0xf]
  %v76 = vld [vmem:[%s7] sm:$0x1]
  %v78 = vperm.slane %v76, 0
  %v82 = vunpack.c.l.b16 %v68
  %v83 = vunpack.c.l.b16 %v69
  %v84 = vpack.c.b16 %v83, %v82
  %v87 = vunpack.c.l.b16 %v70
  %v88 = vunpack.c.l.b16 %v71
  %v89 = vpack.c.b16 %v88, %v87
  %vm90 = vcmask 80896
  %v92 = vsel %vm90, %v84, 0
  %vm94 = vcmask 1044480
  %v96 = vsel %vm94, %v89, 0
  %98 = vmatpush.bf16.msra.mxu0 0
  %99 = vmatpush.bf16.msra.mxu0 0
  %100 = vmatpush.bf16.msra.mxu0 0
  %101 = vmatpush.bf16.msra.mxu0 0
  %102 = vmatpush.bf16.msra.mxu0 0
  %103 = vmatpush.bf16.msra.mxu0 0
  %104 = vmatpush.bf16.msra.mxu0 0
  %105 = vmatpush.bf16.msra.mxu0 %v96
  %106 = vmatmul.bf16.gmra.mxu0 %v92
  %v107 = vpop.f32.mrf.mxu0
  %v108 = vadd.f32 %v78, %v107
  %v109 = vpop.f32.mrf.mxu0
  %v110 = vadd.f32 %v78, %v109
  %111 = vdwg.mxu0
  %v116 = vunpack.c.l.b16 %v72
  %v117 = vunpack.c.l.b16 %v73
  %v118 = vunpack.c.l.b16 %v74
  %v119 = vunpack.c.l.b16 %v75
  %v120 = vpack.c.b16 %v117, %v116
  %v121 = vpack.c.b16 %v119, %v118
  %vm124 = vcmask 261120
  %v126 = vsel %vm124, 0, 0
  %128 = vmatpush.bf16.msra.mxu0 0
  %129 = vmatpush.bf16.msra.mxu0 0
  %130 = vmatpush.bf16.msra.mxu0 0
  %131 = vmatpush.bf16.msra.mxu0 0
  %132 = vmatpush.bf16.msra.mxu0 0
  %133 = vmatpush.bf16.msra.mxu0 0
  %134 = vmatpush.bf16.msra.mxu0 %v121
  %135 = vmatpush.bf16.msra.mxu0 %v120
  %136 = vmatmul.bf16.gmra.mxu0 %v126
  %v137 = vpop.f32.mrf.mxu0
  %v138 = vadd.f32 0.0, %v137
  %v139 = vpop.f32.mrf.mxu0
  %140 = vdwg.mxu0
  %v141 = vadd.f32 %v108, %v138
  %v142 = vxor.u32 %v141, 2147483648
  %v143 = vmul.f32 %v142, 1.442695
  %v144 = vpow.pop %v143
  %v145 = vadd.f32 %v144, 1.0
  %v146 = vrcp.pop %v145
  %v147 = vmul.f32 %v145, %v146
  %v148 = vsub.f32 1.0, %v147
  %v149 = vmul.f32 %v146, %v148
  %v150 = vadd.f32 %v146, %v149
  %vm151 = vweird.f32 %v145
  %vm152 = vweird.f32 %v146
  %vm153 = vmor %vm151, %vm152
  %v154 = vsel %vm153, %v146, %v150
  %v155 = vand.u32 2147483647, %v145
  %vm156 = vcmp.eq.f32.partialorder %v155, 8.507059e+37
  %v157 = vand.u32 %v145, 2147483648
  %v158 = vor.u32 1.1754944e-38, %v157
  %v159 = vsel %vm156, %v158, %v154
  %v160 = vmul.f32 1.0, %v159
  %v161 = vtanh.pop %v141
  %v162 = vmul.f32 %v160, 0.0
  %164 = vrot.lane.b32.xlu0 %v161, 64
  %v165 = vpop.permute.xlu0 %164
  %v167 = vmul.f32 %v160, %v165
  %169 = vrot.lane.b32.xlu0 %v167, 32
  %v170 = vpop.permute.xlu0 %169
  %v172 = vadd.f32 %v162, %v170
  %v173 = vtanh.pop %v172
  %175 = vrot.lane.b32.xlu0 %v173, 64
  %v176 = vpop.permute.xlu0 %175
  %v178 = vmul.f32 %v160, %v176
  %v179 = vpack.c.bf16 %v178, %v178
  %181 = vrot.lane.b32.xlu0 %v179, 32
  %v182 = vpop.permute.xlu0 %181
  %v184 = vsel %vm124, %v182, 0
  %186 = vmatpush.bf16.msra.mxu0 0
  %187 = vmatpush.bf16.msra.mxu0 0
  %188 = vmatpush.bf16.msra.mxu0 0
  %189 = vmatpush.bf16.msra.mxu0 0
  %190 = vmatpush.bf16.msra.mxu0 0
  %191 = vmatpush.bf16.msra.mxu0 0
  %192 = vmatpush.bf16.msra.mxu0 %v121
  %193 = vmatpush.bf16.msra.mxu0 %v120
  %194 = vmatmul.bf16.gmra.mxu0 %v184
  %v195 = vpop.f32.mrf.mxu0
  %v196 = vadd.f32 0.0, %v195
  %v197 = vpop.f32.mrf.mxu0
  %198 = vdwg.mxu0
  %v200 = vrot.slane %v196, 6
  %v202 = vadd.f32 %v108, %v200
  %v203 = vxor.u32 %v202, 2147483648
  %v204 = vmul.f32 %v203, 1.442695
  %v205 = vpow.pop %v204
  %v206 = vadd.f32 %v205, 1.0
  %v207 = vrcp.pop %v206
  %v208 = vmul.f32 %v206, %v207
  %v209 = vsub.f32 1.0, %v208
  %v210 = vmul.f32 %v207, %v209
  %v211 = vadd.f32 %v207, %v210
  %vm212 = vweird.f32 %v206
  %vm213 = vweird.f32 %v207
  %vm214 = vmor %vm212, %vm213
  %v215 = vsel %vm214, %v207, %v211
  %v216 = vand.u32 2147483647, %v206
  %vm217 = vcmp.eq.f32.partialorder %v216, 8.507059e+37
  %v218 = vand.u32 %v206, 2147483648
  %v219 = vor.u32 1.1754944e-38, %v218
  %v220 = vsel %vm217, %v219, %v215
  %v221 = vmul.f32 1.0, %v220
  %v222 = vtanh.pop %v202
  %v224 = vrot.slane %v172, 6
  %v226 = vmul.f32 %v221, %v224
  %228 = vrot.lane.b32.xlu0 %v222, 64
  %v229 = vpop.permute.xlu0 %228
  %v231 = vmul.f32 %v221, %v229
  %233 = vrot.lane.b32.xlu0 %v231, 32
  %v234 = vpop.permute.xlu0 %233
  %v236 = vadd.f32 %v226, %v234
  %v237 = vtanh.pop %v236
  %239 = vrot.lane.b32.xlu0 %v237, 64
  %v240 = vpop.permute.xlu0 %239
  %v242 = vmul.f32 %v221, %v240
  %v243 = vpack.c.bf16 %v242, %v242
  %v245 = vrot.slane %v243, 1
  %246 = vrot.lane.b32.xlu0 %v245, 32
  %v247 = vpop.permute.xlu0 %246
  %v249 = vsel %vm124, %v247, 0
  %251 = vmatpush.bf16.msra.mxu0 0
  %252 = vmatpush.bf16.msra.mxu0 0
  %253 = vmatpush.bf16.msra.mxu0 0
  %254 = vmatpush.bf16.msra.mxu0 0
  %255 = vmatpush.bf16.msra.mxu0 0
  %256 = vmatpush.bf16.msra.mxu0 0
  %257 = vmatpush.bf16.msra.mxu0 %v121
  %258 = vmatpush.bf16.msra.mxu0 %v120
  %259 = vmatmul.bf16.gmra.mxu0 %v249
  %v260 = vpop.f32.mrf.mxu0
  %v261 = vadd.f32 0.0, %v260
  %v262 = vpop.f32.mrf.mxu0
  %263 = vdwg.mxu0
  %v265 = vrot.slane %v261, 4
  %v267 = vadd.f32 %v108, %v265
  %v268 = vxor.u32 %v267, 2147483648
  %v269 = vmul.f32 %v268, 1.442695
  %v270 = vpow.pop %v269
  %v271 = vadd.f32 %v270, 1.0
  %v272 = vrcp.pop %v271
  %v273 = vmul.f32 %v271, %v272
  %v274 = vsub.f32 1.0, %v273
  %v275 = vmul.f32 %v272, %v274
  %v276 = vadd.f32 %v272, %v275
  %vm277 = vweird.f32 %v271
  %vm278 = vweird.f32 %v272
  %vm279 = vmor %vm277, %vm278
  %v280 = vsel %vm279, %v272, %v276
  %v281 = vand.u32 2147483647, %v271
  %vm282 = vcmp.eq.f32.partialorder %v281, 8.507059e+37
  %v283 = vand.u32 %v271, 2147483648
  %v284 = vor.u32 1.1754944e-38, %v283
  %v285 = vsel %vm282, %v284, %v280
  %v286 = vmul.f32 1.0, %v285
  %v287 = vtanh.pop %v267
  %v289 = vrot.slane %v236, 6
  %v291 = vmul.f32 %v286, %v289
  %293 = vrot.lane.b32.xlu0 %v287, 64
  %v294 = vpop.permute.xlu0 %293
  %v296 = vmul.f32 %v286, %v294
  %298 = vrot.lane.b32.xlu0 %v296, 32
  %v299 = vpop.permute.xlu0 %298
  %v301 = vadd.f32 %v291, %v299
  %v302 = vtanh.pop %v301
  %304 = vrot.lane.b32.xlu0 %v302, 64
  %v305 = vpop.permute.xlu0 %304
  %v307 = vmul.f32 %v286, %v305
  %v308 = vpack.c.bf16 %v307, %v307
  %v310 = vrot.slane %v308, 2
  %311 = vrot.lane.b32.xlu0 %v310, 32
  %v312 = vpop.permute.xlu0 %311
  %v314 = vsel %vm124, %v312, 0
  %316 = vmatpush.bf16.msra.mxu0 0
  %317 = vmatpush.bf16.msra.mxu0 0
  %318 = vmatpush.bf16.msra.mxu0 0
  %319 = vmatpush.bf16.msra.mxu0 0
  %320 = vmatpush.bf16.msra.mxu0 0
  %321 = vmatpush.bf16.msra.mxu0 0
  %322 = vmatpush.bf16.msra.mxu0 %v121
  %323 = vmatpush.bf16.msra.mxu0 %v120
  %324 = vmatmul.bf16.gmra.mxu0 %v314
  %v325 = vpop.f32.mrf.mxu0
  %v326 = vadd.f32 0.0, %v325
  %v327 = vpop.f32.mrf.mxu0
  %328 = vdwg.mxu0
  %v330 = vrot.slane %v326, 2
  %v332 = vadd.f32 %v108, %v330
  %v333 = vxor.u32 %v332, 2147483648
  %v334 = vmul.f32 %v333, 1.442695
  %v335 = vpow.pop %v334
  %v336 = vadd.f32 %v335, 1.0
  %v337 = vrcp.pop %v336
  %v338 = vmul.f32 %v336, %v337
  %v339 = vsub.f32 1.0, %v338
  %v340 = vmul.f32 %v337, %v339
  %v341 = vadd.f32 %v337, %v340
  %vm342 = vweird.f32 %v336
  %vm343 = vweird.f32 %v337
  %vm344 = vmor %vm342, %vm343
  %v345 = vsel %vm344, %v337, %v341
  %v346 = vand.u32 2147483647, %v336
  %vm347 = vcmp.eq.f32.partialorder %v346, 8.507059e+37
  %v348 = vand.u32 %v336, 2147483648
  %v349 = vor.u32 1.1754944e-38, %v348
  %v350 = vsel %vm347, %v349, %v345
  %v351 = vmul.f32 1.0, %v350
  %v352 = vtanh.pop %v332
  %v354 = vrot.slane %v301, 6
  %v356 = vmul.f32 %v351, %v354
  %358 = vrot.lane.b32.xlu0 %v352, 64
  %v359 = vpop.permute.xlu0 %358
  %v361 = vmul.f32 %v351, %v359
  %363 = vrot.lane.b32.xlu0 %v361, 32
  %v364 = vpop.permute.xlu0 %363
  %v366 = vadd.f32 %v356, %v364
  %v367 = vtanh.pop %v366
  %369 = vrot.lane.b32.xlu0 %v367, 64
  %v370 = vpop.permute.xlu0 %369
  %v372 = vmul.f32 %v351, %v370
  %v373 = vpack.c.bf16 %v372, %v372
  %v375 = vrot.slane %v373, 3
  %376 = vrot.lane.b32.xlu0 %v375, 32
  %v377 = vpop.permute.xlu0 %376
  %v379 = vsel %vm124, %v377, 0
  %381 = vmatpush.bf16.msra.mxu0 0
  %382 = vmatpush.bf16.msra.mxu0 0
  %383 = vmatpush.bf16.msra.mxu0 0
  %384 = vmatpush.bf16.msra.mxu0 0
  %385 = vmatpush.bf16.msra.mxu0 0
  %386 = vmatpush.bf16.msra.mxu0 0
  %387 = vmatpush.bf16.msra.mxu0 %v121
  %388 = vmatpush.bf16.msra.mxu0 %v120
  %389 = vmatmul.bf16.gmra.mxu0 %v379
  %v390 = vpop.f32.mrf.mxu0
  %v391 = vadd.f32 0.0, %v390
  %v392 = vpop.f32.mrf.mxu0
  %393 = vdwg.mxu0
  %v394 = vadd.f32 %v110, %v391
  %v395 = vxor.u32 %v394, 2147483648
  %v396 = vmul.f32 %v395, 1.442695
  %v397 = vpow.pop %v396
  %v398 = vadd.f32 %v397, 1.0
  %v399 = vrcp.pop %v398
  %v400 = vmul.f32 %v398, %v399
  %v401 = vsub.f32 1.0, %v400
  %v402 = vmul.f32 %v399, %v401
  %v403 = vadd.f32 %v399, %v402
  %vm404 = vweird.f32 %v398
  %vm405 = vweird.f32 %v399
  %vm406 = vmor %vm404, %vm405
  %v407 = vsel %vm406, %v399, %v403
  %v408 = vand.u32 2147483647, %v398
  %vm409 = vcmp.eq.f32.partialorder %v408, 8.507059e+37
  %v410 = vand.u32 %v398, 2147483648
  %v411 = vor.u32 1.1754944e-38, %v410
  %v412 = vsel %vm409, %v411, %v407
  %v413 = vmul.f32 1.0, %v412
  %v414 = vtanh.pop %v394
  %v416 = vrot.slane %v366, 6
  %v418 = vmul.f32 %v413, %v416
  %420 = vrot.lane.b32.xlu0 %v414, 64
  %v421 = vpop.permute.xlu0 %420
  %v423 = vmul.f32 %v413, %v421
  %425 = vrot.lane.b32.xlu0 %v423, 32
  %v426 = vpop.permute.xlu0 %425
  %v428 = vadd.f32 %v418, %v426
  %v429 = vtanh.pop %v428
  %431 = vrot.lane.b32.xlu0 %v429, 64
  %v432 = vpop.permute.xlu0 %431
  %v434 = vmul.f32 %v413, %v432
  %v435 = vpack.c.bf16 %v434, %v434
  %437 = vrot.lane.b32.xlu0 %v435, 32
  %v438 = vpop.permute.xlu0 %437
  %v440 = vsel %vm124, %v438, 0
  %442 = vmatpush.bf16.msra.mxu0 0
  %443 = vmatpush.bf16.msra.mxu0 0
  %444 = vmatpush.bf16.msra.mxu0 0
  %445 = vmatpush.bf16.msra.mxu0 0
  %446 = vmatpush.bf16.msra.mxu0 0
  %447 = vmatpush.bf16.msra.mxu0 0
  %448 = vmatpush.bf16.msra.mxu0 %v121
  %449 = vmatpush.bf16.msra.mxu0 %v120
  %450 = vmatmul.bf16.gmra.mxu0 %v440
  %v451 = vpop.f32.mrf.mxu0
  %v452 = vadd.f32 0.0, %v451
  %v453 = vpop.f32.mrf.mxu0
  %454 = vdwg.mxu0
  %v456 = vrot.slane %v452, 6
  %v458 = vadd.f32 %v110, %v456
  %v459 = vxor.u32 %v458, 2147483648
  %v460 = vmul.f32 %v459, 1.442695
  %v461 = vpow.pop %v460
  %v462 = vadd.f32 %v461, 1.0
  %v463 = vrcp.pop %v462
  %v464 = vmul.f32 %v462, %v463
  %v465 = vsub.f32 1.0, %v464
  %v466 = vmul.f32 %v463, %v465
  %v467 = vadd.f32 %v463, %v466
  %vm468 = vweird.f32 %v462
  %vm469 = vweird.f32 %v463
  %vm470 = vmor %vm468, %vm469
  %v471 = vsel %vm470, %v463, %v467
  %v472 = vand.u32 2147483647, %v462
  %vm473 = vcmp.eq.f32.partialorder %v472, 8.507059e+37
  %v474 = vand.u32 %v462, 2147483648
  %v475 = vor.u32 1.1754944e-38, %v474
  %v476 = vsel %vm473, %v475, %v471
  %v477 = vmul.f32 1.0, %v476
  %v478 = vtanh.pop %v458
  %v480 = vrot.slane %v428, 6
  %v482 = vmul.f32 %v477, %v480
  %484 = vrot.lane.b32.xlu0 %v478, 64
  %v485 = vpop.permute.xlu0 %484
  %v487 = vmul.f32 %v477, %v485
  %489 = vrot.lane.b32.xlu0 %v487, 32
  %v490 = vpop.permute.xlu0 %489
  %v492 = vadd.f32 %v482, %v490
  %v493 = vtanh.pop %v492
  %495 = vrot.lane.b32.xlu0 %v493, 64
  %v496 = vpop.permute.xlu0 %495
  %v498 = vmul.f32 %v477, %v496
  %v499 = vpack.c.bf16 %v498, %v498
  %v501 = vrot.slane %v499, 1
  %502 = vrot.lane.b32.xlu0 %v501, 32
  %v503 = vpop.permute.xlu0 %502
  %v505 = vsel %vm124, %v503, 0
  %507 = vmatpush.bf16.msra.mxu0 0
  %508 = vmatpush.bf16.msra.mxu0 0
  %509 = vmatpush.bf16.msra.mxu0 0
  %510 = vmatpush.bf16.msra.mxu0 0
  %511 = vmatpush.bf16.msra.mxu0 0
  %512 = vmatpush.bf16.msra.mxu0 0
  %513 = vmatpush.bf16.msra.mxu0 %v121
  %514 = vmatpush.bf16.msra.mxu0 %v120
  %515 = vmatmul.bf16.gmra.mxu0 %v505
  %v516 = vpop.f32.mrf.mxu0
  %v517 = vadd.f32 0.0, %v516
  %v518 = vpop.f32.mrf.mxu0
  %519 = vdwg.mxu0
  %v521 = vrot.slane %v517, 4
  %v523 = vadd.f32 %v110, %v521
  %v524 = vxor.u32 %v523, 2147483648
  %v525 = vmul.f32 %v524, 1.442695
  %v526 = vpow.pop %v525
  %v527 = vadd.f32 %v526, 1.0
  %v528 = vrcp.pop %v527
  %v529 = vmul.f32 %v527, %v528
  %v530 = vsub.f32 1.0, %v529
  %v531 = vmul.f32 %v528, %v530
  %v532 = vadd.f32 %v528, %v531
  %vm533 = vweird.f32 %v527
  %vm534 = vweird.f32 %v528
  %vm535 = vmor %vm533, %vm534
  %v536 = vsel %vm535, %v528, %v532
  %v537 = vand.u32 2147483647, %v527
  %vm538 = vcmp.eq.f32.partialorder %v537, 8.507059e+37
  %v539 = vand.u32 %v527, 2147483648
  %v540 = vor.u32 1.1754944e-38, %v539
  %v541 = vsel %vm538, %v540, %v536
  %v542 = vmul.f32 1.0, %v541
  %v543 = vtanh.pop %v523
  %v545 = vrot.slane %v492, 6
  %v547 = vmul.f32 %v542, %v545
  %549 = vrot.lane.b32.xlu0 %v543, 64
  %v550 = vpop.permute.xlu0 %549
  %v552 = vmul.f32 %v542, %v550
  %554 = vrot.lane.b32.xlu0 %v552, 32
  %v555 = vpop.permute.xlu0 %554
  %v557 = vadd.f32 %v547, %v555
  %v558 = vtanh.pop %v557
  %560 = vrot.lane.b32.xlu0 %v558, 64
  %v561 = vpop.permute.xlu0 %560
  %v563 = vmul.f32 %v542, %v561
  %v564 = vpack.c.bf16 %v563, %v563
  %v566 = vrot.slane %v564, 2
  %567 = vrot.lane.b32.xlu0 %v566, 32
  %v568 = vpop.permute.xlu0 %567
  %v570 = vsel %vm124, %v568, 0
  %572 = vmatpush.bf16.msra.mxu0 0
  %573 = vmatpush.bf16.msra.mxu0 0
  %574 = vmatpush.bf16.msra.mxu0 0
  %575 = vmatpush.bf16.msra.mxu0 0
  %576 = vmatpush.bf16.msra.mxu0 0
  %577 = vmatpush.bf16.msra.mxu0 0
  %578 = vmatpush.bf16.msra.mxu0 %v121
  %579 = vmatpush.bf16.msra.mxu0 %v120
  %580 = vmatmul.bf16.gmra.mxu0 %v570
  %v581 = vpop.f32.mrf.mxu0
  %v582 = vadd.f32 0.0, %v581
  %v583 = vpop.f32.mrf.mxu0
  %584 = vdwg.mxu0
  %v586 = vrot.slane %v582, 2
  %v588 = vadd.f32 %v110, %v586
  %v589 = vxor.u32 %v588, 2147483648
  %v590 = vmul.f32 %v589, 1.442695
  %v591 = vpow.pop %v590
  %v592 = vadd.f32 %v591, 1.0
  %v593 = vrcp.pop %v592
  %v594 = vmul.f32 %v592, %v593
  %v595 = vsub.f32 1.0, %v594
  %v596 = vmul.f32 %v593, %v595
  %v597 = vadd.f32 %v593, %v596
  %vm598 = vweird.f32 %v592
  %vm599 = vweird.f32 %v593
  %vm600 = vmor %vm598, %vm599
  %v601 = vsel %vm600, %v593, %v597
  %v602 = vand.u32 2147483647, %v592
  %vm603 = vcmp.eq.f32.partialorder %v602, 8.507059e+37
  %v604 = vand.u32 %v592, 2147483648
  %v605 = vor.u32 1.1754944e-38, %v604
  %v606 = vsel %vm603, %v605, %v601
  %v607 = vmul.f32 1.0, %v606
  %v608 = vtanh.pop %v588
  %v610 = vrot.slane %v557, 6
  %v612 = vmul.f32 %v607, %v610
  %614 = vrot.lane.b32.xlu0 %v608, 64
  %v615 = vpop.permute.xlu0 %614
  %v617 = vmul.f32 %v607, %v615
  %619 = vrot.lane.b32.xlu0 %v617, 32
  %v620 = vpop.permute.xlu0 %619
  %v622 = vadd.f32 %v612, %v620
  %v623 = vtanh.pop %v622
  %625 = vrot.lane.b32.xlu0 %v623, 64
  %v626 = vpop.permute.xlu0 %625
  %v628 = vmul.f32 %v607, %v626
  %v629 = vld [vmem:[%s1] sm:$0xf]
  %v630 = vld [vmem:[%s1 + $0x4] sm:$0xf]
  %v631 = vld [vmem:[%s1 + $0x8] sm:$0xf]
  %v632 = vld [vmem:[%s8] sm:$0xf]
  %v633 = vld [vmem:[%s8 + $0x4] sm:$0xf]
  %v634 = vld [vmem:[%s8 + $0x8] sm:$0xf]
  %v635 = vld [vmem:[%s8 + $0xc] sm:$0xf]
  %v636 = vld [vmem:[%s9] sm:$0xf]
  %v637 = vld [vmem:[%s9 + $0x4] sm:$0xf]
  %v638 = vld [vmem:[%s9 + $0x8] sm:$0xf]
  %v639 = vld [vmem:[%s9 + $0xc] sm:$0xf]
  %v640 = vld [vmem:[%s9 + $0x10] sm:$0xf]
  %v641 = vld [vmem:[%s9 + $0x14] sm:$0xf]
  %v642 = vld [vmem:[%s9 + $0x18] sm:$0xf]
  %v643 = vld [vmem:[%s9 + $0x1c] sm:$0xf]
  %v644 = vld [vmem:[%s10] sm:$0x1]
  %v645 = vld [vmem:[%s10 + $0x1] sm:$0x1]
  %v646 = vld [vmem:[%s3] sm:$0x3]
  %v648 = vperm.slane %v644, 0
  %v653 = vunpack.c.l.b16 %v629
  %v654 = vunpack.c.l.b16 %v630
  %v655 = vunpack.c.l.b16 %v631
  %v656 = vpack.c.b16 %v654, %v653
  %v657 = vpack.c.b16 %v655, %v655
  %v660 = vunpack.c.l.b16 %v632
  %v661 = vunpack.c.l.b16 %v633
  %v662 = vpack.c.b16 %v661, %v660
  %vm664 = vcmask 130048
  %v666 = vsel %vm664, %v656, 0
  %v669 = vsel %vm664, %v657, 0
  %671 = vmatpush.bf16.msra.mxu0 0
  %672 = vmatpush.bf16.msra.mxu0 0
  %673 = vmatpush.bf16.msra.mxu0 0
  %674 = vmatpush.bf16.msra.mxu0 0
  %675 = vmatpush.bf16.msra.mxu0 0
  %676 = vmatpush.bf16.msra.mxu0 0
  %677 = vmatpush.bf16.msra.mxu0 0
  %678 = vmatpush.bf16.msra.mxu0 %v662
  %679 = vmatmul.bf16.gmra.mxu0 %v666
  %v680 = vpop.f32.mrf.mxu0
  %v681 = vadd.f32 %v648, %v680
  %v682 = vpop.f32.mrf.mxu0
  %v683 = vadd.f32 %v648, %v682
  %684 = vmatmul.bf16.gmra.mxu0 %v669
  %v685 = vpop.f32.mrf.mxu0
  %v686 = vadd.f32 %v648, %v685
  %v687 = vpop.f32.mrf.mxu0
  %688 = vdwg.mxu0
  %v690 = vperm.slane %v645, 0
  %v694 = vunpack.c.l.b16 %v634
  %v695 = vunpack.c.l.b16 %v635
  %v696 = vpack.c.b16 %v695, %v694
  %698 = vmatpush.bf16.msra.mxu0 0
  %699 = vmatpush.bf16.msra.mxu0 0
  %700 = vmatpush.bf16.msra.mxu0 0
  %701 = vmatpush.bf16.msra.mxu0 0
  %702 = vmatpush.bf16.msra.mxu0 0
  %703 = vmatpush.bf16.msra.mxu0 0
  %704 = vmatpush.bf16.msra.mxu0 0
  %705 = vmatpush.bf16.msra.mxu0 %v696
  %706 = vmatmul.bf16.gmra.mxu0 %v666
  %v707 = vpop.f32.mrf.mxu0
  %v708 = vadd.f32 %v690, %v707
  %v709 = vpop.f32.mrf.mxu0
  %v710 = vadd.f32 %v690, %v709
  %711 = vmatmul.bf16.gmra.mxu0 %v669
  %v712 = vpop.f32.mrf.mxu0
  %v713 = vadd.f32 %v690, %v712
  %v714 = vpop.f32.mrf.mxu0
  %715 = vdwg.mxu0
  %v720 = vunpack.c.l.b16 %v636
  %v721 = vunpack.c.l.b16 %v637
  %v722 = vunpack.c.l.b16 %v638
  %v723 = vunpack.c.l.b16 %v639
  %v724 = vpack.c.b16 %v721, %v720
  %v725 = vpack.c.b16 %v723, %v722
  %728 = vmatpush.bf16.msra.mxu0 0
  %729 = vmatpush.bf16.msra.mxu0 0
  %730 = vmatpush.bf16.msra.mxu0 0
  %731 = vmatpush.bf16.msra.mxu0 0
  %732 = vmatpush.bf16.msra.mxu0 0
  %733 = vmatpush.bf16.msra.mxu0 0
  %734 = vmatpush.bf16.msra.mxu0 %v725
  %735 = vmatpush.bf16.msra.mxu0 %v724
  %736 = vmatmul.bf16.gmra.mxu0 %v126
  %v737 = vpop.f32.mrf.mxu0
  %v738 = vadd.f32 0.0, %v737
  %v739 = vpop.f32.mrf.mxu0
  %740 = vdwg.mxu0
  %v741 = vadd.f32 %v681, %v738
  %v746 = vunpack.c.l.b16 %v640
  %v747 = vunpack.c.l.b16 %v641
  %v748 = vunpack.c.l.b16 %v642
  %v749 = vunpack.c.l.b16 %v643
  %v750 = vpack.c.b16 %v747, %v746
  %v751 = vpack.c.b16 %v749, %v748
  %754 = vmatpush.bf16.msra.mxu0 0
  %755 = vmatpush.bf16.msra.mxu0 0
  %756 = vmatpush.bf16.msra.mxu0 0
  %757 = vmatpush.bf16.msra.mxu0 0
  %758 = vmatpush.bf16.msra.mxu0 0
  %759 = vmatpush.bf16.msra.mxu0 0
  %760 = vmatpush.bf16.msra.mxu0 %v751
  %761 = vmatpush.bf16.msra.mxu0 %v750
  %762 = vmatmul.bf16.gmra.mxu0 %v126
  %v763 = vpop.f32.mrf.mxu0
  %v764 = vadd.f32 0.0, %v763
  %v765 = vpop.f32.mrf.mxu0
  %766 = vdwg.mxu0
  %v768 = vrot.slane %v764, 2
  %v770 = vadd.f32 %v713, %v768
  %v771 = vxor.u32 %v741, 2147483648
  %v772 = vmul.f32 %v771, 1.442695
  %v773 = vpow.pop %v772
  %v774 = vadd.f32 %v773, 1.0
  %v775 = vrcp.pop %v774
  %v776 = vmul.f32 %v774, %v775
  %v777 = vsub.f32 1.0, %v776
  %v778 = vmul.f32 %v775, %v777
  %v779 = vadd.f32 %v775, %v778
  %vm780 = vweird.f32 %v774
  %vm781 = vweird.f32 %v775
  %vm782 = vmor %vm780, %vm781
  %v783 = vsel %vm782, %v775, %v779
  %v784 = vand.u32 2147483647, %v774
  %vm785 = vcmp.eq.f32.partialorder %v784, 8.507059e+37
  %v786 = vand.u32 %v774, 2147483648
  %v787 = vor.u32 1.1754944e-38, %v786
  %v788 = vsel %vm785, %v787, %v783
  %v789 = vmul.f32 1.0, %v788
  %v790 = vtanh.pop %v741
  %v791 = vmul.f32 %v789, 0.0
  %793 = vrot.lane.b32.xlu0 %v790, 64
  %v794 = vpop.permute.xlu0 %793
  %v796 = vmul.f32 %v789, %v794
  %798 = vrot.lane.b32.xlu0 %v796, 32
  %v799 = vpop.permute.xlu0 %798
  %v801 = vadd.f32 %v791, %v799
  %v802 = vtanh.pop %v801
  %804 = vrot.lane.b32.xlu0 %v802, 64
  %v805 = vpop.permute.xlu0 %804
  %v807 = vmul.f32 %v789, %v805
  %v808 = vxor.u32 %v770, 2147483648
  %v809 = vmul.f32 %v808, 1.442695
  %v810 = vpow.pop %v809
  %v811 = vadd.f32 %v810, 1.0
  %v812 = vrcp.pop %v811
  %v813 = vmul.f32 %v811, %v812
  %v814 = vsub.f32 1.0, %v813
  %v815 = vmul.f32 %v812, %v814
  %v816 = vadd.f32 %v812, %v815
  %vm817 = vweird.f32 %v811
  %vm818 = vweird.f32 %v812
  %vm819 = vmor %vm817, %vm818
  %v820 = vsel %vm819, %v812, %v816
  %v821 = vand.u32 2147483647, %v811
  %vm822 = vcmp.eq.f32.partialorder %v821, 8.507059e+37
  %v823 = vand.u32 %v811, 2147483648
  %v824 = vor.u32 1.1754944e-38, %v823
  %v825 = vsel %vm822, %v824, %v820
  %v826 = vmul.f32 1.0, %v825
  %v827 = vtanh.pop %v770
  %v828 = vmul.f32 %v826, 0.0
  %830 = vrot.lane.b32.xlu0 %v827, 64
  %v831 = vpop.permute.xlu0 %830
  %v833 = vmul.f32 %v826, %v831
  %835 = vrot.lane.b32.xlu0 %v833, 32
  %v836 = vpop.permute.xlu0 %835
  %v838 = vadd.f32 %v828, %v836
  %v839 = vtanh.pop %v838
  %841 = vrot.lane.b32.xlu0 %v839, 64
  %v842 = vpop.permute.xlu0 %841
  %v844 = vmul.f32 %v826, %v842
  %vm845 = vcmp.gt.s32.totalorder %v646, 0
  %vm846 = vcmp.gt.s32.totalorder %v646, 11
  %v847 = vsel %vm845, 1, 0
  %848 = vset.pattern.permute.xlu0 0
  %849 = vperm.xlu0 %848, %v847
  %v850 = vpop.permute.xlu0 %849
  %vm851 = vcmp.eq.s32.totalorder %v850, 1
  %v852 = vsel %vm851, %v807, 0.0
  %v853 = vsel %vm851, %v801, 0.0
  %v854 = vsel %vm846, 1, 0
  %855 = vset.pattern.permute.xlu0 0
  %856 = vperm.xlu0 %855, %v854
  %v857 = vpop.permute.xlu0 %856
  %vm858 = vcmp.eq.s32.totalorder %v857, 1
  %v860 = vrot.slane %v844, 6
  %861 = vrot.lane.b32.xlu0 %v860, 32
  %v862 = vpop.permute.xlu0 %861
  %v864 = vsel %vm858, %v862, 0.0
  %v866 = vrot.slane %v838, 6
  %867 = vrot.lane.b32.xlu0 %v866, 96
  %v868 = vpop.permute.xlu0 %867
  %v870 = vsel %vm858, %v868, 0.0
  %v871 = vadd.f32 %v852, 0.0
  %v872 = vadd.f32 %v864, 0.0
  %v873 = vsel %vm851, %v807, -inf
  %v874 = vsel %vm858, %v862, -inf
  %v875 = vpack.c.bf16 %v852, %v852
  %877 = vrot.lane.b32.xlu0 %v875, 32
  %v878 = vpop.permute.xlu0 %877
  %v880 = vsel %vm124, %v878, 0
  %882 = vmatpush.bf16.msra.mxu0 0
  %883 = vmatpush.bf16.msra.mxu0 0
  %884 = vmatpush.bf16.msra.mxu0 0
  %885 = vmatpush.bf16.msra.mxu0 0
  %886 = vmatpush.bf16.msra.mxu0 0
  %887 = vmatpush.bf16.msra.mxu0 0
  %888 = vmatpush.bf16.msra.mxu0 %v725
  %889 = vmatpush.bf16.msra.mxu0 %v724
  %890 = vmatmul.bf16.gmra.mxu0 %v880
  %v891 = vpop.f32.mrf.mxu0
  %v892 = vadd.f32 0.0, %v891
  %v893 = vpop.f32.mrf.mxu0
  %894 = vdwg.mxu0
  %v896 = vrot.slane %v892, 6
  %v898 = vadd.f32 %v681, %v896
  %v899 = vpack.c.bf16 %v864, %v864
  %v901 = vsel %vm124, %v899, 0
  %903 = vmatpush.bf16.msra.mxu0 0
  %904 = vmatpush.bf16.msra.mxu0 0
  %905 = vmatpush.bf16.msra.mxu0 0
  %906 = vmatpush.bf16.msra.mxu0 0
  %907 = vmatpush.bf16.msra.mxu0 0
  %908 = vmatpush.bf16.msra.mxu0 0
  %909 = vmatpush.bf16.msra.mxu0 %v751
  %910 = vmatpush.bf16.msra.mxu0 %v750
  %911 = vmatmul.bf16.gmra.mxu0 %v901
  %v912 = vpop.f32.mrf.mxu0
  %v913 = vadd.f32 0.0, %v912
  %v914 = vpop.f32.mrf.mxu0
  %915 = vdwg.mxu0
  %v917 = vrot.slane %v913, 4
  %v919 = vadd.f32 %v713, %v917
  %v920 = vxor.u32 %v898, 2147483648
  %v921 = vmul.f32 %v920, 1.442695
  %v922 = vpow.pop %v921
  %v923 = vadd.f32 %v922, 1.0
  %v924 = vrcp.pop %v923
  %v925 = vmul.f32 %v923, %v924
  %v926 = vsub.f32 1.0, %v925
  %v927 = vmul.f32 %v924, %v926
  %v928 = vadd.f32 %v924, %v927
  %vm929 = vweird.f32 %v923
  %vm930 = vweird.f32 %v924
  %vm931 = vmor %vm929, %vm930
  %v932 = vsel %vm931, %v924, %v928
  %v933 = vand.u32 2147483647, %v923
  %vm934 = vcmp.eq.f32.partialorder %v933, 8.507059e+37
  %v935 = vand.u32 %v923, 2147483648
  %v936 = vor.u32 1.1754944e-38, %v935
  %v937 = vsel %vm934, %v936, %v932
  %v938 = vmul.f32 1.0, %v937
  %v939 = vtanh.pop %v898
  %v941 = vrot.slane %v853, 6
  %v943 = vmul.f32 %v938, %v941
  %945 = vrot.lane.b32.xlu0 %v939, 64
  %v946 = vpop.permute.xlu0 %945
  %v948 = vmul.f32 %v938, %v946
  %950 = vrot.lane.b32.xlu0 %v948, 32
  %v951 = vpop.permute.xlu0 %950
  %v953 = vadd.f32 %v943, %v951
  %v954 = vtanh.pop %v953
  %956 = vrot.lane.b32.xlu0 %v954, 64
  %v957 = vpop.permute.xlu0 %956
  %v959 = vmul.f32 %v938, %v957
  %v960 = vxor.u32 %v919, 2147483648
  %v961 = vmul.f32 %v960, 1.442695
  %v962 = vpow.pop %v961
  %v963 = vadd.f32 %v962, 1.0
  %v964 = vrcp.pop %v963
  %v965 = vmul.f32 %v963, %v964
  %v966 = vsub.f32 1.0, %v965
  %v967 = vmul.f32 %v964, %v966
  %v968 = vadd.f32 %v964, %v967
  %vm969 = vweird.f32 %v963
  %vm970 = vweird.f32 %v964
  %vm971 = vmor %vm969, %vm970
  %v972 = vsel %vm971, %v964, %v968
  %v973 = vand.u32 2147483647, %v963
  %vm974 = vcmp.eq.f32.partialorder %v973, 8.507059e+37
  %v975 = vand.u32 %v963, 2147483648
  %v976 = vor.u32 1.1754944e-38, %v975
  %v977 = vsel %vm974, %v976, %v972
  %v978 = vmul.f32 1.0, %v977
  %v979 = vtanh.pop %v919
  %v981 = vrot.slane %v870, 4
  %982 = vrot.lane.b32.xlu0 %v981, 32
  %v983 = vpop.permute.xlu0 %982
  %v985 = vmul.f32 %v978, %v983
  %987 = vrot.lane.b32.xlu0 %v979, 64
  %v988 = vpop.permute.xlu0 %987
  %v990 = vmul.f32 %v978, %v988
  %992 = vrot.lane.b32.xlu0 %v990, 32
  %v993 = vpop.permute.xlu0 %992
  %v995 = vadd.f32 %v985, %v993
  %v996 = vtanh.pop %v995
  %998 = vrot.lane.b32.xlu0 %v996, 64
  %v999 = vpop.permute.xlu0 %998
  %v1001 = vmul.f32 %v978, %v999
  %vm1002 = vcmp.gt.s32.totalorder %v646, 1
  %vm1003 = vcmp.gt.s32.totalorder %v646, 10
  %v1004 = vsel %vm1002, 1, 0
  %1005 = vset.pattern.permute.xlu0 0
  %1006 = vperm.xlu0 %1005, %v1004
  %v1007 = vpop.permute.xlu0 %1006
  %vm1008 = vcmp.eq.s32.totalorder %v1007, 1
  %v1010 = vrot.slane %v959, 2
  %1011 = vrot.lane.b32.xlu0 %v1010, 32
  %v1012 = vpop.permute.xlu0 %1011
  %1015 = vrot.lane.b32.xlu0 %v852, 32
  %v1016 = vpop.permute.xlu0 %1015
  %v1018 = vsel %vm1008, %v1012, %v1016
  %v1020 = vrot.slane %v953, 2
  %1021 = vrot.lane.b32.xlu0 %v1020, 96
  %v1022 = vpop.permute.xlu0 %1021
  %1024 = vrot.lane.b32.xlu0 %v853, 96
  %v1025 = vpop.permute.xlu0 %1024
  %v1027 = vsel %vm1008, %v1022, %v1025
  %v1028 = vsel %vm1003, 1, 0
  %1029 = vset.pattern.permute.xlu0 0
  %1030 = vperm.xlu0 %1029, %v1028
  %v1031 = vpop.permute.xlu0 %1030
  %vm1032 = vcmp.eq.s32.totalorder %v1031, 1
  %v1034 = vrot.slane %v1001, 4
  %1035 = vrot.lane.b32.xlu0 %v1034, 32
  %v1036 = vpop.permute.xlu0 %1035
  %v1038 = vsel %vm1032, %v1036, %v864
  %v1040 = vrot.slane %v995, 4
  %1041 = vrot.lane.b32.xlu0 %v1040, 96
  %v1042 = vpop.permute.xlu0 %1041
  %v1044 = vsel %vm1032, %v1042, %v870
  %v1045 = vsel %vm1008, %v1012, 0.0
  %1047 = vrot.lane.b32.xlu0 %v1045, 96
  %v1048 = vpop.permute.xlu0 %1047
  %v1050 = vadd.f32 %v871, %v1048
  %v1051 = vsel %vm1032, %v1036, 0.0
  %v1052 = vadd.f32 %v872, %v1051
  %v1053 = vsel %vm1008, %v1012, -inf
  %1055 = vrot.lane.b32.xlu0 %v1053, 96
  %v1056 = vpop.permute.xlu0 %1055
  %v1058 = vmax.f32 %v873, %v1056
  %v1059 = vsel %vm1032, %v1036, -inf
  %v1060 = vmax.f32 %v874, %v1059
  %v1061 = vpack.c.bf16 %v1018, %v1018
  %v1063 = vsel %vm124, %v1061, 0
  %1065 = vmatpush.bf16.msra.mxu0 0
  %1066 = vmatpush.bf16.msra.mxu0 0
  %1067 = vmatpush.bf16.msra.mxu0 0
  %1068 = vmatpush.bf16.msra.mxu0 0
  %1069 = vmatpush.bf16.msra.mxu0 0
  %1070 = vmatpush.bf16.msra.mxu0 0
  %1071 = vmatpush.bf16.msra.mxu0 %v725
  %1072 = vmatpush.bf16.msra.mxu0 %v724
  %1073 = vmatmul.bf16.gmra.mxu0 %v1063
  %v1074 = vpop.f32.mrf.mxu0
  %v1075 = vadd.f32 0.0, %v1074
  %v1076 = vpop.f32.mrf.mxu0
  %1077 = vdwg.mxu0
  %v1079 = vrot.slane %v1075, 4
  %v1081 = vadd.f32 %v681, %v1079
  %v1082 = vpack.c.bf16 %v1038, %v1038
  %v1084 = vsel %vm124, %v1082, 0
  %1086 = vmatpush.bf16.msra.mxu0 0
  %1087 = vmatpush.bf16.msra.mxu0 0
  %1088 = vmatpush.bf16.msra.mxu0 0
  %1089 = vmatpush.bf16.msra.mxu0 0
  %1090 = vmatpush.bf16.msra.mxu0 0
  %1091 = vmatpush.bf16.msra.mxu0 0
  %1092 = vmatpush.bf16.msra.mxu0 %v751
  %1093 = vmatpush.bf16.msra.mxu0 %v750
  %1094 = vmatmul.bf16.gmra.mxu0 %v1084
  %v1095 = vpop.f32.mrf.mxu0
  %v1096 = vadd.f32 0.0, %v1095
  %v1097 = vpop.f32.mrf.mxu0
  %1098 = vdwg.mxu0
  %v1100 = vrot.slane %v1096, 6
  %v1102 = vadd.f32 %v713, %v1100
  %v1103 = vxor.u32 %v1081, 2147483648
  %v1104 = vmul.f32 %v1103, 1.442695
  %v1105 = vpow.pop %v1104
  %v1106 = vadd.f32 %v1105, 1.0
  %v1107 = vrcp.pop %v1106
  %v1108 = vmul.f32 %v1106, %v1107
  %v1109 = vsub.f32 1.0, %v1108
  %v1110 = vmul.f32 %v1107, %v1109
  %v1111 = vadd.f32 %v1107, %v1110
  %vm1112 = vweird.f32 %v1106
  %vm1113 = vweird.f32 %v1107
  %vm1114 = vmor %vm1112, %vm1113
  %v1115 = vsel %vm1114, %v1107, %v1111
  %v1116 = vand.u32 2147483647, %v1106
  %vm1117 = vcmp.eq.f32.partialorder %v1116, 8.507059e+37
  %v1118 = vand.u32 %v1106, 2147483648
  %v1119 = vor.u32 1.1754944e-38, %v1118
  %v1120 = vsel %vm1117, %v1119, %v1115
  %v1121 = vmul.f32 1.0, %v1120
  %v1122 = vtanh.pop %v1081
  %v1124 = vrot.slane %v1027, 4
  %1125 = vrot.lane.b32.xlu0 %v1124, 32
  %v1126 = vpop.permute.xlu0 %1125
  %v1128 = vmul.f32 %v1121, %v1126
  %1130 = vrot.lane.b32.xlu0 %v1122, 64
  %v1131 = vpop.permute.xlu0 %1130
  %v1133 = vmul.f32 %v1121, %v1131
  %1135 = vrot.lane.b32.xlu0 %v1133, 32
  %v1136 = vpop.permute.xlu0 %1135
  %v1138 = vadd.f32 %v1128, %v1136
  %v1139 = vtanh.pop %v1138
  %1141 = vrot.lane.b32.xlu0 %v1139, 64
  %v1142 = vpop.permute.xlu0 %1141
  %v1144 = vmul.f32 %v1121, %v1142
  %v1145 = vxor.u32 %v1102, 2147483648
  %v1146 = vmul.f32 %v1145, 1.442695
  %v1147 = vpow.pop %v1146
  %v1148 = vadd.f32 %v1147, 1.0
  %v1149 = vrcp.pop %v1148
  %v1150 = vmul.f32 %v1148, %v1149
  %v1151 = vsub.f32 1.0, %v1150
  %v1152 = vmul.f32 %v1149, %v1151
  %v1153 = vadd.f32 %v1149, %v1152
  %vm1154 = vweird.f32 %v1148
  %vm1155 = vweird.f32 %v1149
  %vm1156 = vmor %vm1154, %vm1155
  %v1157 = vsel %vm1156, %v1149, %v1153
  %v1158 = vand.u32 2147483647, %v1148
  %vm1159 = vcmp.eq.f32.partialorder %v1158, 8.507059e+37
  %v1160 = vand.u32 %v1148, 2147483648
  %v1161 = vor.u32 1.1754944e-38, %v1160
  %v1162 = vsel %vm1159, %v1161, %v1157
  %v1163 = vmul.f32 1.0, %v1162
  %v1164 = vtanh.pop %v1102
  %v1166 = vrot.slane %v1044, 6
  %1167 = vrot.lane.b32.xlu0 %v1166, 32
  %v1168 = vpop.permute.xlu0 %1167
  %v1170 = vmul.f32 %v1163, %v1168
  %1172 = vrot.lane.b32.xlu0 %v1164, 64
  %v1173 = vpop.permute.xlu0 %1172
  %v1175 = vmul.f32 %v1163, %v1173
  %1177 = vrot.lane.b32.xlu0 %v1175, 32
  %v1178 = vpop.permute.xlu0 %1177
  %v1180 = vadd.f32 %v1170, %v1178
  %v1181 = vtanh.pop %v1180
  %1183 = vrot.lane.b32.xlu0 %v1181, 64
  %v1184 = vpop.permute.xlu0 %1183
  %v1186 = vmul.f32 %v1163, %v1184
  %vm1187 = vcmp.gt.s32.totalorder %v646, 2
  %vm1188 = vcmp.gt.s32.totalorder %v646, 9
  %v1189 = vsel %vm1187, 1, 0
  %1190 = vset.pattern.permute.xlu0 0
  %1191 = vperm.xlu0 %1190, %v1189
  %v1192 = vpop.permute.xlu0 %1191
  %vm1193 = vcmp.eq.s32.totalorder %v1192, 1
  %v1195 = vrot.slane %v1144, 4
  %1196 = vrot.lane.b32.xlu0 %v1195, 32
  %v1197 = vpop.permute.xlu0 %1196
  %v1199 = vsel %vm1193, %v1197, %v1018
  %v1201 = vrot.slane %v1138, 4
  %1202 = vrot.lane.b32.xlu0 %v1201, 96
  %v1203 = vpop.permute.xlu0 %1202
  %v1205 = vsel %vm1193, %v1203, %v1027
  %v1206 = vsel %vm1188, 1, 0
  %1207 = vset.pattern.permute.xlu0 0
  %1208 = vperm.xlu0 %1207, %v1206
  %v1209 = vpop.permute.xlu0 %1208
  %vm1210 = vcmp.eq.s32.totalorder %v1209, 1
  %v1212 = vrot.slane %v1186, 2
  %1213 = vrot.lane.b32.xlu0 %v1212, 32
  %v1214 = vpop.permute.xlu0 %1213
  %v1216 = vsel %vm1210, %v1214, %v1038
  %v1218 = vrot.slane %v1180, 2
  %1219 = vrot.lane.b32.xlu0 %v1218, 96
  %v1220 = vpop.permute.xlu0 %1219
  %v1222 = vsel %vm1210, %v1220, %v1044
  %v1223 = vsel %vm1193, %v1197, 0.0
  %1225 = vrot.lane.b32.xlu0 %v1223, 96
  %v1226 = vpop.permute.xlu0 %1225
  %v1228 = vadd.f32 %v1050, %v1226
  %v1229 = vsel %vm1210, %v1214, 0.0
  %v1230 = vadd.f32 %v1052, %v1229
  %v1231 = vsel %vm1193, %v1197, -inf
  %1233 = vrot.lane.b32.xlu0 %v1231, 96
  %v1234 = vpop.permute.xlu0 %1233
  %v1236 = vmax.f32 %v1058, %v1234
  %v1237 = vsel %vm1210, %v1214, -inf
  %v1238 = vmax.f32 %v1060, %v1237
  %v1239 = vpack.c.bf16 %v1199, %v1199
  %v1241 = vsel %vm124, %v1239, 0
  %1243 = vmatpush.bf16.msra.mxu0 0
  %1244 = vmatpush.bf16.msra.mxu0 0
  %1245 = vmatpush.bf16.msra.mxu0 0
  %1246 = vmatpush.bf16.msra.mxu0 0
  %1247 = vmatpush.bf16.msra.mxu0 0
  %1248 = vmatpush.bf16.msra.mxu0 0
  %1249 = vmatpush.bf16.msra.mxu0 %v725
  %1250 = vmatpush.bf16.msra.mxu0 %v724
  %1251 = vmatmul.bf16.gmra.mxu0 %v1241
  %v1252 = vpop.f32.mrf.mxu0
  %v1253 = vadd.f32 0.0, %v1252
  %v1254 = vpop.f32.mrf.mxu0
  %1255 = vdwg.mxu0
  %v1257 = vrot.slane %v1253, 2
  %v1259 = vadd.f32 %v681, %v1257
  %v1260 = vpack.c.bf16 %v1216, %v1216
  %v1262 = vsel %vm124, %v1260, 0
  %1264 = vmatpush.bf16.msra.mxu0 0
  %1265 = vmatpush.bf16.msra.mxu0 0
  %1266 = vmatpush.bf16.msra.mxu0 0
  %1267 = vmatpush.bf16.msra.mxu0 0
  %1268 = vmatpush.bf16.msra.mxu0 0
  %1269 = vmatpush.bf16.msra.mxu0 0
  %1270 = vmatpush.bf16.msra.mxu0 %v751
  %1271 = vmatpush.bf16.msra.mxu0 %v750
  %1272 = vmatmul.bf16.gmra.mxu0 %v1262
  %v1273 = vpop.f32.mrf.mxu0
  %v1274 = vadd.f32 0.0, %v1273
  %v1275 = vpop.f32.mrf.mxu0
  %1276 = vdwg.mxu0
  %v1277 = vadd.f32 %v713, %v1274
  %v1278 = vxor.u32 %v1259, 2147483648
  %v1279 = vmul.f32 %v1278, 1.442695
  %v1280 = vpow.pop %v1279
  %v1281 = vadd.f32 %v1280, 1.0
  %v1282 = vrcp.pop %v1281
  %v1283 = vmul.f32 %v1281, %v1282
  %v1284 = vsub.f32 1.0, %v1283
  %v1285 = vmul.f32 %v1282, %v1284
  %v1286 = vadd.f32 %v1282, %v1285
  %vm1287 = vweird.f32 %v1281
  %vm1288 = vweird.f32 %v1282
  %vm1289 = vmor %vm1287, %vm1288
  %v1290 = vsel %vm1289, %v1282, %v1286
  %v1291 = vand.u32 2147483647, %v1281
  %vm1292 = vcmp.eq.f32.partialorder %v1291, 8.507059e+37
  %v1293 = vand.u32 %v1281, 2147483648
  %v1294 = vor.u32 1.1754944e-38, %v1293
  %v1295 = vsel %vm1292, %v1294, %v1290
  %v1296 = vmul.f32 1.0, %v1295
  %v1297 = vtanh.pop %v1259
  %v1299 = vrot.slane %v1205, 2
  %1300 = vrot.lane.b32.xlu0 %v1299, 32
  %v1301 = vpop.permute.xlu0 %1300
  %v1303 = vmul.f32 %v1296, %v1301
  %1305 = vrot.lane.b32.xlu0 %v1297, 64
  %v1306 = vpop.permute.xlu0 %1305
  %v1308 = vmul.f32 %v1296, %v1306
  %1310 = vrot.lane.b32.xlu0 %v1308, 32
  %v1311 = vpop.permute.xlu0 %1310
  %v1313 = vadd.f32 %v1303, %v1311
  %v1314 = vtanh.pop %v1313
  %1316 = vrot.lane.b32.xlu0 %v1314, 64
  %v1317 = vpop.permute.xlu0 %1316
  %v1319 = vmul.f32 %v1296, %v1317
  %v1320 = vxor.u32 %v1277, 2147483648
  %v1321 = vmul.f32 %v1320, 1.442695
  %v1322 = vpow.pop %v1321
  %v1323 = vadd.f32 %v1322, 1.0
  %v1324 = vrcp.pop %v1323
  %v1325 = vmul.f32 %v1323, %v1324
  %v1326 = vsub.f32 1.0, %v1325
  %v1327 = vmul.f32 %v1324, %v1326
  %v1328 = vadd.f32 %v1324, %v1327
  %vm1329 = vweird.f32 %v1323
  %vm1330 = vweird.f32 %v1324
  %vm1331 = vmor %vm1329, %vm1330
  %v1332 = vsel %vm1331, %v1324, %v1328
  %v1333 = vand.u32 2147483647, %v1323
  %vm1334 = vcmp.eq.f32.partialorder %v1333, 8.507059e+37
  %v1335 = vand.u32 %v1323, 2147483648
  %v1336 = vor.u32 1.1754944e-38, %v1335
  %v1337 = vsel %vm1334, %v1336, %v1332
  %v1338 = vmul.f32 1.0, %v1337
  %v1339 = vtanh.pop %v1277
  %1341 = vrot.lane.b32.xlu0 %v1222, 32
  %v1342 = vpop.permute.xlu0 %1341
  %v1344 = vmul.f32 %v1338, %v1342
  %1346 = vrot.lane.b32.xlu0 %v1339, 64
  %v1347 = vpop.permute.xlu0 %1346
  %v1349 = vmul.f32 %v1338, %v1347
  %1351 = vrot.lane.b32.xlu0 %v1349, 32
  %v1352 = vpop.permute.xlu0 %1351
  %v1354 = vadd.f32 %v1344, %v1352
  %v1355 = vtanh.pop %v1354
  %1357 = vrot.lane.b32.xlu0 %v1355, 64
  %v1358 = vpop.permute.xlu0 %1357
  %v1360 = vmul.f32 %v1338, %v1358
  %vm1361 = vcmp.gt.s32.totalorder %v646, 3
  %vm1362 = vcmp.gt.s32.totalorder %v646, 8
  %v1363 = vsel %vm1361, 1, 0
  %1364 = vset.pattern.permute.xlu0 0
  %1365 = vperm.xlu0 %1364, %v1363
  %v1366 = vpop.permute.xlu0 %1365
  %vm1367 = vcmp.eq.s32.totalorder %v1366, 1
  %v1369 = vrot.slane %v1319, 6
  %1370 = vrot.lane.b32.xlu0 %v1369, 32
  %v1371 = vpop.permute.xlu0 %1370
  %v1373 = vsel %vm1367, %v1371, %v1199
  %v1375 = vrot.slane %v1313, 6
  %1376 = vrot.lane.b32.xlu0 %v1375, 96
  %v1377 = vpop.permute.xlu0 %1376
  %v1379 = vsel %vm1367, %v1377, %v1205
  %v1380 = vsel %vm1362, 1, 0
  %1381 = vset.pattern.permute.xlu0 0
  %1382 = vperm.xlu0 %1381, %v1380
  %v1383 = vpop.permute.xlu0 %1382
  %vm1384 = vcmp.eq.s32.totalorder %v1383, 1
  %1386 = vrot.lane.b32.xlu0 %v1216, 96
  %v1387 = vpop.permute.xlu0 %1386
  %v1389 = vsel %vm1384, %v1360, %v1387
  %v1390 = vsel %vm1384, %v1354, %v1342
  %v1391 = vsel %vm1367, %v1371, 0.0
  %1393 = vrot.lane.b32.xlu0 %v1391, 96
  %v1394 = vpop.permute.xlu0 %1393
  %v1396 = vadd.f32 %v1228, %v1394
  %v1397 = vsel %vm1384, %v1360, 0.0
  %1399 = vrot.lane.b32.xlu0 %v1397, 32
  %v1400 = vpop.permute.xlu0 %1399
  %v1402 = vadd.f32 %v1230, %v1400
  %v1403 = vsel %vm1367, %v1371, -inf
  %1405 = vrot.lane.b32.xlu0 %v1403, 96
  %v1406 = vpop.permute.xlu0 %1405
  %v1408 = vmax.f32 %v1236, %v1406
  %v1409 = vsel %vm1384, %v1360, -inf
  %1411 = vrot.lane.b32.xlu0 %v1409, 32
  %v1412 = vpop.permute.xlu0 %1411
  %v1414 = vmax.f32 %v1238, %v1412
  %v1415 = vpack.c.bf16 %v1373, %v1373
  %v1417 = vsel %vm124, %v1415, 0
  %1419 = vmatpush.bf16.msra.mxu0 0
  %1420 = vmatpush.bf16.msra.mxu0 0
  %1421 = vmatpush.bf16.msra.mxu0 0
  %1422 = vmatpush.bf16.msra.mxu0 0
  %1423 = vmatpush.bf16.msra.mxu0 0
  %1424 = vmatpush.bf16.msra.mxu0 0
  %1425 = vmatpush.bf16.msra.mxu0 %v725
  %1426 = vmatpush.bf16.msra.mxu0 %v724
  %1427 = vmatmul.bf16.gmra.mxu0 %v1417
  %v1428 = vpop.f32.mrf.mxu0
  %v1429 = vadd.f32 0.0, %v1428
  %v1430 = vpop.f32.mrf.mxu0
  %1431 = vdwg.mxu0
  %v1432 = vadd.f32 %v683, %v1429
  %v1433 = vpack.c.bf16 %v1389, %v1389
  %1435 = vrot.lane.b32.xlu0 %v1433, 32
  %v1436 = vpop.permute.xlu0 %1435
  %v1438 = vsel %vm124, %v1436, 0
  %1440 = vmatpush.bf16.msra.mxu0 0
  %1441 = vmatpush.bf16.msra.mxu0 0
  %1442 = vmatpush.bf16.msra.mxu0 0
  %1443 = vmatpush.bf16.msra.mxu0 0
  %1444 = vmatpush.bf16.msra.mxu0 0
  %1445 = vmatpush.bf16.msra.mxu0 0
  %1446 = vmatpush.bf16.msra.mxu0 %v751
  %1447 = vmatpush.bf16.msra.mxu0 %v750
  %1448 = vmatmul.bf16.gmra.mxu0 %v1438
  %v1449 = vpop.f32.mrf.mxu0
  %v1450 = vadd.f32 0.0, %v1449
  %v1451 = vpop.f32.mrf.mxu0
  %1452 = vdwg.mxu0
  %v1454 = vrot.slane %v1450, 2
  %v1456 = vadd.f32 %v710, %v1454
  %v1457 = vxor.u32 %v1432, 2147483648
  %v1458 = vmul.f32 %v1457, 1.442695
  %v1459 = vpow.pop %v1458
  %v1460 = vadd.f32 %v1459, 1.0
  %v1461 = vrcp.pop %v1460
  %v1462 = vmul.f32 %v1460, %v1461
  %v1463 = vsub.f32 1.0, %v1462
  %v1464 = vmul.f32 %v1461, %v1463
  %v1465 = vadd.f32 %v1461, %v1464
  %vm1466 = vweird.f32 %v1460
  %vm1467 = vweird.f32 %v1461
  %vm1468 = vmor %vm1466, %vm1467
  %v1469 = vsel %vm1468, %v1461, %v1465
  %v1470 = vand.u32 2147483647, %v1460
  %vm1471 = vcmp.eq.f32.partialorder %v1470, 8.507059e+37
  %v1472 = vand.u32 %v1460, 2147483648
  %v1473 = vor.u32 1.1754944e-38, %v1472
  %v1474 = vsel %vm1471, %v1473, %v1469
  %v1475 = vmul.f32 1.0, %v1474
  %v1476 = vtanh.pop %v1432
  %1478 = vrot.lane.b32.xlu0 %v1379, 32
  %v1479 = vpop.permute.xlu0 %1478
  %v1481 = vmul.f32 %v1475, %v1479
  %1483 = vrot.lane.b32.xlu0 %v1476, 64
  %v1484 = vpop.permute.xlu0 %1483
  %v1486 = vmul.f32 %v1475, %v1484
  %1488 = vrot.lane.b32.xlu0 %v1486, 32
  %v1489 = vpop.permute.xlu0 %1488
  %v1491 = vadd.f32 %v1481, %v1489
  %v1492 = vtanh.pop %v1491
  %1494 = vrot.lane.b32.xlu0 %v1492, 64
  %v1495 = vpop.permute.xlu0 %1494
  %v1497 = vmul.f32 %v1475, %v1495
  %v1498 = vxor.u32 %v1456, 2147483648
  %v1499 = vmul.f32 %v1498, 1.442695
  %v1500 = vpow.pop %v1499
  %v1501 = vadd.f32 %v1500, 1.0
  %v1502 = vrcp.pop %v1501
  %v1503 = vmul.f32 %v1501, %v1502
  %v1504 = vsub.f32 1.0, %v1503
  %v1505 = vmul.f32 %v1502, %v1504
  %v1506 = vadd.f32 %v1502, %v1505
  %vm1507 = vweird.f32 %v1501
  %vm1508 = vweird.f32 %v1502
  %vm1509 = vmor %vm1507, %vm1508
  %v1510 = vsel %vm1509, %v1502, %v1506
  %v1511 = vand.u32 2147483647, %v1501
  %vm1512 = vcmp.eq.f32.partialorder %v1511, 8.507059e+37
  %v1513 = vand.u32 %v1501, 2147483648
  %v1514 = vor.u32 1.1754944e-38, %v1513
  %v1515 = vsel %vm1512, %v1514, %v1510
  %v1516 = vmul.f32 1.0, %v1515
  %v1517 = vtanh.pop %v1456
  %v1519 = vrot.slane %v1390, 2
  %v1521 = vmul.f32 %v1516, %v1519
  %1523 = vrot.lane.b32.xlu0 %v1517, 64
  %v1524 = vpop.permute.xlu0 %1523
  %v1526 = vmul.f32 %v1516, %v1524
  %1528 = vrot.lane.b32.xlu0 %v1526, 32
  %v1529 = vpop.permute.xlu0 %1528
  %v1531 = vadd.f32 %v1521, %v1529
  %v1532 = vtanh.pop %v1531
  %1534 = vrot.lane.b32.xlu0 %v1532, 64
  %v1535 = vpop.permute.xlu0 %1534
  %v1537 = vmul.f32 %v1516, %v1535
  %vm1538 = vcmp.gt.s32.totalorder %v646, 4
  %vm1539 = vcmp.gt.s32.totalorder %v646, 7
  %v1540 = vsel %vm1538, 1, 0
  %1541 = vset.pattern.permute.xlu0 0
  %1542 = vperm.xlu0 %1541, %v1540
  %v1543 = vpop.permute.xlu0 %1542
  %vm1544 = vcmp.eq.s32.totalorder %v1543, 1
  %1546 = vrot.lane.b32.xlu0 %v1373, 96
  %v1547 = vpop.permute.xlu0 %1546
  %v1549 = vsel %vm1544, %v1497, %v1547
  %v1550 = vsel %vm1544, %v1491, %v1479
  %v1551 = vsel %vm1539, 1, 0
  %1552 = vset.pattern.permute.xlu0 0
  %1553 = vperm.xlu0 %1552, %v1551
  %v1554 = vpop.permute.xlu0 %1553
  %vm1555 = vcmp.eq.s32.totalorder %v1554, 1
  %v1557 = vrot.slane %v1537, 6
  %1558 = vrot.lane.b32.xlu0 %v1557, 32
  %v1559 = vpop.permute.xlu0 %1558
  %1562 = vrot.lane.b32.xlu0 %v1389, 32
  %v1563 = vpop.permute.xlu0 %1562
  %v1565 = vsel %vm1555, %v1559, %v1563
  %v1567 = vrot.slane %v1531, 6
  %1568 = vrot.lane.b32.xlu0 %v1567, 96
  %v1569 = vpop.permute.xlu0 %1568
  %1571 = vrot.lane.b32.xlu0 %v1390, 96
  %v1572 = vpop.permute.xlu0 %1571
  %v1574 = vsel %vm1555, %v1569, %v1572
  %v1575 = vsel %vm1544, %v1497, 0.0
  %v1576 = vadd.f32 %v1396, %v1575
  %v1577 = vsel %vm1555, %v1559, 0.0
  %v1578 = vadd.f32 %v1402, %v1577
  %v1579 = vsel %vm1544, %v1497, -inf
  %v1580 = vmax.f32 %v1408, %v1579
  %v1581 = vsel %vm1555, %v1559, -inf
  %v1582 = vmax.f32 %v1414, %v1581
  %v1583 = vpack.c.bf16 %v1549, %v1549
  %1585 = vrot.lane.b32.xlu0 %v1583, 32
  %v1586 = vpop.permute.xlu0 %1585
  %v1588 = vsel %vm124, %v1586, 0
  %1590 = vmatpush.bf16.msra.mxu0 0
  %1591 = vmatpush.bf16.msra.mxu0 0
  %1592 = vmatpush.bf16.msra.mxu0 0
  %1593 = vmatpush.bf16.msra.mxu0 0
  %1594 = vmatpush.bf16.msra.mxu0 0
  %1595 = vmatpush.bf16.msra.mxu0 0
  %1596 = vmatpush.bf16.msra.mxu0 %v725
  %1597 = vmatpush.bf16.msra.mxu0 %v724
  %1598 = vmatmul.bf16.gmra.mxu0 %v1588
  %v1599 = vpop.f32.mrf.mxu0
  %v1600 = vadd.f32 0.0, %v1599
  %v1601 = vpop.f32.mrf.mxu0
  %1602 = vdwg.mxu0
  %v1604 = vrot.slane %v1600, 6
  %v1606 = vadd.f32 %v683, %v1604
  %v1607 = vpack.c.bf16 %v1565, %v1565
  %v1609 = vsel %vm124, %v1607, 0
  %1611 = vmatpush.bf16.msra.mxu0 0
  %1612 = vmatpush.bf16.msra.mxu0 0
  %1613 = vmatpush.bf16.msra.mxu0 0
  %1614 = vmatpush.bf16.msra.mxu0 0
  %1615 = vmatpush.bf16.msra.mxu0 0
  %1616 = vmatpush.bf16.msra.mxu0 0
  %1617 = vmatpush.bf16.msra.mxu0 %v751
  %1618 = vmatpush.bf16.msra.mxu0 %v750
  %1619 = vmatmul.bf16.gmra.mxu0 %v1609
  %v1620 = vpop.f32.mrf.mxu0
  %v1621 = vadd.f32 0.0, %v1620
  %v1622 = vpop.f32.mrf.mxu0
  %1623 = vdwg.mxu0
  %v1625 = vrot.slane %v1621, 4
  %v1627 = vadd.f32 %v710, %v1625
  %v1628 = vxor.u32 %v1606, 2147483648
  %v1629 = vmul.f32 %v1628, 1.442695
  %v1630 = vpow.pop %v1629
  %v1631 = vadd.f32 %v1630, 1.0
  %v1632 = vrcp.pop %v1631
  %v1633 = vmul.f32 %v1631, %v1632
  %v1634 = vsub.f32 1.0, %v1633
  %v1635 = vmul.f32 %v1632, %v1634
  %v1636 = vadd.f32 %v1632, %v1635
  %vm1637 = vweird.f32 %v1631
  %vm1638 = vweird.f32 %v1632
  %vm1639 = vmor %vm1637, %vm1638
  %v1640 = vsel %vm1639, %v1632, %v1636
  %v1641 = vand.u32 2147483647, %v1631
  %vm1642 = vcmp.eq.f32.partialorder %v1641, 8.507059e+37
  %v1643 = vand.u32 %v1631, 2147483648
  %v1644 = vor.u32 1.1754944e-38, %v1643
  %v1645 = vsel %vm1642, %v1644, %v1640
  %v1646 = vmul.f32 1.0, %v1645
  %v1647 = vtanh.pop %v1606
  %v1649 = vrot.slane %v1550, 6
  %v1651 = vmul.f32 %v1646, %v1649
  %1653 = vrot.lane.b32.xlu0 %v1647, 64
  %v1654 = vpop.permute.xlu0 %1653
  %v1656 = vmul.f32 %v1646, %v1654
  %1658 = vrot.lane.b32.xlu0 %v1656, 32
  %v1659 = vpop.permute.xlu0 %1658
  %v1661 = vadd.f32 %v1651, %v1659
  %v1662 = vtanh.pop %v1661
  %1664 = vrot.lane.b32.xlu0 %v1662, 64
  %v1665 = vpop.permute.xlu0 %1664
  %v1667 = vmul.f32 %v1646, %v1665
  %v1668 = vxor.u32 %v1627, 2147483648
  %v1669 = vmul.f32 %v1668, 1.442695
  %v1670 = vpow.pop %v1669
  %v1671 = vadd.f32 %v1670, 1.0
  %v1672 = vrcp.pop %v1671
  %v1673 = vmul.f32 %v1671, %v1672
  %v1674 = vsub.f32 1.0, %v1673
  %v1675 = vmul.f32 %v1672, %v1674
  %v1676 = vadd.f32 %v1672, %v1675
  %vm1677 = vweird.f32 %v1671
  %vm1678 = vweird.f32 %v1672
  %vm1679 = vmor %vm1677, %vm1678
  %v1680 = vsel %vm1679, %v1672, %v1676
  %v1681 = vand.u32 2147483647, %v1671
  %vm1682 = vcmp.eq.f32.partialorder %v1681, 8.507059e+37
  %v1683 = vand.u32 %v1671, 2147483648
  %v1684 = vor.u32 1.1754944e-38, %v1683
  %v1685 = vsel %vm1682, %v1684, %v1680
  %v1686 = vmul.f32 1.0, %v1685
  %v1687 = vtanh.pop %v1627
  %v1689 = vrot.slane %v1574, 4
  %1690 = vrot.lane.b32.xlu0 %v1689, 32
  %v1691 = vpop.permute.xlu0 %1690
  %v1693 = vmul.f32 %v1686, %v1691
  %1695 = vrot.lane.b32.xlu0 %v1687, 64
  %v1696 = vpop.permute.xlu0 %1695
  %v1698 = vmul.f32 %v1686, %v1696
  %1700 = vrot.lane.b32.xlu0 %v1698, 32
  %v1701 = vpop.permute.xlu0 %1700
  %v1703 = vadd.f32 %v1693, %v1701
  %v1704 = vtanh.pop %v1703
  %1706 = vrot.lane.b32.xlu0 %v1704, 64
  %v1707 = vpop.permute.xlu0 %1706
  %v1709 = vmul.f32 %v1686, %v1707
  %vm1710 = vcmp.gt.s32.totalorder %v646, 5
  %vm1711 = vcmp.gt.s32.totalorder %v646, 6
  %v1712 = vsel %vm1710, 1, 0
  %1713 = vset.pattern.permute.xlu0 0
  %1714 = vperm.xlu0 %1713, %v1712
  %v1715 = vpop.permute.xlu0 %1714
  %vm1716 = vcmp.eq.s32.totalorder %v1715, 1
  %v1718 = vrot.slane %v1667, 2
  %1719 = vrot.lane.b32.xlu0 %v1718, 32
  %v1720 = vpop.permute.xlu0 %1719
  %1723 = vrot.lane.b32.xlu0 %v1549, 32
  %v1724 = vpop.permute.xlu0 %1723
  %v1726 = vsel %vm1716, %v1720, %v1724
  %v1728 = vrot.slane %v1661, 2
  %1729 = vrot.lane.b32.xlu0 %v1728, 96
  %v1730 = vpop.permute.xlu0 %1729
  %1732 = vrot.lane.b32.xlu0 %v1550, 96
  %v1733 = vpop.permute.xlu0 %1732
  %v1735 = vsel %vm1716, %v1730, %v1733
  %v1736 = vsel %vm1711, 1, 0
  %1737 = vset.pattern.permute.xlu0 0
  %1738 = vperm.xlu0 %1737, %v1736
  %v1739 = vpop.permute.xlu0 %1738
  %vm1740 = vcmp.eq.s32.totalorder %v1739, 1
  %v1742 = vrot.slane %v1709, 4
  %1743 = vrot.lane.b32.xlu0 %v1742, 32
  %v1744 = vpop.permute.xlu0 %1743
  %v1746 = vsel %vm1740, %v1744, %v1565
  %v1748 = vrot.slane %v1703, 4
  %1749 = vrot.lane.b32.xlu0 %v1748, 96
  %v1750 = vpop.permute.xlu0 %1749
  %v1752 = vsel %vm1740, %v1750, %v1574
  %v1753 = vsel %vm1716, %v1720, 0.0
  %1755 = vrot.lane.b32.xlu0 %v1753, 96
  %v1756 = vpop.permute.xlu0 %1755
  %v1758 = vadd.f32 %v1576, %v1756
  %v1759 = vsel %vm1740, %v1744, 0.0
  %v1760 = vadd.f32 %v1578, %v1759
  %v1761 = vsel %vm1716, %v1720, -inf
  %1763 = vrot.lane.b32.xlu0 %v1761, 96
  %v1764 = vpop.permute.xlu0 %1763
  %v1766 = vmax.f32 %v1580, %v1764
  %v1767 = vsel %vm1740, %v1744, -inf
  %v1768 = vmax.f32 %v1582, %v1767
  %v1769 = vpack.c.bf16 %v1726, %v1726
  %v1771 = vsel %vm124, %v1769, 0
  %1773 = vmatpush.bf16.msra.mxu0 0
  %1774 = vmatpush.bf16.msra.mxu0 0
  %1775 = vmatpush.bf16.msra.mxu0 0
  %1776 = vmatpush.bf16.msra.mxu0 0
  %1777 = vmatpush.bf16.msra.mxu0 0
  %1778 = vmatpush.bf16.msra.mxu0 0
  %1779 = vmatpush.bf16.msra.mxu0 %v725
  %1780 = vmatpush.bf16.msra.mxu0 %v724
  %1781 = vmatmul.bf16.gmra.mxu0 %v1771
  %v1782 = vpop.f32.mrf.mxu0
  %v1783 = vadd.f32 0.0, %v1782
  %v1784 = vpop.f32.mrf.mxu0
  %1785 = vdwg.mxu0
  %v1787 = vrot.slane %v1783, 4
  %v1789 = vadd.f32 %v683, %v1787
  %v1790 = vpack.c.bf16 %v1746, %v1746
  %v1792 = vsel %vm124, %v1790, 0
  %1794 = vmatpush.bf16.msra.mxu0 0
  %1795 = vmatpush.bf16.msra.mxu0 0
  %1796 = vmatpush.bf16.msra.mxu0 0
  %1797 = vmatpush.bf16.msra.mxu0 0
  %1798 = vmatpush.bf16.msra.mxu0 0
  %1799 = vmatpush.bf16.msra.mxu0 0
  %1800 = vmatpush.bf16.msra.mxu0 %v751
  %1801 = vmatpush.bf16.msra.mxu0 %v750
  %1802 = vmatmul.bf16.gmra.mxu0 %v1792
  %v1803 = vpop.f32.mrf.mxu0
  %v1804 = vadd.f32 0.0, %v1803
  %v1805 = vpop.f32.mrf.mxu0
  %1806 = vdwg.mxu0
  %v1808 = vrot.slane %v1804, 6
  %v1810 = vadd.f32 %v710, %v1808
  %v1811 = vxor.u32 %v1789, 2147483648
  %v1812 = vmul.f32 %v1811, 1.442695
  %v1813 = vpow.pop %v1812
  %v1814 = vadd.f32 %v1813, 1.0
  %v1815 = vrcp.pop %v1814
  %v1816 = vmul.f32 %v1814, %v1815
  %v1817 = vsub.f32 1.0, %v1816
  %v1818 = vmul.f32 %v1815, %v1817
  %v1819 = vadd.f32 %v1815, %v1818
  %vm1820 = vweird.f32 %v1814
  %vm1821 = vweird.f32 %v1815
  %vm1822 = vmor %vm1820, %vm1821
  %v1823 = vsel %vm1822, %v1815, %v1819
  %v1824 = vand.u32 2147483647, %v1814
  %vm1825 = vcmp.eq.f32.partialorder %v1824, 8.507059e+37
  %v1826 = vand.u32 %v1814, 2147483648
  %v1827 = vor.u32 1.1754944e-38, %v1826
  %v1828 = vsel %vm1825, %v1827, %v1823
  %v1829 = vmul.f32 1.0, %v1828
  %v1830 = vtanh.pop %v1789
  %v1832 = vrot.slane %v1735, 4
  %1833 = vrot.lane.b32.xlu0 %v1832, 32
  %v1834 = vpop.permute.xlu0 %1833
  %v1836 = vmul.f32 %v1829, %v1834
  %1838 = vrot.lane.b32.xlu0 %v1830, 64
  %v1839 = vpop.permute.xlu0 %1838
  %v1841 = vmul.f32 %v1829, %v1839
  %1843 = vrot.lane.b32.xlu0 %v1841, 32
  %v1844 = vpop.permute.xlu0 %1843
  %v1846 = vadd.f32 %v1836, %v1844
  %v1847 = vtanh.pop %v1846
  %1849 = vrot.lane.b32.xlu0 %v1847, 64
  %v1850 = vpop.permute.xlu0 %1849
  %v1852 = vmul.f32 %v1829, %v1850
  %v1853 = vxor.u32 %v1810, 2147483648
  %v1854 = vmul.f32 %v1853, 1.442695
  %v1855 = vpow.pop %v1854
  %v1856 = vadd.f32 %v1855, 1.0
  %v1857 = vrcp.pop %v1856
  %v1858 = vmul.f32 %v1856, %v1857
  %v1859 = vsub.f32 1.0, %v1858
  %v1860 = vmul.f32 %v1857, %v1859
  %v1861 = vadd.f32 %v1857, %v1860
  %vm1862 = vweird.f32 %v1856
  %vm1863 = vweird.f32 %v1857
  %vm1864 = vmor %vm1862, %vm1863
  %v1865 = vsel %vm1864, %v1857, %v1861
  %v1866 = vand.u32 2147483647, %v1856
  %vm1867 = vcmp.eq.f32.partialorder %v1866, 8.507059e+37
  %v1868 = vand.u32 %v1856, 2147483648
  %v1869 = vor.u32 1.1754944e-38, %v1868
  %v1870 = vsel %vm1867, %v1869, %v1865
  %v1871 = vmul.f32 1.0, %v1870
  %v1872 = vtanh.pop %v1810
  %v1874 = vrot.slane %v1752, 6
  %1875 = vrot.lane.b32.xlu0 %v1874, 32
  %v1876 = vpop.permute.xlu0 %1875
  %v1878 = vmul.f32 %v1871, %v1876
  %1880 = vrot.lane.b32.xlu0 %v1872, 64
  %v1881 = vpop.permute.xlu0 %1880
  %v1883 = vmul.f32 %v1871, %v1881
  %1885 = vrot.lane.b32.xlu0 %v1883, 32
  %v1886 = vpop.permute.xlu0 %1885
  %v1888 = vadd.f32 %v1878, %v1886
  %v1889 = vtanh.pop %v1888
  %1891 = vrot.lane.b32.xlu0 %v1889, 64
  %v1892 = vpop.permute.xlu0 %1891
  %v1894 = vmul.f32 %v1871, %v1892
  %v1896 = vrot.slane %v1852, 4
  %1897 = vrot.lane.b32.xlu0 %v1896, 32
  %v1898 = vpop.permute.xlu0 %1897
  %v1900 = vsel %vm1740, %v1898, %v1726
  %v1902 = vrot.slane %v1846, 4
  %1903 = vrot.lane.b32.xlu0 %v1902, 96
  %v1904 = vpop.permute.xlu0 %1903
  %v1906 = vsel %vm1740, %v1904, %v1735
  %v1908 = vrot.slane %v1894, 2
  %1909 = vrot.lane.b32.xlu0 %v1908, 32
  %v1910 = vpop.permute.xlu0 %1909
  %v1912 = vsel %vm1716, %v1910, %v1746
  %v1914 = vrot.slane %v1888, 2
  %1915 = vrot.lane.b32.xlu0 %v1914, 96
  %v1916 = vpop.permute.xlu0 %1915
  %v1918 = vsel %vm1716, %v1916, %v1752
  %v1919 = vsel %vm1740, %v1898, 0.0
  %1921 = vrot.lane.b32.xlu0 %v1919, 96
  %v1922 = vpop.permute.xlu0 %1921
  %v1924 = vadd.f32 %v1758, %v1922
  %v1925 = vsel %vm1716, %v1910, 0.0
  %v1926 = vadd.f32 %v1760, %v1925
  %v1927 = vsel %vm1740, %v1898, -inf
  %1929 = vrot.lane.b32.xlu0 %v1927, 96
  %v1930 = vpop.permute.xlu0 %1929
  %v1932 = vmax.f32 %v1766, %v1930
  %v1933 = vsel %vm1716, %v1910, -inf
  %v1934 = vmax.f32 %v1768, %v1933
  %v1935 = vpack.c.bf16 %v1900, %v1900
  %v1937 = vsel %vm124, %v1935, 0
  %1939 = vmatpush.bf16.msra.mxu0 0
  %1940 = vmatpush.bf16.msra.mxu0 0
  %1941 = vmatpush.bf16.msra.mxu0 0
  %1942 = vmatpush.bf16.msra.mxu0 0
  %1943 = vmatpush.bf16.msra.mxu0 0
  %1944 = vmatpush.bf16.msra.mxu0 0
  %1945 = vmatpush.bf16.msra.mxu0 %v725
  %1946 = vmatpush.bf16.msra.mxu0 %v724
  %1947 = vmatmul.bf16.gmra.mxu0 %v1937
  %v1948 = vpop.f32.mrf.mxu0
  %v1949 = vadd.f32 0.0, %v1948
  %v1950 = vpop.f32.mrf.mxu0
  %1951 = vdwg.mxu0
  %v1953 = vrot.slane %v1949, 2
  %v1955 = vadd.f32 %v683, %v1953
  %v1956 = vpack.c.bf16 %v1912, %v1912
  %v1958 = vsel %vm124, %v1956, 0
  %1960 = vmatpush.bf16.msra.mxu0 0
  %1961 = vmatpush.bf16.msra.mxu0 0
  %1962 = vmatpush.bf16.msra.mxu0 0
  %1963 = vmatpush.bf16.msra.mxu0 0
  %1964 = vmatpush.bf16.msra.mxu0 0
  %1965 = vmatpush.bf16.msra.mxu0 0
  %1966 = vmatpush.bf16.msra.mxu0 %v751
  %1967 = vmatpush.bf16.msra.mxu0 %v750
  %1968 = vmatmul.bf16.gmra.mxu0 %v1958
  %v1969 = vpop.f32.mrf.mxu0
  %v1970 = vadd.f32 0.0, %v1969
  %v1971 = vpop.f32.mrf.mxu0
  %1972 = vdwg.mxu0
  %v1973 = vadd.f32 %v710, %v1970
  %v1974 = vxor.u32 %v1955, 2147483648
  %v1975 = vmul.f32 %v1974, 1.442695
  %v1976 = vpow.pop %v1975
  %v1977 = vadd.f32 %v1976, 1.0
  %v1978 = vrcp.pop %v1977
  %v1979 = vmul.f32 %v1977, %v1978
  %v1980 = vsub.f32 1.0, %v1979
  %v1981 = vmul.f32 %v1978, %v1980
  %v1982 = vadd.f32 %v1978, %v1981
  %vm1983 = vweird.f32 %v1977
  %vm1984 = vweird.f32 %v1978
  %vm1985 = vmor %vm1983, %vm1984
  %v1986 = vsel %vm1985, %v1978, %v1982
  %v1987 = vand.u32 2147483647, %v1977
  %vm1988 = vcmp.eq.f32.partialorder %v1987, 8.507059e+37
  %v1989 = vand.u32 %v1977, 2147483648
  %v1990 = vor.u32 1.1754944e-38, %v1989
  %v1991 = vsel %vm1988, %v1990, %v1986
  %v1992 = vmul.f32 1.0, %v1991
  %v1993 = vtanh.pop %v1955
  %v1995 = vrot.slane %v1906, 2
  %1996 = vrot.lane.b32.xlu0 %v1995, 32
  %v1997 = vpop.permute.xlu0 %1996
  %v1999 = vmul.f32 %v1992, %v1997
  %2001 = vrot.lane.b32.xlu0 %v1993, 64
  %v2002 = vpop.permute.xlu0 %2001
  %v2004 = vmul.f32 %v1992, %v2002
  %2006 = vrot.lane.b32.xlu0 %v2004, 32
  %v2007 = vpop.permute.xlu0 %2006
  %v2009 = vadd.f32 %v1999, %v2007
  %v2010 = vtanh.pop %v2009
  %2012 = vrot.lane.b32.xlu0 %v2010, 64
  %v2013 = vpop.permute.xlu0 %2012
  %v2015 = vmul.f32 %v1992, %v2013
  %v2016 = vxor.u32 %v1973, 2147483648
  %v2017 = vmul.f32 %v2016, 1.442695
  %v2018 = vpow.pop %v2017
  %v2019 = vadd.f32 %v2018, 1.0
  %v2020 = vrcp.pop %v2019
  %v2021 = vmul.f32 %v2019, %v2020
  %v2022 = vsub.f32 1.0, %v2021
  %v2023 = vmul.f32 %v2020, %v2022
  %v2024 = vadd.f32 %v2020, %v2023
  %vm2025 = vweird.f32 %v2019
  %vm2026 = vweird.f32 %v2020
  %vm2027 = vmor %vm2025, %vm2026
  %v2028 = vsel %vm2027, %v2020, %v2024
  %v2029 = vand.u32 2147483647, %v2019
  %vm2030 = vcmp.eq.f32.partialorder %v2029, 8.507059e+37
  %v2031 = vand.u32 %v2019, 2147483648
  %v2032 = vor.u32 1.1754944e-38, %v2031
  %v2033 = vsel %vm2030, %v2032, %v2028
  %v2034 = vmul.f32 1.0, %v2033
  %v2035 = vtanh.pop %v1973
  %2037 = vrot.lane.b32.xlu0 %v1918, 32
  %v2038 = vpop.permute.xlu0 %2037
  %v2040 = vmul.f32 %v2034, %v2038
  %2042 = vrot.lane.b32.xlu0 %v2035, 64
  %v2043 = vpop.permute.xlu0 %2042
  %v2045 = vmul.f32 %v2034, %v2043
  %2047 = vrot.lane.b32.xlu0 %v2045, 32
  %v2048 = vpop.permute.xlu0 %2047
  %v2050 = vadd.f32 %v2040, %v2048
  %v2051 = vtanh.pop %v2050
  %2053 = vrot.lane.b32.xlu0 %v2051, 64
  %v2054 = vpop.permute.xlu0 %2053
  %v2056 = vmul.f32 %v2034, %v2054
  %v2058 = vrot.slane %v2015, 6
  %2059 = vrot.lane.b32.xlu0 %v2058, 32
  %v2060 = vpop.permute.xlu0 %2059
  %v2062 = vsel %vm1555, %v2060, %v1900
  %v2064 = vrot.slane %v2009, 6
  %2065 = vrot.lane.b32.xlu0 %v2064, 96
  %v2066 = vpop.permute.xlu0 %2065
  %v2068 = vsel %vm1555, %v2066, %v1906
  %2070 = vrot.lane.b32.xlu0 %v1912, 96
  %v2071 = vpop.permute.xlu0 %2070
  %v2073 = vsel %vm1544, %v2056, %v2071
  %v2074 = vsel %vm1544, %v2050, %v2038
  %v2075 = vsel %vm1555, %v2060, 0.0
  %2077 = vrot.lane.b32.xlu0 %v2075, 96
  %v2078 = vpop.permute.xlu0 %2077
  %v2080 = vadd.f32 %v1924, %v2078
  %v2081 = vsel %vm1544, %v2056, 0.0
  %2083 = vrot.lane.b32.xlu0 %v2081, 32
  %v2084 = vpop.permute.xlu0 %2083
  %v2086 = vadd.f32 %v1926, %v2084
  %v2087 = vsel %vm1555, %v2060, -inf
  %2089 = vrot.lane.b32.xlu0 %v2087, 96
  %v2090 = vpop.permute.xlu0 %2089
  %v2092 = vmax.f32 %v1932, %v2090
  %v2093 = vsel %vm1544, %v2056, -inf
  %2095 = vrot.lane.b32.xlu0 %v2093, 32
  %v2096 = vpop.permute.xlu0 %2095
  %v2098 = vmax.f32 %v1934, %v2096
  %v2099 = vpack.c.bf16 %v2062, %v2062
  %v2101 = vsel %vm124, %v2099, 0
  %2103 = vmatpush.bf16.msra.mxu0 0
  %2104 = vmatpush.bf16.msra.mxu0 0
  %2105 = vmatpush.bf16.msra.mxu0 0
  %2106 = vmatpush.bf16.msra.mxu0 0
  %2107 = vmatpush.bf16.msra.mxu0 0
  %2108 = vmatpush.bf16.msra.mxu0 0
  %2109 = vmatpush.bf16.msra.mxu0 %v725
  %2110 = vmatpush.bf16.msra.mxu0 %v724
  %2111 = vmatmul.bf16.gmra.mxu0 %v2101
  %v2112 = vpop.f32.mrf.mxu0
  %v2113 = vadd.f32 0.0, %v2112
  %v2114 = vpop.f32.mrf.mxu0
  %2115 = vdwg.mxu0
  %v2116 = vadd.f32 %v686, %v2113
  %v2117 = vpack.c.bf16 %v2073, %v2073
  %2119 = vrot.lane.b32.xlu0 %v2117, 32
  %v2120 = vpop.permute.xlu0 %2119
  %v2122 = vsel %vm124, %v2120, 0
  %2124 = vmatpush.bf16.msra.mxu0 0
  %2125 = vmatpush.bf16.msra.mxu0 0
  %2126 = vmatpush.bf16.msra.mxu0 0
  %2127 = vmatpush.bf16.msra.mxu0 0
  %2128 = vmatpush.bf16.msra.mxu0 0
  %2129 = vmatpush.bf16.msra.mxu0 0
  %2130 = vmatpush.bf16.msra.mxu0 %v751
  %2131 = vmatpush.bf16.msra.mxu0 %v750
  %2132 = vmatmul.bf16.gmra.mxu0 %v2122
  %v2133 = vpop.f32.mrf.mxu0
  %v2134 = vadd.f32 0.0, %v2133
  %v2135 = vpop.f32.mrf.mxu0
  %2136 = vdwg.mxu0
  %v2138 = vrot.slane %v2134, 2
  %v2140 = vadd.f32 %v708, %v2138
  %v2141 = vxor.u32 %v2116, 2147483648
  %v2142 = vmul.f32 %v2141, 1.442695
  %v2143 = vpow.pop %v2142
  %v2144 = vadd.f32 %v2143, 1.0
  %v2145 = vrcp.pop %v2144
  %v2146 = vmul.f32 %v2144, %v2145
  %v2147 = vsub.f32 1.0, %v2146
  %v2148 = vmul.f32 %v2145, %v2147
  %v2149 = vadd.f32 %v2145, %v2148
  %vm2150 = vweird.f32 %v2144
  %vm2151 = vweird.f32 %v2145
  %vm2152 = vmor %vm2150, %vm2151
  %v2153 = vsel %vm2152, %v2145, %v2149
  %v2154 = vand.u32 2147483647, %v2144
  %vm2155 = vcmp.eq.f32.partialorder %v2154, 8.507059e+37
  %v2156 = vand.u32 %v2144, 2147483648
  %v2157 = vor.u32 1.1754944e-38, %v2156
  %v2158 = vsel %vm2155, %v2157, %v2153
  %v2159 = vmul.f32 1.0, %v2158
  %v2160 = vtanh.pop %v2116
  %2162 = vrot.lane.b32.xlu0 %v2068, 32
  %v2163 = vpop.permute.xlu0 %2162
  %v2165 = vmul.f32 %v2159, %v2163
  %2167 = vrot.lane.b32.xlu0 %v2160, 64
  %v2168 = vpop.permute.xlu0 %2167
  %v2170 = vmul.f32 %v2159, %v2168
  %2172 = vrot.lane.b32.xlu0 %v2170, 32
  %v2173 = vpop.permute.xlu0 %2172
  %v2175 = vadd.f32 %v2165, %v2173
  %v2176 = vtanh.pop %v2175
  %2178 = vrot.lane.b32.xlu0 %v2176, 64
  %v2179 = vpop.permute.xlu0 %2178
  %v2181 = vmul.f32 %v2159, %v2179
  %v2182 = vxor.u32 %v2140, 2147483648
  %v2183 = vmul.f32 %v2182, 1.442695
  %v2184 = vpow.pop %v2183
  %v2185 = vadd.f32 %v2184, 1.0
  %v2186 = vrcp.pop %v2185
  %v2187 = vmul.f32 %v2185, %v2186
  %v2188 = vsub.f32 1.0, %v2187
  %v2189 = vmul.f32 %v2186, %v2188
  %v2190 = vadd.f32 %v2186, %v2189
  %vm2191 = vweird.f32 %v2185
  %vm2192 = vweird.f32 %v2186
  %vm2193 = vmor %vm2191, %vm2192
  %v2194 = vsel %vm2193, %v2186, %v2190
  %v2195 = vand.u32 2147483647, %v2185
  %vm2196 = vcmp.eq.f32.partialorder %v2195, 8.507059e+37
  %v2197 = vand.u32 %v2185, 2147483648
  %v2198 = vor.u32 1.1754944e-38, %v2197
  %v2199 = vsel %vm2196, %v2198, %v2194
  %v2200 = vmul.f32 1.0, %v2199
  %v2201 = vtanh.pop %v2140
  %v2203 = vrot.slane %v2074, 2
  %v2205 = vmul.f32 %v2200, %v2203
  %2207 = vrot.lane.b32.xlu0 %v2201, 64
  %v2208 = vpop.permute.xlu0 %2207
  %v2210 = vmul.f32 %v2200, %v2208
  %2212 = vrot.lane.b32.xlu0 %v2210, 32
  %v2213 = vpop.permute.xlu0 %2212
  %v2215 = vadd.f32 %v2205, %v2213
  %v2216 = vtanh.pop %v2215
  %2218 = vrot.lane.b32.xlu0 %v2216, 64
  %v2219 = vpop.permute.xlu0 %2218
  %v2221 = vmul.f32 %v2200, %v2219
  %2223 = vrot.lane.b32.xlu0 %v2062, 96
  %v2224 = vpop.permute.xlu0 %2223
  %v2226 = vsel %vm1384, %v2181, %v2224
  %v2227 = vsel %vm1384, %v2175, %v2163
  %v2229 = vrot.slane %v2221, 6
  %2230 = vrot.lane.b32.xlu0 %v2229, 32
  %v2231 = vpop.permute.xlu0 %2230
  %2234 = vrot.lane.b32.xlu0 %v2073, 32
  %v2235 = vpop.permute.xlu0 %2234
  %v2237 = vsel %vm1367, %v2231, %v2235
  %v2239 = vrot.slane %v2215, 6
  %2240 = vrot.lane.b32.xlu0 %v2239, 96
  %v2241 = vpop.permute.xlu0 %2240
  %2243 = vrot.lane.b32.xlu0 %v2074, 96
  %v2244 = vpop.permute.xlu0 %2243
  %v2246 = vsel %vm1367, %v2241, %v2244
  %v2247 = vsel %vm1384, %v2181, 0.0
  %v2248 = vadd.f32 %v2080, %v2247
  %v2249 = vsel %vm1367, %v2231, 0.0
  %v2250 = vadd.f32 %v2086, %v2249
  %v2251 = vsel %vm1384, %v2181, -inf
  %v2252 = vmax.f32 %v2092, %v2251
  %v2253 = vsel %vm1367, %v2231, -inf
  %v2254 = vmax.f32 %v2098, %v2253
  %v2255 = vpack.c.bf16 %v2226, %v2226
  %2257 = vrot.lane.b32.xlu0 %v2255, 32
  %v2258 = vpop.permute.xlu0 %2257
  %v2260 = vsel %vm124, %v2258, 0
  %2262 = vmatpush.bf16.msra.mxu0 0
  %2263 = vmatpush.bf16.msra.mxu0 0
  %2264 = vmatpush.bf16.msra.mxu0 0
  %2265 = vmatpush.bf16.msra.mxu0 0
  %2266 = vmatpush.bf16.msra.mxu0 0
  %2267 = vmatpush.bf16.msra.mxu0 0
  %2268 = vmatpush.bf16.msra.mxu0 %v725
  %2269 = vmatpush.bf16.msra.mxu0 %v724
  %2270 = vmatmul.bf16.gmra.mxu0 %v2260
  %v2271 = vpop.f32.mrf.mxu0
  %v2272 = vadd.f32 0.0, %v2271
  %v2273 = vpop.f32.mrf.mxu0
  %2274 = vdwg.mxu0
  %v2276 = vrot.slane %v2272, 6
  %v2278 = vadd.f32 %v686, %v2276
  %v2279 = vpack.c.bf16 %v2237, %v2237
  %v2281 = vsel %vm124, %v2279, 0
  %2283 = vmatpush.bf16.msra.mxu0 0
  %2284 = vmatpush.bf16.msra.mxu0 0
  %2285 = vmatpush.bf16.msra.mxu0 0
  %2286 = vmatpush.bf16.msra.mxu0 0
  %2287 = vmatpush.bf16.msra.mxu0 0
  %2288 = vmatpush.bf16.msra.mxu0 0
  %2289 = vmatpush.bf16.msra.mxu0 %v751
  %2290 = vmatpush.bf16.msra.mxu0 %v750
  %2291 = vmatmul.bf16.gmra.mxu0 %v2281
  %v2292 = vpop.f32.mrf.mxu0
  %v2293 = vadd.f32 0.0, %v2292
  %v2294 = vpop.f32.mrf.mxu0
  %2295 = vdwg.mxu0
  %v2297 = vrot.slane %v2293, 4
  %v2299 = vadd.f32 %v708, %v2297
  %v2300 = vxor.u32 %v2278, 2147483648
  %v2301 = vmul.f32 %v2300, 1.442695
  %v2302 = vpow.pop %v2301
  %v2303 = vadd.f32 %v2302, 1.0
  %v2304 = vrcp.pop %v2303
  %v2305 = vmul.f32 %v2303, %v2304
  %v2306 = vsub.f32 1.0, %v2305
  %v2307 = vmul.f32 %v2304, %v2306
  %v2308 = vadd.f32 %v2304, %v2307
  %vm2309 = vweird.f32 %v2303
  %vm2310 = vweird.f32 %v2304
  %vm2311 = vmor %vm2309, %vm2310
  %v2312 = vsel %vm2311, %v2304, %v2308
  %v2313 = vand.u32 2147483647, %v2303
  %vm2314 = vcmp.eq.f32.partialorder %v2313, 8.507059e+37
  %v2315 = vand.u32 %v2303, 2147483648
  %v2316 = vor.u32 1.1754944e-38, %v2315
  %v2317 = vsel %vm2314, %v2316, %v2312
  %v2318 = vmul.f32 1.0, %v2317
  %v2319 = vtanh.pop %v2278
  %v2321 = vrot.slane %v2227, 6
  %v2323 = vmul.f32 %v2318, %v2321
  %2325 = vrot.lane.b32.xlu0 %v2319, 64
  %v2326 = vpop.permute.xlu0 %2325
  %v2328 = vmul.f32 %v2318, %v2326
  %2330 = vrot.lane.b32.xlu0 %v2328, 32
  %v2331 = vpop.permute.xlu0 %2330
  %v2333 = vadd.f32 %v2323, %v2331
  %v2334 = vtanh.pop %v2333
  %2336 = vrot.lane.b32.xlu0 %v2334, 64
  %v2337 = vpop.permute.xlu0 %2336
  %v2339 = vmul.f32 %v2318, %v2337
  %v2340 = vxor.u32 %v2299, 2147483648
  %v2341 = vmul.f32 %v2340, 1.442695
  %v2342 = vpow.pop %v2341
  %v2343 = vadd.f32 %v2342, 1.0
  %v2344 = vrcp.pop %v2343
  %v2345 = vmul.f32 %v2343, %v2344
  %v2346 = vsub.f32 1.0, %v2345
  %v2347 = vmul.f32 %v2344, %v2346
  %v2348 = vadd.f32 %v2344, %v2347
  %vm2349 = vweird.f32 %v2343
  %vm2350 = vweird.f32 %v2344
  %vm2351 = vmor %vm2349, %vm2350
  %v2352 = vsel %vm2351, %v2344, %v2348
  %v2353 = vand.u32 2147483647, %v2343
  %vm2354 = vcmp.eq.f32.partialorder %v2353, 8.507059e+37
  %v2355 = vand.u32 %v2343, 2147483648
  %v2356 = vor.u32 1.1754944e-38, %v2355
  %v2357 = vsel %vm2354, %v2356, %v2352
  %v2358 = vmul.f32 1.0, %v2357
  %v2359 = vtanh.pop %v2299
  %v2361 = vrot.slane %v2246, 4
  %2362 = vrot.lane.b32.xlu0 %v2361, 32
  %v2363 = vpop.permute.xlu0 %2362
  %v2365 = vmul.f32 %v2358, %v2363
  %2367 = vrot.lane.b32.xlu0 %v2359, 64
  %v2368 = vpop.permute.xlu0 %2367
  %v2370 = vmul.f32 %v2358, %v2368
  %2372 = vrot.lane.b32.xlu0 %v2370, 32
  %v2373 = vpop.permute.xlu0 %2372
  %v2375 = vadd.f32 %v2365, %v2373
  %v2376 = vtanh.pop %v2375
  %2378 = vrot.lane.b32.xlu0 %v2376, 64
  %v2379 = vpop.permute.xlu0 %2378
  %v2381 = vmul.f32 %v2358, %v2379
  %v2383 = vrot.slane %v2339, 2
  %2384 = vrot.lane.b32.xlu0 %v2383, 32
  %v2385 = vpop.permute.xlu0 %2384
  %2388 = vrot.lane.b32.xlu0 %v2226, 32
  %v2389 = vpop.permute.xlu0 %2388
  %v2391 = vsel %vm1210, %v2385, %v2389
  %v2393 = vrot.slane %v2333, 2
  %2394 = vrot.lane.b32.xlu0 %v2393, 96
  %v2395 = vpop.permute.xlu0 %2394
  %2397 = vrot.lane.b32.xlu0 %v2227, 96
  %v2398 = vpop.permute.xlu0 %2397
  %v2400 = vsel %vm1210, %v2395, %v2398
  %v2402 = vrot.slane %v2381, 4
  %2403 = vrot.lane.b32.xlu0 %v2402, 32
  %v2404 = vpop.permute.xlu0 %2403
  %v2406 = vsel %vm1193, %v2404, %v2237
  %v2408 = vrot.slane %v2375, 4
  %2409 = vrot.lane.b32.xlu0 %v2408, 96
  %v2410 = vpop.permute.xlu0 %2409
  %v2412 = vsel %vm1193, %v2410, %v2246
  %v2413 = vsel %vm1210, %v2385, 0.0
  %2415 = vrot.lane.b32.xlu0 %v2413, 96
  %v2416 = vpop.permute.xlu0 %2415
  %v2418 = vadd.f32 %v2248, %v2416
  %v2419 = vsel %vm1193, %v2404, 0.0
  %v2420 = vadd.f32 %v2250, %v2419
  %v2421 = vsel %vm1210, %v2385, -inf
  %2423 = vrot.lane.b32.xlu0 %v2421, 96
  %v2424 = vpop.permute.xlu0 %2423
  %v2426 = vmax.f32 %v2252, %v2424
  %v2427 = vsel %vm1193, %v2404, -inf
  %v2428 = vmax.f32 %v2254, %v2427
  %v2429 = vpack.c.bf16 %v2391, %v2391
  %v2431 = vsel %vm124, %v2429, 0
  %2433 = vmatpush.bf16.msra.mxu0 0
  %2434 = vmatpush.bf16.msra.mxu0 0
  %2435 = vmatpush.bf16.msra.mxu0 0
  %2436 = vmatpush.bf16.msra.mxu0 0
  %2437 = vmatpush.bf16.msra.mxu0 0
  %2438 = vmatpush.bf16.msra.mxu0 0
  %2439 = vmatpush.bf16.msra.mxu0 %v725
  %2440 = vmatpush.bf16.msra.mxu0 %v724
  %2441 = vmatmul.bf16.gmra.mxu0 %v2431
  %v2442 = vpop.f32.mrf.mxu0
  %v2443 = vadd.f32 0.0, %v2442
  %v2444 = vpop.f32.mrf.mxu0
  %2445 = vdwg.mxu0
  %v2447 = vrot.slane %v2443, 4
  %v2449 = vadd.f32 %v686, %v2447
  %v2450 = vpack.c.bf16 %v2406, %v2406
  %v2452 = vsel %vm124, %v2450, 0
  %2454 = vmatpush.bf16.msra.mxu0 0
  %2455 = vmatpush.bf16.msra.mxu0 0
  %2456 = vmatpush.bf16.msra.mxu0 0
  %2457 = vmatpush.bf16.msra.mxu0 0
  %2458 = vmatpush.bf16.msra.mxu0 0
  %2459 = vmatpush.bf16.msra.mxu0 0
  %2460 = vmatpush.bf16.msra.mxu0 %v751
  %2461 = vmatpush.bf16.msra.mxu0 %v750
  %2462 = vmatmul.bf16.gmra.mxu0 %v2452
  %v2463 = vpop.f32.mrf.mxu0
  %v2464 = vadd.f32 0.0, %v2463
  %v2465 = vpop.f32.mrf.mxu0
  %2466 = vdwg.mxu0
  %v2468 = vrot.slane %v2464, 6
  %v2470 = vadd.f32 %v708, %v2468
  %v2471 = vxor.u32 %v2449, 2147483648
  %v2472 = vmul.f32 %v2471, 1.442695
  %v2473 = vpow.pop %v2472
  %v2474 = vadd.f32 %v2473, 1.0
  %v2475 = vrcp.pop %v2474
  %v2476 = vmul.f32 %v2474, %v2475
  %v2477 = vsub.f32 1.0, %v2476
  %v2478 = vmul.f32 %v2475, %v2477
  %v2479 = vadd.f32 %v2475, %v2478
  %vm2480 = vweird.f32 %v2474
  %vm2481 = vweird.f32 %v2475
  %vm2482 = vmor %vm2480, %vm2481
  %v2483 = vsel %vm2482, %v2475, %v2479
  %v2484 = vand.u32 2147483647, %v2474
  %vm2485 = vcmp.eq.f32.partialorder %v2484, 8.507059e+37
  %v2486 = vand.u32 %v2474, 2147483648
  %v2487 = vor.u32 1.1754944e-38, %v2486
  %v2488 = vsel %vm2485, %v2487, %v2483
  %v2489 = vmul.f32 1.0, %v2488
  %v2490 = vtanh.pop %v2449
  %v2492 = vrot.slane %v2400, 4
  %2493 = vrot.lane.b32.xlu0 %v2492, 32
  %v2494 = vpop.permute.xlu0 %2493
  %v2496 = vmul.f32 %v2489, %v2494
  %2498 = vrot.lane.b32.xlu0 %v2490, 64
  %v2499 = vpop.permute.xlu0 %2498
  %v2501 = vmul.f32 %v2489, %v2499
  %2503 = vrot.lane.b32.xlu0 %v2501, 32
  %v2504 = vpop.permute.xlu0 %2503
  %v2506 = vadd.f32 %v2496, %v2504
  %v2507 = vtanh.pop %v2506
  %2509 = vrot.lane.b32.xlu0 %v2507, 64
  %v2510 = vpop.permute.xlu0 %2509
  %v2512 = vmul.f32 %v2489, %v2510
  %v2513 = vxor.u32 %v2470, 2147483648
  %v2514 = vmul.f32 %v2513, 1.442695
  %v2515 = vpow.pop %v2514
  %v2516 = vadd.f32 %v2515, 1.0
  %v2517 = vrcp.pop %v2516
  %v2518 = vmul.f32 %v2516, %v2517
  %v2519 = vsub.f32 1.0, %v2518
  %v2520 = vmul.f32 %v2517, %v2519
  %v2521 = vadd.f32 %v2517, %v2520
  %vm2522 = vweird.f32 %v2516
  %vm2523 = vweird.f32 %v2517
  %vm2524 = vmor %vm2522, %vm2523
  %v2525 = vsel %vm2524, %v2517, %v2521
  %v2526 = vand.u32 2147483647, %v2516
  %vm2527 = vcmp.eq.f32.partialorder %v2526, 8.507059e+37
  %v2528 = vand.u32 %v2516, 2147483648
  %v2529 = vor.u32 1.1754944e-38, %v2528
  %v2530 = vsel %vm2527, %v2529, %v2525
  %v2531 = vmul.f32 1.0, %v2530
  %v2532 = vtanh.pop %v2470
  %v2534 = vrot.slane %v2412, 6
  %2535 = vrot.lane.b32.xlu0 %v2534, 32
  %v2536 = vpop.permute.xlu0 %2535
  %v2538 = vmul.f32 %v2531, %v2536
  %2540 = vrot.lane.b32.xlu0 %v2532, 64
  %v2541 = vpop.permute.xlu0 %2540
  %v2543 = vmul.f32 %v2531, %v2541
  %2545 = vrot.lane.b32.xlu0 %v2543, 32
  %v2546 = vpop.permute.xlu0 %2545
  %v2548 = vadd.f32 %v2538, %v2546
  %v2549 = vtanh.pop %v2548
  %2551 = vrot.lane.b32.xlu0 %v2549, 64
  %v2552 = vpop.permute.xlu0 %2551
  %v2554 = vmul.f32 %v2531, %v2552
  %v2556 = vrot.slane %v2512, 4
  %2557 = vrot.lane.b32.xlu0 %v2556, 32
  %v2558 = vpop.permute.xlu0 %2557
  %v2560 = vsel %vm1032, %v2558, %v2391
  %v2562 = vrot.slane %v2506, 4
  %2563 = vrot.lane.b32.xlu0 %v2562, 96
  %v2564 = vpop.permute.xlu0 %2563
  %v2566 = vsel %vm1032, %v2564, %v2400
  %v2568 = vrot.slane %v2554, 2
  %2569 = vrot.lane.b32.xlu0 %v2568, 32
  %v2570 = vpop.permute.xlu0 %2569
  %v2572 = vsel %vm1008, %v2570, %v2406
  %v2574 = vrot.slane %v2548, 2
  %2575 = vrot.lane.b32.xlu0 %v2574, 96
  %v2576 = vpop.permute.xlu0 %2575
  %v2578 = vsel %vm1008, %v2576, %v2412
  %v2579 = vsel %vm1032, %v2558, 0.0
  %2581 = vrot.lane.b32.xlu0 %v2579, 96
  %v2582 = vpop.permute.xlu0 %2581
  %v2584 = vadd.f32 %v2418, %v2582
  %v2585 = vsel %vm1008, %v2570, 0.0
  %v2586 = vadd.f32 %v2420, %v2585
  %v2587 = vsel %vm1032, %v2558, -inf
  %2589 = vrot.lane.b32.xlu0 %v2587, 96
  %v2590 = vpop.permute.xlu0 %2589
  %v2592 = vmax.f32 %v2426, %v2590
  %v2593 = vsel %vm1008, %v2570, -inf
  %v2594 = vmax.f32 %v2428, %v2593
  %v2595 = vpack.c.bf16 %v2560, %v2560
  %v2597 = vsel %vm124, %v2595, 0
  %2599 = vmatpush.bf16.msra.mxu0 0
  %2600 = vmatpush.bf16.msra.mxu0 0
  %2601 = vmatpush.bf16.msra.mxu0 0
  %2602 = vmatpush.bf16.msra.mxu0 0
  %2603 = vmatpush.bf16.msra.mxu0 0
  %2604 = vmatpush.bf16.msra.mxu0 0
  %2605 = vmatpush.bf16.msra.mxu0 %v725
  %2606 = vmatpush.bf16.msra.mxu0 %v724
  %2607 = vmatmul.bf16.gmra.mxu0 %v2597
  %v2608 = vpop.f32.mrf.mxu0
  %v2609 = vadd.f32 0.0, %v2608
  %v2610 = vpop.f32.mrf.mxu0
  %2611 = vdwg.mxu0
  %v2613 = vrot.slane %v2609, 2
  %v2615 = vadd.f32 %v686, %v2613
  %v2616 = vpack.c.bf16 %v2572, %v2572
  %v2618 = vsel %vm124, %v2616, 0
  %2620 = vmatpush.bf16.msra.mxu0 0
  %2621 = vmatpush.bf16.msra.mxu0 0
  %2622 = vmatpush.bf16.msra.mxu0 0
  %2623 = vmatpush.bf16.msra.mxu0 0
  %2624 = vmatpush.bf16.msra.mxu0 0
  %2625 = vmatpush.bf16.msra.mxu0 0
  %2626 = vmatpush.bf16.msra.mxu0 %v751
  %2627 = vmatpush.bf16.msra.mxu0 %v750
  %2628 = vmatmul.bf16.gmra.mxu0 %v2618
  %v2629 = vpop.f32.mrf.mxu0
  %v2630 = vadd.f32 0.0, %v2629
  %v2631 = vpop.f32.mrf.mxu0
  %2632 = vdwg.mxu0
  %v2633 = vadd.f32 %v708, %v2630
  %v2634 = vxor.u32 %v2615, 2147483648
  %v2635 = vmul.f32 %v2634, 1.442695
  %v2636 = vpow.pop %v2635
  %v2637 = vadd.f32 %v2636, 1.0
  %v2638 = vrcp.pop %v2637
  %v2639 = vmul.f32 %v2637, %v2638
  %v2640 = vsub.f32 1.0, %v2639
  %v2641 = vmul.f32 %v2638, %v2640
  %v2642 = vadd.f32 %v2638, %v2641
  %vm2643 = vweird.f32 %v2637
  %vm2644 = vweird.f32 %v2638
  %vm2645 = vmor %vm2643, %vm2644
  %v2646 = vsel %vm2645, %v2638, %v2642
  %v2647 = vand.u32 2147483647, %v2637
  %vm2648 = vcmp.eq.f32.partialorder %v2647, 8.507059e+37
  %v2649 = vand.u32 %v2637, 2147483648
  %v2650 = vor.u32 1.1754944e-38, %v2649
  %v2651 = vsel %vm2648, %v2650, %v2646
  %v2652 = vmul.f32 1.0, %v2651
  %v2653 = vtanh.pop %v2615
  %v2655 = vrot.slane %v2566, 2
  %2656 = vrot.lane.b32.xlu0 %v2655, 32
  %v2657 = vpop.permute.xlu0 %2656
  %v2659 = vmul.f32 %v2652, %v2657
  %2661 = vrot.lane.b32.xlu0 %v2653, 64
  %v2662 = vpop.permute.xlu0 %2661
  %v2664 = vmul.f32 %v2652, %v2662
  %2666 = vrot.lane.b32.xlu0 %v2664, 32
  %v2667 = vpop.permute.xlu0 %2666
  %v2669 = vadd.f32 %v2659, %v2667
  %v2670 = vtanh.pop %v2669
  %2672 = vrot.lane.b32.xlu0 %v2670, 64
  %v2673 = vpop.permute.xlu0 %2672
  %v2675 = vmul.f32 %v2652, %v2673
  %v2676 = vxor.u32 %v2633, 2147483648
  %v2677 = vmul.f32 %v2676, 1.442695
  %v2678 = vpow.pop %v2677
  %v2679 = vadd.f32 %v2678, 1.0
  %v2680 = vrcp.pop %v2679
  %v2681 = vmul.f32 %v2679, %v2680
  %v2682 = vsub.f32 1.0, %v2681
  %v2683 = vmul.f32 %v2680, %v2682
  %v2684 = vadd.f32 %v2680, %v2683
  %vm2685 = vweird.f32 %v2679
  %vm2686 = vweird.f32 %v2680
  %vm2687 = vmor %vm2685, %vm2686
  %v2688 = vsel %vm2687, %v2680, %v2684
  %v2689 = vand.u32 2147483647, %v2679
  %vm2690 = vcmp.eq.f32.partialorder %v2689, 8.507059e+37
  %v2691 = vand.u32 %v2679, 2147483648
  %v2692 = vor.u32 1.1754944e-38, %v2691
  %v2693 = vsel %vm2690, %v2692, %v2688
  %v2694 = vmul.f32 1.0, %v2693
  %v2695 = vtanh.pop %v2633
  %2697 = vrot.lane.b32.xlu0 %v2578, 32
  %v2698 = vpop.permute.xlu0 %2697
  %v2700 = vmul.f32 %v2694, %v2698
  %2702 = vrot.lane.b32.xlu0 %v2695, 64
  %v2703 = vpop.permute.xlu0 %2702
  %v2705 = vmul.f32 %v2694, %v2703
  %2707 = vrot.lane.b32.xlu0 %v2705, 32
  %v2708 = vpop.permute.xlu0 %2707
  %v2710 = vadd.f32 %v2700, %v2708
  %v2711 = vtanh.pop %v2710
  %2713 = vrot.lane.b32.xlu0 %v2711, 64
  %v2714 = vpop.permute.xlu0 %2713
  %v2716 = vmul.f32 %v2694, %v2714
  %v2718 = vrot.slane %v2675, 6
  %2719 = vrot.lane.b32.xlu0 %v2718, 32
  %v2720 = vpop.permute.xlu0 %2719
  %v2722 = vsel %vm858, %v2720, %v2560
  %2724 = vrot.lane.b32.xlu0 %v2572, 96
  %v2725 = vpop.permute.xlu0 %2724
  %v2727 = vsel %vm851, %v2716, %v2725
  %v2728 = vsel %vm858, %v2720, 0.0
  %2730 = vrot.lane.b32.xlu0 %v2728, 96
  %v2731 = vpop.permute.xlu0 %2730
  %v2733 = vadd.f32 %v2584, %v2731
  %v2734 = vsel %vm851, %v2716, 0.0
  %2736 = vrot.lane.b32.xlu0 %v2734, 32
  %v2737 = vpop.permute.xlu0 %2736
  %v2739 = vadd.f32 %v2586, %v2737
  %v2740 = vsel %vm858, %v2720, -inf
  %2742 = vrot.lane.b32.xlu0 %v2740, 96
  %v2743 = vpop.permute.xlu0 %2742
  %v2745 = vmax.f32 %v2592, %v2743
  %v2746 = vsel %vm851, %v2716, -inf
  %2748 = vrot.lane.b32.xlu0 %v2746, 32
  %v2749 = vpop.permute.xlu0 %2748
  %v2751 = vmax.f32 %v2594, %v2749
  %v2752 = vcvt.s32.f32 %v646
  %v2753 = vrcp.pop %v2752
  %v2754 = vmul.f32 %v2752, %v2753
  %v2755 = vsub.f32 1.0, %v2754
  %v2756 = vmul.f32 %v2753, %v2755
  %v2757 = vadd.f32 %v2753, %v2756
  %vm2758 = vweird.f32 %v2752
  %vm2759 = vweird.f32 %v2753
  %vm2760 = vmor %vm2758, %vm2759
  %v2761 = vsel %vm2760, %v2753, %v2757
  %v2762 = vand.u32 2147483647, %v2752
  %vm2763 = vcmp.eq.f32.partialorder %v2762, 8.507059e+37
  %v2764 = vand.u32 %v2752, 2147483648
  %v2765 = vor.u32 1.1754944e-38, %v2764
  %v2766 = vsel %vm2763, %v2765, %v2761
  %v2767 = vmul.f32 1.0, %v2766
  %2769 = vset.pattern.permute.xlu0 0
  %2770 = vperm.xlu0 %2769, %v2767
  %v2771 = vpop.permute.xlu0 %2770
  %v2773 = vmul.f32 %v2733, %v2771
  %v2774 = vmul.f32 %v2739, %v2771
  %2776 = vrot.lane.b32.xlu0 %v2727, 32
  %v2777 = vpop.permute.xlu0 %2776
  %2780 = vrot.lane.b32.xlu0 %v2722, 32
  %v2781 = vpop.permute.xlu0 %2780
  %2784 = vrot.lane.b32.xlu0 %v2773, 96
  %v2785 = vpop.permute.xlu0 %2784
  %2788 = vrot.lane.b32.xlu0 %v2774, 96
  %v2789 = vpop.permute.xlu0 %2788
  %2792 = vrot.lane.b32.xlu0 %v2745, 32
  %v2793 = vpop.permute.xlu0 %2792
  %2796 = vrot.lane.b32.xlu0 %v2751, 32
  %v2797 = vpop.permute.xlu0 %2796
  %v2799 = vsel %vm124, %v2777, %v2781
  %vm2800 = vcmask 523264
  %v2801 = vsel %vm2800, %v2799, %v2785
  %vm2802 = vcmask 785408
  %v2803 = vsel %vm2802, %v2801, %v2789
  %v2804 = vsel %vm124, %v2793, %v2797
  %v2805 = vld [vmem:[%s2] sm:$0xf]
  %v2806 = vld [vmem:[%s2 + $0x4] sm:$0x3]
  %v2807 = vld [vmem:[%s11] sm:$0xf]
  %v2808 = vld [vmem:[%s11 + $0x4] sm:$0xf]
  %v2809 = vld [vmem:[%s11 + $0x8] sm:$0xf]
  %v2810 = vld [vmem:[%s11 + $0xc] sm:$0xf]
  %v2811 = vld [vmem:[%s12] sm:$0xf]
  %v2812 = vld [vmem:[%s12 + $0x4] sm:$0xf]
  %v2813 = vld [vmem:[%s12 + $0x8] sm:$0xf]
  %v2814 = vld [vmem:[%s12 + $0xc] sm:$0xf]
  %v2815 = vld [vmem:[%s12 + $0x10] sm:$0xf]
  %v2816 = vld [vmem:[%s12 + $0x14] sm:$0xf]
  %v2817 = vld [vmem:[%s13] sm:$0x1]
  %v2818 = vld [vmem:[%s13 + $0x1] sm:$0x1]
  %v2819 = vld [vmem:[%s4] sm:$0x3]
  %v2821 = vperm.slane %v2817, 0
  %v2825 = vunpack.c.l.b16 %v2805
  %v2826 = vunpack.c.l.b16 %v2806
  %v2827 = vpack.c.b16 %v2826, %v2825
  %v2830 = vunpack.c.l.b16 %v2807
  %v2831 = vunpack.c.l.b16 %v2808
  %v2832 = vpack.c.b16 %v2831, %v2830
  %v2835 = vsel %vm664, %v2827, 0
  %2837 = vmatpush.bf16.msra.mxu0 0
  %2838 = vmatpush.bf16.msra.mxu0 0
  %2839 = vmatpush.bf16.msra.mxu0 0
  %2840 = vmatpush.bf16.msra.mxu0 0
  %2841 = vmatpush.bf16.msra.mxu0 0
  %2842 = vmatpush.bf16.msra.mxu0 0
  %2843 = vmatpush.bf16.msra.mxu0 0
  %2844 = vmatpush.bf16.msra.mxu0 %v2832
  %2845 = vmatmul.bf16.gmra.mxu0 %v2835
  %v2846 = vpop.f32.mrf.mxu0
  %v2847 = vadd.f32 %v2821, %v2846
  %v2848 = vpop.f32.mrf.mxu0
  %v2849 = vadd.f32 %v2821, %v2848
  %2850 = vdwg.mxu0
  %v2852 = vperm.slane %v2818, 0
  %v2856 = vunpack.c.l.b16 %v2809
  %v2857 = vunpack.c.l.b16 %v2810
  %v2858 = vpack.c.b16 %v2857, %v2856
  %2860 = vmatpush.bf16.msra.mxu0 0
  %2861 = vmatpush.bf16.msra.mxu0 0
  %2862 = vmatpush.bf16.msra.mxu0 0
  %2863 = vmatpush.bf16.msra.mxu0 0
  %2864 = vmatpush.bf16.msra.mxu0 0
  %2865 = vmatpush.bf16.msra.mxu0 0
  %2866 = vmatpush.bf16.msra.mxu0 0
  %2867 = vmatpush.bf16.msra.mxu0 %v2858
  %2868 = vmatmul.bf16.gmra.mxu0 %v2835
  %v2869 = vpop.f32.mrf.mxu0
  %v2870 = vadd.f32 %v2852, %v2869
  %v2871 = vpop.f32.mrf.mxu0
  %v2872 = vadd.f32 %v2852, %v2871
  %2873 = vdwg.mxu0
  %v2877 = vunpack.c.l.b16 %v2811
  %v2878 = vunpack.c.l.b16 %v2812
  %v2879 = vunpack.c.l.b16 %v2813
  %v2880 = vpack.c.b16 %v2878, %v2877
  %v2881 = vpack.c.b16 %v2879, %v2879
  %vm2883 = vcmask 195584
  %v2884 = vsel %vm2883, 0, 0
  %vm2886 = vcmask 1043456
  %v2888 = vsel %vm2886, %v2881, 0
  %2890 = vmatpush.bf16.msra.mxu0 0
  %2891 = vmatpush.bf16.msra.mxu0 0
  %2892 = vmatpush.bf16.msra.mxu0 0
  %2893 = vmatpush.bf16.msra.mxu0 0
  %2894 = vmatpush.bf16.msra.mxu0 0
  %2895 = vmatpush.bf16.msra.mxu0 0
  %2896 = vmatpush.bf16.msra.mxu0 %v2888
  %2897 = vmatpush.bf16.msra.mxu0 %v2880
  %2898 = vmatmul.bf16.gmra.mxu0 %v2884
  %v2899 = vpop.f32.mrf.mxu0
  %v2900 = vadd.f32 0.0, %v2899
  %v2901 = vpop.f32.mrf.mxu0
  %2902 = vdwg.mxu0
  %v2903 = vadd.f32 %v2847, %v2900
  %v2907 = vunpack.c.l.b16 %v2814
  %v2908 = vunpack.c.l.b16 %v2815
  %v2909 = vunpack.c.l.b16 %v2816
  %v2910 = vpack.c.b16 %v2908, %v2907
  %v2911 = vpack.c.b16 %v2909, %v2909
  %v2914 = vsel %vm2886, %v2911, 0
  %2916 = vmatpush.bf16.msra.mxu0 0
  %2917 = vmatpush.bf16.msra.mxu0 0
  %2918 = vmatpush.bf16.msra.mxu0 0
  %2919 = vmatpush.bf16.msra.mxu0 0
  %2920 = vmatpush.bf16.msra.mxu0 0
  %2921 = vmatpush.bf16.msra.mxu0 0
  %2922 = vmatpush.bf16.msra.mxu0 %v2914
  %2923 = vmatpush.bf16.msra.mxu0 %v2910
  %2924 = vmatmul.bf16.gmra.mxu0 %v2884
  %v2925 = vpop.f32.mrf.mxu0
  %v2926 = vadd.f32 0.0, %v2925
  %v2927 = vpop.f32.mrf.mxu0
  %2928 = vdwg.mxu0
  %v2930 = vrot.slane %v2926, 6
  %v2932 = vadd.f32 %v2872, %v2930
  %v2933 = vxor.u32 %v2903, 2147483648
  %v2934 = vmul.f32 %v2933, 1.442695
  %v2935 = vpow.pop %v2934
  %v2936 = vadd.f32 %v2935, 1.0
  %v2937 = vrcp.pop %v2936
  %v2938 = vmul.f32 %v2936, %v2937
  %v2939 = vsub.f32 1.0, %v2938
  %v2940 = vmul.f32 %v2937, %v2939
  %v2941 = vadd.f32 %v2937, %v2940
  %vm2942 = vweird.f32 %v2936
  %vm2943 = vweird.f32 %v2937
  %vm2944 = vmor %vm2942, %vm2943
  %v2945 = vsel %vm2944, %v2937, %v2941
  %v2946 = vand.u32 2147483647, %v2936
  %vm2947 = vcmp.eq.f32.partialorder %v2946, 8.507059e+37
  %v2948 = vand.u32 %v2936, 2147483648
  %v2949 = vor.u32 1.1754944e-38, %v2948
  %v2950 = vsel %vm2947, %v2949, %v2945
  %v2951 = vmul.f32 1.0, %v2950
  %v2952 = vtanh.pop %v2903
  %v2953 = vmul.f32 %v2951, 0.0
  %2955 = vrot.lane.b32.xlu0 %v2952, 80
  %v2956 = vpop.permute.xlu0 %2955
  %v2958 = vmul.f32 %v2951, %v2956
  %2960 = vrot.lane.b32.xlu0 %v2958, 24
  %v2961 = vpop.permute.xlu0 %2960
  %v2963 = vadd.f32 %v2953, %v2961
  %v2964 = vtanh.pop %v2963
  %2966 = vrot.lane.b32.xlu0 %v2964, 48
  %v2967 = vpop.permute.xlu0 %2966
  %v2969 = vmul.f32 %v2951, %v2967
  %v2970 = vxor.u32 %v2932, 2147483648
  %v2971 = vmul.f32 %v2970, 1.442695
  %v2972 = vpow.pop %v2971
  %v2973 = vadd.f32 %v2972, 1.0
  %v2974 = vrcp.pop %v2973
  %v2975 = vmul.f32 %v2973, %v2974
  %v2976 = vsub.f32 1.0, %v2975
  %v2977 = vmul.f32 %v2974, %v2976
  %v2978 = vadd.f32 %v2974, %v2977
  %vm2979 = vweird.f32 %v2973
  %vm2980 = vweird.f32 %v2974
  %vm2981 = vmor %vm2979, %vm2980
  %v2982 = vsel %vm2981, %v2974, %v2978
  %v2983 = vand.u32 2147483647, %v2973
  %vm2984 = vcmp.eq.f32.partialorder %v2983, 8.507059e+37
  %v2985 = vand.u32 %v2973, 2147483648
  %v2986 = vor.u32 1.1754944e-38, %v2985
  %v2987 = vsel %vm2984, %v2986, %v2982
  %v2988 = vmul.f32 1.0, %v2987
  %v2989 = vtanh.pop %v2932
  %v2990 = vmul.f32 %v2988, 0.0
  %2992 = vrot.lane.b32.xlu0 %v2989, 80
  %v2993 = vpop.permute.xlu0 %2992
  %v2995 = vmul.f32 %v2988, %v2993
  %2997 = vrot.lane.b32.xlu0 %v2995, 24
  %v2998 = vpop.permute.xlu0 %2997
  %v3000 = vadd.f32 %v2990, %v2998
  %v3001 = vtanh.pop %v3000
  %3003 = vrot.lane.b32.xlu0 %v3001, 48
  %v3004 = vpop.permute.xlu0 %3003
  %v3006 = vmul.f32 %v2988, %v3004
  %vm3007 = vcmp.gt.s32.totalorder %v2819, 0
  %vm3008 = vcmp.gt.s32.totalorder %v2819, 5
  %v3009 = vsel %vm3007, 1, 0
  %3010 = vset.pattern.permute.xlu0 0
  %3011 = vperm.xlu0 %3010, %v3009
  %v3012 = vpop.permute.xlu0 %3011
  %vm3013 = vcmp.eq.s32.totalorder %v3012, 1
  %v3014 = vsel %vm3013, %v2969, 0.0
  %v3015 = vsel %vm3013, %v2963, 0.0
  %v3016 = vsel %vm3008, 1, 0
  %3017 = vset.pattern.permute.xlu0 0
  %3018 = vperm.xlu0 %3017, %v3016
  %v3019 = vpop.permute.xlu0 %3018
  %vm3020 = vcmp.eq.s32.totalorder %v3019, 1
  %v3022 = vrot.slane %v3006, 2
  %3023 = vrot.lane.b32.xlu0 %v3022, 56
  %v3024 = vpop.permute.xlu0 %3023
  %v3026 = vsel %vm3020, %v3024, 0.0
  %v3028 = vrot.slane %v3000, 2
  %3029 = vrot.lane.b32.xlu0 %v3028, 104
  %v3030 = vpop.permute.xlu0 %3029
  %v3032 = vsel %vm3020, %v3030, 0.0
  %v3033 = vadd.f32 %v3014, 0.0
  %v3034 = vadd.f32 %v3026, 0.0
  %v3035 = vsel %vm3013, %v2969, -inf
  %v3036 = vsel %vm3020, %v3024, -inf
  %v3037 = vpack.c.bf16 %v3014, %v3014
  %3039 = vrot.lane.b32.xlu0 %v3037, 56
  %v3040 = vpop.permute.xlu0 %3039
  %v3042 = vsel %vm2883, %v3040, 0
  %3044 = vmatpush.bf16.msra.mxu0 0
  %3045 = vmatpush.bf16.msra.mxu0 0
  %3046 = vmatpush.bf16.msra.mxu0 0
  %3047 = vmatpush.bf16.msra.mxu0 0
  %3048 = vmatpush.bf16.msra.mxu0 0
  %3049 = vmatpush.bf16.msra.mxu0 0
  %3050 = vmatpush.bf16.msra.mxu0 %v2888
  %3051 = vmatpush.bf16.msra.mxu0 %v2880
  %3052 = vmatmul.bf16.gmra.mxu0 %v3042
  %v3053 = vpop.f32.mrf.mxu0
  %v3054 = vadd.f32 0.0, %v3053
  %v3055 = vpop.f32.mrf.mxu0
  %3056 = vdwg.mxu0
  %v3058 = vrot.slane %v3054, 6
  %v3060 = vadd.f32 %v2847, %v3058
  %v3061 = vpack.c.bf16 %v3026, %v3026
  %v3063 = vsel %vm2883, %v3061, 0
  %3065 = vmatpush.bf16.msra.mxu0 0
  %3066 = vmatpush.bf16.msra.mxu0 0
  %3067 = vmatpush.bf16.msra.mxu0 0
  %3068 = vmatpush.bf16.msra.mxu0 0
  %3069 = vmatpush.bf16.msra.mxu0 0
  %3070 = vmatpush.bf16.msra.mxu0 0
  %3071 = vmatpush.bf16.msra.mxu0 %v2914
  %3072 = vmatpush.bf16.msra.mxu0 %v2910
  %3073 = vmatmul.bf16.gmra.mxu0 %v3063
  %v3074 = vpop.f32.mrf.mxu0
  %v3075 = vadd.f32 0.0, %v3074
  %v3076 = vpop.f32.mrf.mxu0
  %3077 = vdwg.mxu0
  %v3078 = vadd.f32 %v2872, %v3075
  %v3079 = vxor.u32 %v3060, 2147483648
  %v3080 = vmul.f32 %v3079, 1.442695
  %v3081 = vpow.pop %v3080
  %v3082 = vadd.f32 %v3081, 1.0
  %v3083 = vrcp.pop %v3082
  %v3084 = vmul.f32 %v3082, %v3083
  %v3085 = vsub.f32 1.0, %v3084
  %v3086 = vmul.f32 %v3083, %v3085
  %v3087 = vadd.f32 %v3083, %v3086
  %vm3088 = vweird.f32 %v3082
  %vm3089 = vweird.f32 %v3083
  %vm3090 = vmor %vm3088, %vm3089
  %v3091 = vsel %vm3090, %v3083, %v3087
  %v3092 = vand.u32 2147483647, %v3082
  %vm3093 = vcmp.eq.f32.partialorder %v3092, 8.507059e+37
  %v3094 = vand.u32 %v3082, 2147483648
  %v3095 = vor.u32 1.1754944e-38, %v3094
  %v3096 = vsel %vm3093, %v3095, %v3091
  %v3097 = vmul.f32 1.0, %v3096
  %v3098 = vtanh.pop %v3060
  %v3100 = vrot.slane %v3015, 6
  %v3102 = vmul.f32 %v3097, %v3100
  %3104 = vrot.lane.b32.xlu0 %v3098, 80
  %v3105 = vpop.permute.xlu0 %3104
  %v3107 = vmul.f32 %v3097, %v3105
  %3109 = vrot.lane.b32.xlu0 %v3107, 24
  %v3110 = vpop.permute.xlu0 %3109
  %v3112 = vadd.f32 %v3102, %v3110
  %v3113 = vtanh.pop %v3112
  %3115 = vrot.lane.b32.xlu0 %v3113, 48
  %v3116 = vpop.permute.xlu0 %3115
  %v3118 = vmul.f32 %v3097, %v3116
  %v3119 = vxor.u32 %v3078, 2147483648
  %v3120 = vmul.f32 %v3119, 1.442695
  %v3121 = vpow.pop %v3120
  %v3122 = vadd.f32 %v3121, 1.0
  %v3123 = vrcp.pop %v3122
  %v3124 = vmul.f32 %v3122, %v3123
  %v3125 = vsub.f32 1.0, %v3124
  %v3126 = vmul.f32 %v3123, %v3125
  %v3127 = vadd.f32 %v3123, %v3126
  %vm3128 = vweird.f32 %v3122
  %vm3129 = vweird.f32 %v3123
  %vm3130 = vmor %vm3128, %vm3129
  %v3131 = vsel %vm3130, %v3123, %v3127
  %v3132 = vand.u32 2147483647, %v3122
  %vm3133 = vcmp.eq.f32.partialorder %v3132, 8.507059e+37
  %v3134 = vand.u32 %v3122, 2147483648
  %v3135 = vor.u32 1.1754944e-38, %v3134
  %v3136 = vsel %vm3133, %v3135, %v3131
  %v3137 = vmul.f32 1.0, %v3136
  %v3138 = vtanh.pop %v3078
  %3140 = vrot.lane.b32.xlu0 %v3032, 24
  %v3141 = vpop.permute.xlu0 %3140
  %v3143 = vmul.f32 %v3137, %v3141
  %3145 = vrot.lane.b32.xlu0 %v3138, 80
  %v3146 = vpop.permute.xlu0 %3145
  %v3148 = vmul.f32 %v3137, %v3146
  %3150 = vrot.lane.b32.xlu0 %v3148, 24
  %v3151 = vpop.permute.xlu0 %3150
  %v3153 = vadd.f32 %v3143, %v3151
  %v3154 = vtanh.pop %v3153
  %3156 = vrot.lane.b32.xlu0 %v3154, 48
  %v3157 = vpop.permute.xlu0 %3156
  %v3159 = vmul.f32 %v3137, %v3157
  %vm3160 = vcmp.gt.s32.totalorder %v2819, 1
  %vm3161 = vcmp.gt.s32.totalorder %v2819, 4
  %v3162 = vsel %vm3160, 1, 0
  %3163 = vset.pattern.permute.xlu0 0
  %3164 = vperm.xlu0 %3163, %v3162
  %v3165 = vpop.permute.xlu0 %3164
  %vm3166 = vcmp.eq.s32.totalorder %v3165, 1
  %v3168 = vrot.slane %v3118, 2
  %3169 = vrot.lane.b32.xlu0 %v3168, 56
  %v3170 = vpop.permute.xlu0 %3169
  %3173 = vrot.lane.b32.xlu0 %v3014, 56
  %v3174 = vpop.permute.xlu0 %3173
  %v3176 = vsel %vm3166, %v3170, %v3174
  %v3178 = vrot.slane %v3112, 2
  %3179 = vrot.lane.b32.xlu0 %v3178, 104
  %v3180 = vpop.permute.xlu0 %3179
  %3182 = vrot.lane.b32.xlu0 %v3015, 104
  %v3183 = vpop.permute.xlu0 %3182
  %v3185 = vsel %vm3166, %v3180, %v3183
  %v3186 = vsel %vm3161, 1, 0
  %3187 = vset.pattern.permute.xlu0 0
  %3188 = vperm.xlu0 %3187, %v3186
  %v3189 = vpop.permute.xlu0 %3188
  %vm3190 = vcmp.eq.s32.totalorder %v3189, 1
  %3192 = vrot.lane.b32.xlu0 %v3026, 72
  %v3193 = vpop.permute.xlu0 %3192
  %v3195 = vsel %vm3190, %v3159, %v3193
  %v3196 = vsel %vm3190, %v3153, %v3141
  %v3197 = vsel %vm3166, %v3170, 0.0
  %3199 = vrot.lane.b32.xlu0 %v3197, 72
  %v3200 = vpop.permute.xlu0 %3199
  %v3202 = vadd.f32 %v3033, %v3200
  %v3203 = vsel %vm3190, %v3159, 0.0
  %3205 = vrot.lane.b32.xlu0 %v3203, 56
  %v3206 = vpop.permute.xlu0 %3205
  %v3208 = vadd.f32 %v3034, %v3206
  %v3209 = vsel %vm3166, %v3170, -inf
  %3211 = vrot.lane.b32.xlu0 %v3209, 72
  %v3212 = vpop.permute.xlu0 %3211
  %v3214 = vmax.f32 %v3035, %v3212
  %v3215 = vsel %vm3190, %v3159, -inf
  %3217 = vrot.lane.b32.xlu0 %v3215, 56
  %v3218 = vpop.permute.xlu0 %3217
  %v3220 = vmax.f32 %v3036, %v3218
  %v3221 = vpack.c.bf16 %v3176, %v3176
  %v3223 = vsel %vm2883, %v3221, 0
  %3225 = vmatpush.bf16.msra.mxu0 0
  %3226 = vmatpush.bf16.msra.mxu0 0
  %3227 = vmatpush.bf16.msra.mxu0 0
  %3228 = vmatpush.bf16.msra.mxu0 0
  %3229 = vmatpush.bf16.msra.mxu0 0
  %3230 = vmatpush.bf16.msra.mxu0 0
  %3231 = vmatpush.bf16.msra.mxu0 %v2888
  %3232 = vmatpush.bf16.msra.mxu0 %v2880
  %3233 = vmatmul.bf16.gmra.mxu0 %v3223
  %v3234 = vpop.f32.mrf.mxu0
  %v3235 = vadd.f32 0.0, %v3234
  %v3236 = vpop.f32.mrf.mxu0
  %3237 = vdwg.mxu0
  %v3239 = vrot.slane %v3235, 4
  %v3241 = vadd.f32 %v2847, %v3239
  %v3242 = vpack.c.bf16 %v3195, %v3195
  %3244 = vrot.lane.b32.xlu0 %v3242, 56
  %v3245 = vpop.permute.xlu0 %3244
  %v3247 = vsel %vm2883, %v3245, 0
  %3249 = vmatpush.bf16.msra.mxu0 0
  %3250 = vmatpush.bf16.msra.mxu0 0
  %3251 = vmatpush.bf16.msra.mxu0 0
  %3252 = vmatpush.bf16.msra.mxu0 0
  %3253 = vmatpush.bf16.msra.mxu0 0
  %3254 = vmatpush.bf16.msra.mxu0 0
  %3255 = vmatpush.bf16.msra.mxu0 %v2914
  %3256 = vmatpush.bf16.msra.mxu0 %v2910
  %3257 = vmatmul.bf16.gmra.mxu0 %v3247
  %v3258 = vpop.f32.mrf.mxu0
  %v3259 = vadd.f32 0.0, %v3258
  %v3260 = vpop.f32.mrf.mxu0
  %3261 = vdwg.mxu0
  %v3263 = vrot.slane %v3259, 2
  %v3265 = vadd.f32 %v2870, %v3263
  %v3266 = vxor.u32 %v3241, 2147483648
  %v3267 = vmul.f32 %v3266, 1.442695
  %v3268 = vpow.pop %v3267
  %v3269 = vadd.f32 %v3268, 1.0
  %v3270 = vrcp.pop %v3269
  %v3271 = vmul.f32 %v3269, %v3270
  %v3272 = vsub.f32 1.0, %v3271
  %v3273 = vmul.f32 %v3270, %v3272
  %v3274 = vadd.f32 %v3270, %v3273
  %vm3275 = vweird.f32 %v3269
  %vm3276 = vweird.f32 %v3270
  %vm3277 = vmor %vm3275, %vm3276
  %v3278 = vsel %vm3277, %v3270, %v3274
  %v3279 = vand.u32 2147483647, %v3269
  %vm3280 = vcmp.eq.f32.partialorder %v3279, 8.507059e+37
  %v3281 = vand.u32 %v3269, 2147483648
  %v3282 = vor.u32 1.1754944e-38, %v3281
  %v3283 = vsel %vm3280, %v3282, %v3278
  %v3284 = vmul.f32 1.0, %v3283
  %v3285 = vtanh.pop %v3241
  %v3287 = vrot.slane %v3185, 4
  %3288 = vrot.lane.b32.xlu0 %v3287, 24
  %v3289 = vpop.permute.xlu0 %3288
  %v3291 = vmul.f32 %v3284, %v3289
  %3293 = vrot.lane.b32.xlu0 %v3285, 80
  %v3294 = vpop.permute.xlu0 %3293
  %v3296 = vmul.f32 %v3284, %v3294
  %3298 = vrot.lane.b32.xlu0 %v3296, 24
  %v3299 = vpop.permute.xlu0 %3298
  %v3301 = vadd.f32 %v3291, %v3299
  %v3302 = vtanh.pop %v3301
  %3304 = vrot.lane.b32.xlu0 %v3302, 48
  %v3305 = vpop.permute.xlu0 %3304
  %v3307 = vmul.f32 %v3284, %v3305
  %v3308 = vxor.u32 %v3265, 2147483648
  %v3309 = vmul.f32 %v3308, 1.442695
  %v3310 = vpow.pop %v3309
  %v3311 = vadd.f32 %v3310, 1.0
  %v3312 = vrcp.pop %v3311
  %v3313 = vmul.f32 %v3311, %v3312
  %v3314 = vsub.f32 1.0, %v3313
  %v3315 = vmul.f32 %v3312, %v3314
  %v3316 = vadd.f32 %v3312, %v3315
  %vm3317 = vweird.f32 %v3311
  %vm3318 = vweird.f32 %v3312
  %vm3319 = vmor %vm3317, %vm3318
  %v3320 = vsel %vm3319, %v3312, %v3316
  %v3321 = vand.u32 2147483647, %v3311
  %vm3322 = vcmp.eq.f32.partialorder %v3321, 8.507059e+37
  %v3323 = vand.u32 %v3311, 2147483648
  %v3324 = vor.u32 1.1754944e-38, %v3323
  %v3325 = vsel %vm3322, %v3324, %v3320
  %v3326 = vmul.f32 1.0, %v3325
  %v3327 = vtanh.pop %v3265
  %v3329 = vrot.slane %v3196, 2
  %v3331 = vmul.f32 %v3326, %v3329
  %3333 = vrot.lane.b32.xlu0 %v3327, 80
  %v3334 = vpop.permute.xlu0 %3333
  %v3336 = vmul.f32 %v3326, %v3334
  %3338 = vrot.lane.b32.xlu0 %v3336, 24
  %v3339 = vpop.permute.xlu0 %3338
  %v3341 = vadd.f32 %v3331, %v3339
  %v3342 = vtanh.pop %v3341
  %3344 = vrot.lane.b32.xlu0 %v3342, 48
  %v3345 = vpop.permute.xlu0 %3344
  %v3347 = vmul.f32 %v3326, %v3345
  %vm3348 = vcmp.gt.s32.totalorder %v2819, 2
  %vm3349 = vcmp.gt.s32.totalorder %v2819, 3
  %v3350 = vsel %vm3348, 1, 0
  %3351 = vset.pattern.permute.xlu0 0
  %3352 = vperm.xlu0 %3351, %v3350
  %v3353 = vpop.permute.xlu0 %3352
  %vm3354 = vcmp.eq.s32.totalorder %v3353, 1
  %v3356 = vrot.slane %v3307, 4
  %3357 = vrot.lane.b32.xlu0 %v3356, 56
  %v3358 = vpop.permute.xlu0 %3357
  %v3360 = vsel %vm3354, %v3358, %v3176
  %v3362 = vrot.slane %v3301, 4
  %3363 = vrot.lane.b32.xlu0 %v3362, 104
  %v3364 = vpop.permute.xlu0 %3363
  %v3366 = vsel %vm3354, %v3364, %v3185
  %v3367 = vsel %vm3349, 1, 0
  %3368 = vset.pattern.permute.xlu0 0
  %3369 = vperm.xlu0 %3368, %v3367
  %v3370 = vpop.permute.xlu0 %3369
  %vm3371 = vcmp.eq.s32.totalorder %v3370, 1
  %v3373 = vrot.slane %v3347, 6
  %3374 = vrot.lane.b32.xlu0 %v3373, 56
  %v3375 = vpop.permute.xlu0 %3374
  %3378 = vrot.lane.b32.xlu0 %v3195, 56
  %v3379 = vpop.permute.xlu0 %3378
  %v3381 = vsel %vm3371, %v3375, %v3379
  %v3383 = vrot.slane %v3341, 6
  %3384 = vrot.lane.b32.xlu0 %v3383, 104
  %v3385 = vpop.permute.xlu0 %3384
  %3387 = vrot.lane.b32.xlu0 %v3196, 104
  %v3388 = vpop.permute.xlu0 %3387
  %v3390 = vsel %vm3371, %v3385, %v3388
  %v3391 = vsel %vm3354, %v3358, 0.0
  %3393 = vrot.lane.b32.xlu0 %v3391, 72
  %v3394 = vpop.permute.xlu0 %3393
  %v3396 = vadd.f32 %v3202, %v3394
  %v3397 = vsel %vm3371, %v3375, 0.0
  %v3398 = vadd.f32 %v3208, %v3397
  %v3399 = vsel %vm3354, %v3358, -inf
  %3401 = vrot.lane.b32.xlu0 %v3399, 72
  %v3402 = vpop.permute.xlu0 %3401
  %v3404 = vmax.f32 %v3214, %v3402
  %v3405 = vsel %vm3371, %v3375, -inf
  %v3406 = vmax.f32 %v3220, %v3405
  %v3407 = vpack.c.bf16 %v3360, %v3360
  %v3409 = vsel %vm2883, %v3407, 0
  %3411 = vmatpush.bf16.msra.mxu0 0
  %3412 = vmatpush.bf16.msra.mxu0 0
  %3413 = vmatpush.bf16.msra.mxu0 0
  %3414 = vmatpush.bf16.msra.mxu0 0
  %3415 = vmatpush.bf16.msra.mxu0 0
  %3416 = vmatpush.bf16.msra.mxu0 0
  %3417 = vmatpush.bf16.msra.mxu0 %v2888
  %3418 = vmatpush.bf16.msra.mxu0 %v2880
  %3419 = vmatmul.bf16.gmra.mxu0 %v3409
  %v3420 = vpop.f32.mrf.mxu0
  %v3421 = vadd.f32 0.0, %v3420
  %v3422 = vpop.f32.mrf.mxu0
  %3423 = vdwg.mxu0
  %v3425 = vrot.slane %v3421, 2
  %v3427 = vadd.f32 %v2847, %v3425
  %v3428 = vpack.c.bf16 %v3381, %v3381
  %v3430 = vsel %vm2883, %v3428, 0
  %3432 = vmatpush.bf16.msra.mxu0 0
  %3433 = vmatpush.bf16.msra.mxu0 0
  %3434 = vmatpush.bf16.msra.mxu0 0
  %3435 = vmatpush.bf16.msra.mxu0 0
  %3436 = vmatpush.bf16.msra.mxu0 0
  %3437 = vmatpush.bf16.msra.mxu0 0
  %3438 = vmatpush.bf16.msra.mxu0 %v2914
  %3439 = vmatpush.bf16.msra.mxu0 %v2910
  %3440 = vmatmul.bf16.gmra.mxu0 %v3430
  %v3441 = vpop.f32.mrf.mxu0
  %v3442 = vadd.f32 0.0, %v3441
  %v3443 = vpop.f32.mrf.mxu0
  %3444 = vdwg.mxu0
  %v3446 = vrot.slane %v3442, 4
  %v3448 = vadd.f32 %v2870, %v3446
  %v3449 = vxor.u32 %v3427, 2147483648
  %v3450 = vmul.f32 %v3449, 1.442695
  %v3451 = vpow.pop %v3450
  %v3452 = vadd.f32 %v3451, 1.0
  %v3453 = vrcp.pop %v3452
  %v3454 = vmul.f32 %v3452, %v3453
  %v3455 = vsub.f32 1.0, %v3454
  %v3456 = vmul.f32 %v3453, %v3455
  %v3457 = vadd.f32 %v3453, %v3456
  %vm3458 = vweird.f32 %v3452
  %vm3459 = vweird.f32 %v3453
  %vm3460 = vmor %vm3458, %vm3459
  %v3461 = vsel %vm3460, %v3453, %v3457
  %v3462 = vand.u32 2147483647, %v3452
  %vm3463 = vcmp.eq.f32.partialorder %v3462, 8.507059e+37
  %v3464 = vand.u32 %v3452, 2147483648
  %v3465 = vor.u32 1.1754944e-38, %v3464
  %v3466 = vsel %vm3463, %v3465, %v3461
  %v3467 = vmul.f32 1.0, %v3466
  %v3468 = vtanh.pop %v3427
  %v3470 = vrot.slane %v3366, 2
  %3471 = vrot.lane.b32.xlu0 %v3470, 24
  %v3472 = vpop.permute.xlu0 %3471
  %v3474 = vmul.f32 %v3467, %v3472
  %3476 = vrot.lane.b32.xlu0 %v3468, 80
  %v3477 = vpop.permute.xlu0 %3476
  %v3479 = vmul.f32 %v3467, %v3477
  %3481 = vrot.lane.b32.xlu0 %v3479, 24
  %v3482 = vpop.permute.xlu0 %3481
  %v3484 = vadd.f32 %v3474, %v3482
  %v3485 = vtanh.pop %v3484
  %3487 = vrot.lane.b32.xlu0 %v3485, 48
  %v3488 = vpop.permute.xlu0 %3487
  %v3490 = vmul.f32 %v3467, %v3488
  %v3491 = vxor.u32 %v3448, 2147483648
  %v3492 = vmul.f32 %v3491, 1.442695
  %v3493 = vpow.pop %v3492
  %v3494 = vadd.f32 %v3493, 1.0
  %v3495 = vrcp.pop %v3494
  %v3496 = vmul.f32 %v3494, %v3495
  %v3497 = vsub.f32 1.0, %v3496
  %v3498 = vmul.f32 %v3495, %v3497
  %v3499 = vadd.f32 %v3495, %v3498
  %vm3500 = vweird.f32 %v3494
  %vm3501 = vweird.f32 %v3495
  %vm3502 = vmor %vm3500, %vm3501
  %v3503 = vsel %vm3502, %v3495, %v3499
  %v3504 = vand.u32 2147483647, %v3494
  %vm3505 = vcmp.eq.f32.partialorder %v3504, 8.507059e+37
  %v3506 = vand.u32 %v3494, 2147483648
  %v3507 = vor.u32 1.1754944e-38, %v3506
  %v3508 = vsel %vm3505, %v3507, %v3503
  %v3509 = vmul.f32 1.0, %v3508
  %v3510 = vtanh.pop %v3448
  %v3512 = vrot.slane %v3390, 4
  %3513 = vrot.lane.b32.xlu0 %v3512, 24
  %v3514 = vpop.permute.xlu0 %3513
  %v3516 = vmul.f32 %v3509, %v3514
  %3518 = vrot.lane.b32.xlu0 %v3510, 80
  %v3519 = vpop.permute.xlu0 %3518
  %v3521 = vmul.f32 %v3509, %v3519
  %3523 = vrot.lane.b32.xlu0 %v3521, 24
  %v3524 = vpop.permute.xlu0 %3523
  %v3526 = vadd.f32 %v3516, %v3524
  %v3527 = vtanh.pop %v3526
  %3529 = vrot.lane.b32.xlu0 %v3527, 48
  %v3530 = vpop.permute.xlu0 %3529
  %v3532 = vmul.f32 %v3509, %v3530
  %v3534 = vrot.slane %v3490, 6
  %3535 = vrot.lane.b32.xlu0 %v3534, 56
  %v3536 = vpop.permute.xlu0 %3535
  %v3538 = vsel %vm3371, %v3536, %v3360
  %v3540 = vrot.slane %v3484, 6
  %3541 = vrot.lane.b32.xlu0 %v3540, 104
  %v3542 = vpop.permute.xlu0 %3541
  %v3544 = vsel %vm3371, %v3542, %v3366
  %v3546 = vrot.slane %v3532, 4
  %3547 = vrot.lane.b32.xlu0 %v3546, 56
  %v3548 = vpop.permute.xlu0 %3547
  %v3550 = vsel %vm3354, %v3548, %v3381
  %v3552 = vrot.slane %v3526, 4
  %3553 = vrot.lane.b32.xlu0 %v3552, 104
  %v3554 = vpop.permute.xlu0 %3553
  %v3556 = vsel %vm3354, %v3554, %v3390
  %v3557 = vsel %vm3371, %v3536, 0.0
  %3559 = vrot.lane.b32.xlu0 %v3557, 72
  %v3560 = vpop.permute.xlu0 %3559
  %v3562 = vadd.f32 %v3396, %v3560
  %v3563 = vsel %vm3354, %v3548, 0.0
  %v3564 = vadd.f32 %v3398, %v3563
  %v3565 = vsel %vm3371, %v3536, -inf
  %3567 = vrot.lane.b32.xlu0 %v3565, 72
  %v3568 = vpop.permute.xlu0 %3567
  %v3570 = vmax.f32 %v3404, %v3568
  %v3571 = vsel %vm3354, %v3548, -inf
  %v3572 = vmax.f32 %v3406, %v3571
  %v3573 = vpack.c.bf16 %v3538, %v3538
  %v3575 = vsel %vm2883, %v3573, 0
  %3577 = vmatpush.bf16.msra.mxu0 0
  %3578 = vmatpush.bf16.msra.mxu0 0
  %3579 = vmatpush.bf16.msra.mxu0 0
  %3580 = vmatpush.bf16.msra.mxu0 0
  %3581 = vmatpush.bf16.msra.mxu0 0
  %3582 = vmatpush.bf16.msra.mxu0 0
  %3583 = vmatpush.bf16.msra.mxu0 %v2888
  %3584 = vmatpush.bf16.msra.mxu0 %v2880
  %3585 = vmatmul.bf16.gmra.mxu0 %v3575
  %v3586 = vpop.f32.mrf.mxu0
  %v3587 = vadd.f32 0.0, %v3586
  %v3588 = vpop.f32.mrf.mxu0
  %3589 = vdwg.mxu0
  %v3590 = vadd.f32 %v2849, %v3587
  %v3591 = vpack.c.bf16 %v3550, %v3550
  %v3593 = vsel %vm2883, %v3591, 0
  %3595 = vmatpush.bf16.msra.mxu0 0
  %3596 = vmatpush.bf16.msra.mxu0 0
  %3597 = vmatpush.bf16.msra.mxu0 0
  %3598 = vmatpush.bf16.msra.mxu0 0
  %3599 = vmatpush.bf16.msra.mxu0 0
  %3600 = vmatpush.bf16.msra.mxu0 0
  %3601 = vmatpush.bf16.msra.mxu0 %v2914
  %3602 = vmatpush.bf16.msra.mxu0 %v2910
  %3603 = vmatmul.bf16.gmra.mxu0 %v3593
  %v3604 = vpop.f32.mrf.mxu0
  %v3605 = vadd.f32 0.0, %v3604
  %v3606 = vpop.f32.mrf.mxu0
  %3607 = vdwg.mxu0
  %v3609 = vrot.slane %v3605, 6
  %v3611 = vadd.f32 %v2870, %v3609
  %v3612 = vxor.u32 %v3590, 2147483648
  %v3613 = vmul.f32 %v3612, 1.442695
  %v3614 = vpow.pop %v3613
  %v3615 = vadd.f32 %v3614, 1.0
  %v3616 = vrcp.pop %v3615
  %v3617 = vmul.f32 %v3615, %v3616
  %v3618 = vsub.f32 1.0, %v3617
  %v3619 = vmul.f32 %v3616, %v3618
  %v3620 = vadd.f32 %v3616, %v3619
  %vm3621 = vweird.f32 %v3615
  %vm3622 = vweird.f32 %v3616
  %vm3623 = vmor %vm3621, %vm3622
  %v3624 = vsel %vm3623, %v3616, %v3620
  %v3625 = vand.u32 2147483647, %v3615
  %vm3626 = vcmp.eq.f32.partialorder %v3625, 8.507059e+37
  %v3627 = vand.u32 %v3615, 2147483648
  %v3628 = vor.u32 1.1754944e-38, %v3627
  %v3629 = vsel %vm3626, %v3628, %v3624
  %v3630 = vmul.f32 1.0, %v3629
  %v3631 = vtanh.pop %v3590
  %3633 = vrot.lane.b32.xlu0 %v3544, 24
  %v3634 = vpop.permute.xlu0 %3633
  %v3636 = vmul.f32 %v3630, %v3634
  %3638 = vrot.lane.b32.xlu0 %v3631, 80
  %v3639 = vpop.permute.xlu0 %3638
  %v3641 = vmul.f32 %v3630, %v3639
  %3643 = vrot.lane.b32.xlu0 %v3641, 24
  %v3644 = vpop.permute.xlu0 %3643
  %v3646 = vadd.f32 %v3636, %v3644
  %v3647 = vtanh.pop %v3646
  %3649 = vrot.lane.b32.xlu0 %v3647, 48
  %v3650 = vpop.permute.xlu0 %3649
  %v3652 = vmul.f32 %v3630, %v3650
  %v3653 = vxor.u32 %v3611, 2147483648
  %v3654 = vmul.f32 %v3653, 1.442695
  %v3655 = vpow.pop %v3654
  %v3656 = vadd.f32 %v3655, 1.0
  %v3657 = vrcp.pop %v3656
  %v3658 = vmul.f32 %v3656, %v3657
  %v3659 = vsub.f32 1.0, %v3658
  %v3660 = vmul.f32 %v3657, %v3659
  %v3661 = vadd.f32 %v3657, %v3660
  %vm3662 = vweird.f32 %v3656
  %vm3663 = vweird.f32 %v3657
  %vm3664 = vmor %vm3662, %vm3663
  %v3665 = vsel %vm3664, %v3657, %v3661
  %v3666 = vand.u32 2147483647, %v3656
  %vm3667 = vcmp.eq.f32.partialorder %v3666, 8.507059e+37
  %v3668 = vand.u32 %v3656, 2147483648
  %v3669 = vor.u32 1.1754944e-38, %v3668
  %v3670 = vsel %vm3667, %v3669, %v3665
  %v3671 = vmul.f32 1.0, %v3670
  %v3672 = vtanh.pop %v3611
  %v3674 = vrot.slane %v3556, 6
  %3675 = vrot.lane.b32.xlu0 %v3674, 24
  %v3676 = vpop.permute.xlu0 %3675
  %v3678 = vmul.f32 %v3671, %v3676
  %3680 = vrot.lane.b32.xlu0 %v3672, 80
  %v3681 = vpop.permute.xlu0 %3680
  %v3683 = vmul.f32 %v3671, %v3681
  %3685 = vrot.lane.b32.xlu0 %v3683, 24
  %v3686 = vpop.permute.xlu0 %3685
  %v3688 = vadd.f32 %v3678, %v3686
  %v3689 = vtanh.pop %v3688
  %3691 = vrot.lane.b32.xlu0 %v3689, 48
  %v3692 = vpop.permute.xlu0 %3691
  %v3694 = vmul.f32 %v3671, %v3692
  %3696 = vrot.lane.b32.xlu0 %v3538, 72
  %v3697 = vpop.permute.xlu0 %3696
  %v3699 = vsel %vm3190, %v3652, %v3697
  %v3700 = vsel %vm3190, %v3646, %v3634
  %v3702 = vrot.slane %v3694, 2
  %3703 = vrot.lane.b32.xlu0 %v3702, 56
  %v3704 = vpop.permute.xlu0 %3703
  %v3706 = vsel %vm3166, %v3704, %v3550
  %v3708 = vrot.slane %v3688, 2
  %3709 = vrot.lane.b32.xlu0 %v3708, 104
  %v3710 = vpop.permute.xlu0 %3709
  %v3712 = vsel %vm3166, %v3710, %v3556
  %v3713 = vsel %vm3190, %v3652, 0.0
  %v3714 = vadd.f32 %v3562, %v3713
  %v3715 = vsel %vm3166, %v3704, 0.0
  %v3716 = vadd.f32 %v3564, %v3715
  %v3717 = vsel %vm3190, %v3652, -inf
  %v3718 = vmax.f32 %v3570, %v3717
  %v3719 = vsel %vm3166, %v3704, -inf
  %v3720 = vmax.f32 %v3572, %v3719
  %v3721 = vpack.c.bf16 %v3699, %v3699
  %3723 = vrot.lane.b32.xlu0 %v3721, 56
  %v3724 = vpop.permute.xlu0 %3723
  %v3726 = vsel %vm2883, %v3724, 0
  %3728 = vmatpush.bf16.msra.mxu0 0
  %3729 = vmatpush.bf16.msra.mxu0 0
  %3730 = vmatpush.bf16.msra.mxu0 0
  %3731 = vmatpush.bf16.msra.mxu0 0
  %3732 = vmatpush.bf16.msra.mxu0 0
  %3733 = vmatpush.bf16.msra.mxu0 0
  %3734 = vmatpush.bf16.msra.mxu0 %v2888
  %3735 = vmatpush.bf16.msra.mxu0 %v2880
  %3736 = vmatmul.bf16.gmra.mxu0 %v3726
  %v3737 = vpop.f32.mrf.mxu0
  %v3738 = vadd.f32 0.0, %v3737
  %v3739 = vpop.f32.mrf.mxu0
  %3740 = vdwg.mxu0
  %v3742 = vrot.slane %v3738, 6
  %v3744 = vadd.f32 %v2849, %v3742
  %v3745 = vpack.c.bf16 %v3706, %v3706
  %v3747 = vsel %vm2883, %v3745, 0
  %3749 = vmatpush.bf16.msra.mxu0 0
  %3750 = vmatpush.bf16.msra.mxu0 0
  %3751 = vmatpush.bf16.msra.mxu0 0
  %3752 = vmatpush.bf16.msra.mxu0 0
  %3753 = vmatpush.bf16.msra.mxu0 0
  %3754 = vmatpush.bf16.msra.mxu0 0
  %3755 = vmatpush.bf16.msra.mxu0 %v2914
  %3756 = vmatpush.bf16.msra.mxu0 %v2910
  %3757 = vmatmul.bf16.gmra.mxu0 %v3747
  %v3758 = vpop.f32.mrf.mxu0
  %v3759 = vadd.f32 0.0, %v3758
  %v3760 = vpop.f32.mrf.mxu0
  %3761 = vdwg.mxu0
  %v3762 = vadd.f32 %v2870, %v3759
  %v3763 = vxor.u32 %v3744, 2147483648
  %v3764 = vmul.f32 %v3763, 1.442695
  %v3765 = vpow.pop %v3764
  %v3766 = vadd.f32 %v3765, 1.0
  %v3767 = vrcp.pop %v3766
  %v3768 = vmul.f32 %v3766, %v3767
  %v3769 = vsub.f32 1.0, %v3768
  %v3770 = vmul.f32 %v3767, %v3769
  %v3771 = vadd.f32 %v3767, %v3770
  %vm3772 = vweird.f32 %v3766
  %vm3773 = vweird.f32 %v3767
  %vm3774 = vmor %vm3772, %vm3773
  %v3775 = vsel %vm3774, %v3767, %v3771
  %v3776 = vand.u32 2147483647, %v3766
  %vm3777 = vcmp.eq.f32.partialorder %v3776, 8.507059e+37
  %v3778 = vand.u32 %v3766, 2147483648
  %v3779 = vor.u32 1.1754944e-38, %v3778
  %v3780 = vsel %vm3777, %v3779, %v3775
  %v3781 = vmul.f32 1.0, %v3780
  %v3782 = vtanh.pop %v3744
  %v3784 = vrot.slane %v3700, 6
  %v3786 = vmul.f32 %v3781, %v3784
  %3788 = vrot.lane.b32.xlu0 %v3782, 80
  %v3789 = vpop.permute.xlu0 %3788
  %v3791 = vmul.f32 %v3781, %v3789
  %3793 = vrot.lane.b32.xlu0 %v3791, 24
  %v3794 = vpop.permute.xlu0 %3793
  %v3796 = vadd.f32 %v3786, %v3794
  %v3797 = vtanh.pop %v3796
  %3799 = vrot.lane.b32.xlu0 %v3797, 48
  %v3800 = vpop.permute.xlu0 %3799
  %v3802 = vmul.f32 %v3781, %v3800
  %v3803 = vxor.u32 %v3762, 2147483648
  %v3804 = vmul.f32 %v3803, 1.442695
  %v3805 = vpow.pop %v3804
  %v3806 = vadd.f32 %v3805, 1.0
  %v3807 = vrcp.pop %v3806
  %v3808 = vmul.f32 %v3806, %v3807
  %v3809 = vsub.f32 1.0, %v3808
  %v3810 = vmul.f32 %v3807, %v3809
  %v3811 = vadd.f32 %v3807, %v3810
  %vm3812 = vweird.f32 %v3806
  %vm3813 = vweird.f32 %v3807
  %vm3814 = vmor %vm3812, %vm3813
  %v3815 = vsel %vm3814, %v3807, %v3811
  %v3816 = vand.u32 2147483647, %v3806
  %vm3817 = vcmp.eq.f32.partialorder %v3816, 8.507059e+37
  %v3818 = vand.u32 %v3806, 2147483648
  %v3819 = vor.u32 1.1754944e-38, %v3818
  %v3820 = vsel %vm3817, %v3819, %v3815
  %v3821 = vmul.f32 1.0, %v3820
  %v3822 = vtanh.pop %v3762
  %3824 = vrot.lane.b32.xlu0 %v3712, 24
  %v3825 = vpop.permute.xlu0 %3824
  %v3827 = vmul.f32 %v3821, %v3825
  %3829 = vrot.lane.b32.xlu0 %v3822, 80
  %v3830 = vpop.permute.xlu0 %3829
  %v3832 = vmul.f32 %v3821, %v3830
  %3834 = vrot.lane.b32.xlu0 %v3832, 24
  %v3835 = vpop.permute.xlu0 %3834
  %v3837 = vadd.f32 %v3827, %v3835
  %v3838 = vtanh.pop %v3837
  %3840 = vrot.lane.b32.xlu0 %v3838, 48
  %v3841 = vpop.permute.xlu0 %3840
  %v3843 = vmul.f32 %v3821, %v3841
  %v3845 = vrot.slane %v3802, 2
  %3846 = vrot.lane.b32.xlu0 %v3845, 56
  %v3847 = vpop.permute.xlu0 %3846
  %3850 = vrot.lane.b32.xlu0 %v3699, 56
  %v3851 = vpop.permute.xlu0 %3850
  %v3853 = vsel %vm3020, %v3847, %v3851
  %3855 = vrot.lane.b32.xlu0 %v3706, 72
  %v3856 = vpop.permute.xlu0 %3855
  %v3858 = vsel %vm3013, %v3843, %v3856
  %v3859 = vsel %vm3020, %v3847, 0.0
  %3861 = vrot.lane.b32.xlu0 %v3859, 72
  %v3862 = vpop.permute.xlu0 %3861
  %v3864 = vadd.f32 %v3714, %v3862
  %v3865 = vsel %vm3013, %v3843, 0.0
  %3867 = vrot.lane.b32.xlu0 %v3865, 56
  %v3868 = vpop.permute.xlu0 %3867
  %v3870 = vadd.f32 %v3716, %v3868
  %v3871 = vsel %vm3020, %v3847, -inf
  %3873 = vrot.lane.b32.xlu0 %v3871, 72
  %v3874 = vpop.permute.xlu0 %3873
  %v3876 = vmax.f32 %v3718, %v3874
  %v3877 = vsel %vm3013, %v3843, -inf
  %3879 = vrot.lane.b32.xlu0 %v3877, 56
  %v3880 = vpop.permute.xlu0 %3879
  %v3882 = vmax.f32 %v3720, %v3880
  %v3883 = vcvt.s32.f32 %v2819
  %v3884 = vrcp.pop %v3883
  %v3885 = vmul.f32 %v3883, %v3884
  %v3886 = vsub.f32 1.0, %v3885
  %v3887 = vmul.f32 %v3884, %v3886
  %v3888 = vadd.f32 %v3884, %v3887
  %vm3889 = vweird.f32 %v3883
  %vm3890 = vweird.f32 %v3884
  %vm3891 = vmor %vm3889, %vm3890
  %v3892 = vsel %vm3891, %v3884, %v3888
  %v3893 = vand.u32 2147483647, %v3883
  %vm3894 = vcmp.eq.f32.partialorder %v3893, 8.507059e+37
  %v3895 = vand.u32 %v3883, 2147483648
  %v3896 = vor.u32 1.1754944e-38, %v3895
  %v3897 = vsel %vm3894, %v3896, %v3892
  %v3898 = vmul.f32 1.0, %v3897
  %3900 = vset.pattern.permute.xlu0 0
  %3901 = vperm.xlu0 %3900, %v3898
  %v3902 = vpop.permute.xlu0 %3901
  %v3904 = vmul.f32 %v3864, %v3902
  %v3905 = vmul.f32 %v3870, %v3902
  %3907 = vrot.lane.b32.xlu0 %v3858, 56
  %v3908 = vpop.permute.xlu0 %3907
  %3911 = vrot.lane.b32.xlu0 %v3853, 24
  %v3912 = vpop.permute.xlu0 %3911
  %3915 = vrot.lane.b32.xlu0 %v3904, 104
  %v3916 = vpop.permute.xlu0 %3915
  %3919 = vrot.lane.b32.xlu0 %v3905, 72
  %v3920 = vpop.permute.xlu0 %3919
  %3923 = vrot.lane.b32.xlu0 %v3876, 24
  %v3924 = vpop.permute.xlu0 %3923
  %3927 = vrot.lane.b32.xlu0 %v3882, 120
  %v3928 = vpop.permute.xlu0 %3927
  %v3930 = vsel %vm2883, %v3908, %v3912
  %vm3931 = vcmask 392192
  %v3932 = vsel %vm3931, %v3930, %v3916
  %vm3933 = vcmask 588800
  %v3934 = vsel %vm3933, %v3932, %v3920
  %v3935 = vsel %vm2802, %v3934, %v3924
  %vm3936 = vcmask 982016
  %v3937 = vsel %vm3936, %v3935, %v3928
  %v3938 = vld [vmem:[%s14] sm:$0xff]
  %v3939 = vld [vmem:[%s14 + $0x8] sm:$0xff]
  %v3940 = vld [vmem:[%s14 + $0x10] sm:$0xff]
  %v3941 = vld [vmem:[%s14 + $0x18] sm:$0xff]
  %v3942 = vld [vmem:[%s15] sm:$0xff]
  %v3943 = vld [vmem:[%s15 + $0x8] sm:$0xff]
  %v3944 = vld [vmem:[%s15 + $0x10] sm:$0xff]
  %v3945 = vld [vmem:[%s15 + $0x18] sm:$0xff]
  %v3946 = vld [vmem:[%s15 + $0x20] sm:$0xff]
  %v3947 = vld [vmem:[%s15 + $0x28] sm:$0xff]
  %v3948 = vld [vmem:[%s15 + $0x30] sm:$0xff]
  %v3949 = vld [vmem:[%s15 + $0x38] sm:$0xff]
  %v3950 = vld [vmem:[%s15 + $0x40] sm:$0xff]
  %v3951 = vld [vmem:[%s15 + $0x48] sm:$0xff]
  %v3952 = vld [vmem:[%s15 + $0x50] sm:$0xff]
  %v3953 = vld [vmem:[%s15 + $0x58] sm:$0xff]
  %v3954 = vld [vmem:[%s15 + $0x60] sm:$0xff]
  %v3955 = vld [vmem:[%s15 + $0x68] sm:$0xff]
  %v3956 = vld [vmem:[%s15 + $0x70] sm:$0xff]
  %v3957 = vld [vmem:[%s15 + $0x78] sm:$0xff]
  %v3958 = vld [vmem:[%s15 + $0x80] sm:$0xff]
  %v3959 = vld [vmem:[%s15 + $0x88] sm:$0xff]
  %v3960 = vld [vmem:[%s15 + $0x90] sm:$0xff]
  %v3961 = vld [vmem:[%s15 + $0x98] sm:$0xff]
  %v3962 = vld [vmem:[%s15 + $0xa0] sm:$0xff]
  %v3963 = vld [vmem:[%s15 + $0xa8] sm:$0xff]
  %v3964 = vld [vmem:[%s15 + $0xb0] sm:$0xff]
  %v3965 = vld [vmem:[%s15 + $0xb8] sm:$0xff]
  %v3967 = vsel %vm2800, %v2804, 0
  %3969 = vmatpush.msra.mxu0 %v3957
  %3970 = vmatpush.msra.mxu0 %v3956
  %3971 = vmatpush.msra.mxu0 %v3955
  %3972 = vmatpush.msra.mxu0 %v3954
  %3973 = vmatpush.msra.mxu0 %v3953
  %3974 = vmatpush.msra.mxu0 %v3952
  %3975 = vmatpush.msra.mxu0 %v3951
  %3976 = vmatpush.msra.mxu0 %v3950
  %3977 = vmatpush.msra.mxu0 %v3949
  %3978 = vmatpush.msra.mxu0 %v3948
  %3979 = vmatpush.msra.mxu0 %v3947
  %3980 = vmatpush.msra.mxu0 %v3946
  %3981 = vmatpush.msra.mxu0 %v3945
  %3982 = vmatpush.msra.mxu0 %v3944
  %3983 = vmatpush.msra.mxu0 %v3943
  %3984 = vmatpush.msra.mxu0 %v3942
  %3985 = vmatmul.f32.gmra.mxu0 %v2803
  %v3986 = vpop.f32.mrf.mxu0
  %v3987 = vadd.f32 0.0, %v3986
  %3988 = vdwg.mxu0
  %3989 = vmatpush.msra.mxu0 0.0
  %3990 = vmatpush.msra.mxu0 0.0
  %3991 = vmatpush.msra.mxu0 0.0
  %3992 = vmatpush.msra.mxu0 0.0
  %3993 = vmatpush.msra.mxu0 0.0
  %3994 = vmatpush.msra.mxu0 0.0
  %3995 = vmatpush.msra.mxu0 0.0
  %3996 = vmatpush.msra.mxu0 0.0
  %3997 = vmatpush.msra.mxu0 %v3965
  %3998 = vmatpush.msra.mxu0 %v3964
  %3999 = vmatpush.msra.mxu0 %v3963
  %4000 = vmatpush.msra.mxu0 %v3962
  %4001 = vmatpush.msra.mxu0 %v3961
  %4002 = vmatpush.msra.mxu0 %v3960
  %4003 = vmatpush.msra.mxu0 %v3959
  %4004 = vmatpush.msra.mxu0 %v3958
  %4005 = vmatmul.f32.gmra.mxu0 %v3967
  %v4006 = vpop.f32.mrf.mxu0
  %v4007 = vadd.f32 %v3987, %v4006
  %4008 = vdwg.mxu0
  %v4010 = vrot.slane %v628, 6
  %4011 = vrot.lane.b32.xlu0 %v4010, 32
  %v4012 = vpop.permute.xlu0 %4011
  %v4013 = vsel %vm124, %v4012, 0
  %4015 = vmatpush.msra.mxu0 0.0
  %4016 = vmatpush.msra.mxu0 0.0
  %4017 = vmatpush.msra.mxu0 0.0
  %4018 = vmatpush.msra.mxu0 0.0
  %4019 = vmatpush.msra.mxu0 0.0
  %4020 = vmatpush.msra.mxu0 0.0
  %4021 = vmatpush.msra.mxu0 0.0
  %4022 = vmatpush.msra.mxu0 0.0
  %4023 = vmatpush.msra.mxu0 0.0
  %4024 = vmatpush.msra.mxu0 0.0
  %4025 = vmatpush.msra.mxu0 0.0
  %4026 = vmatpush.msra.mxu0 0.0
  %4027 = vmatpush.msra.mxu0 %v3941
  %4028 = vmatpush.msra.mxu0 %v3940
  %4029 = vmatpush.msra.mxu0 %v3939
  %4030 = vmatpush.msra.mxu0 %v3938
  %4031 = vmatmul.f32.gmra.mxu0 %v4013
  %v4032 = vpop.f32.mrf.mxu0
  %v4033 = vadd.f32 %v4007, %v4032
  %4034 = vdwg.mxu0
  %v4035 = vld [vmem:[%s16] sm:$0xff]
  %v4036 = vld [vmem:[%s16 + $0x8] sm:$0xff]
  %v4037 = vld [vmem:[%s16 + $0x10] sm:$0xff]
  %v4038 = vld [vmem:[%s16 + $0x18] sm:$0xff]
  %v4039 = vld [vmem:[%s16 + $0x20] sm:$0xff]
  %v4040 = vld [vmem:[%s16 + $0x28] sm:$0xff]
  %v4041 = vld [vmem:[%s16 + $0x30] sm:$0xff]
  %v4042 = vld [vmem:[%s16 + $0x38] sm:$0xff]
  %v4043 = vld [vmem:[%s16 + $0x40] sm:$0xff]
  %v4044 = vld [vmem:[%s16 + $0x48] sm:$0xff]
  %v4045 = vld [vmem:[%s16 + $0x50] sm:$0xff]
  %v4046 = vld [vmem:[%s16 + $0x58] sm:$0xff]
  %v4047 = vld [vmem:[%s16 + $0x60] sm:$0xff]
  %v4048 = vld [vmem:[%s16 + $0x68] sm:$0xff]
  %v4049 = vld [vmem:[%s16 + $0x70] sm:$0xff]
  %v4050 = vld [vmem:[%s16 + $0x78] sm:$0xff]
  %v4051 = vld [vmem:[%s16 + $0x80] sm:$0xff]
  %v4052 = vld [vmem:[%s16 + $0x88] sm:$0xff]
  %v4053 = vsel %vm664, %v3928, 0
  %4055 = vmatpush.msra.mxu0 %v4050
  %4056 = vmatpush.msra.mxu0 %v4049
  %4057 = vmatpush.msra.mxu0 %v4048
  %4058 = vmatpush.msra.mxu0 %v4047
  %4059 = vmatpush.msra.mxu0 %v4046
  %4060 = vmatpush.msra.mxu0 %v4045
  %4061 = vmatpush.msra.mxu0 %v4044
  %4062 = vmatpush.msra.mxu0 %v4043
  %4063 = vmatpush.msra.mxu0 %v4042
  %4064 = vmatpush.msra.mxu0 %v4041
  %4065 = vmatpush.msra.mxu0 %v4040
  %4066 = vmatpush.msra.mxu0 %v4039
  %4067 = vmatpush.msra.mxu0 %v4038
  %4068 = vmatpush.msra.mxu0 %v4037
  %4069 = vmatpush.msra.mxu0 %v4036
  %4070 = vmatpush.msra.mxu0 %v4035
  %4071 = vmatmul.f32.gmra.mxu0 %v3937
  %v4072 = vpop.f32.mrf.mxu0
  %v4073 = vadd.f32 0.0, %v4072
  %4074 = vdwg.mxu0
  %4075 = vmatpush.msra.mxu0 0.0
  %4076 = vmatpush.msra.mxu0 0.0
  %4077 = vmatpush.msra.mxu0 0.0
  %4078 = vmatpush.msra.mxu0 0.0
  %4079 = vmatpush.msra.mxu0 0.0
  %4080 = vmatpush.msra.mxu0 0.0
  %4081 = vmatpush.msra.mxu0 0.0
  %4082 = vmatpush.msra.mxu0 0.0
  %4083 = vmatpush.msra.mxu0 0.0
  %4084 = vmatpush.msra.mxu0 0.0
  %4085 = vmatpush.msra.mxu0 0.0
  %4086 = vmatpush.msra.mxu0 0.0
  %4087 = vmatpush.msra.mxu0 0.0
  %4088 = vmatpush.msra.mxu0 0.0
  %4089 = vmatpush.msra.mxu0 %v4052
  %4090 = vmatpush.msra.mxu0 %v4051
  %4091 = vmatmul.f32.gmra.mxu0 %v4053
  %v4092 = vpop.f32.mrf.mxu0
  %v4093 = vadd.f32 %v4073, %v4092
  %4094 = vdwg.mxu0
  %v4095 = vadd.f32 %v4033, %v4093
  %v4096 = vld [vmem:[%s17] sm:$0x1]
  %v4098 = vperm.slane %v4096, 0
  %v4100 = vadd.f32 %v4095, %v4098
  %v4101 = vmax.f32 %v4100, 0.0
  %v4102 = vld [vmem:[%s18] sm:$0x1]
  %v4104 = vperm.slane %v4102, 0
  %v4106 = vmul.f32 %v4101, %v4104
  %vm4107 = vcmask 123904
  %v4108 = vsel %vm4107, %v4106, 0.0
  %4109 = vadd.xlane.f32.xlu0 %v4108
  %v4110 = vpop.xlane.xlu0 %4109
  %v4111 = vld [vmem:[#allocation2] sm:$0x1]
  %v4113 = vperm.slane %v4111, 0
  %v4115 = vadd.f32 %v4110, %v4113
  %vm4116 = vcmask 1024
  %4117 = vst.msk [vmem:[%s20] sm:$0x3] %vm4116, %v4115
  // Predicated region
  $region82: #{_forward_device.1} parent=0 // pred_check
    _
  $region83: #{_forward_device.1} parent=0 // pred_check_branch
    %4119 = sbr.rel (0) target = $region85
  $region84: #{_forward_device.1} parent=0 // pred_region
    _
  $region85: #{_forward_device.1} parent=0 // pred_fallthru
    _
  // Predicated region
  $region86: #{_forward_device.1} parent=0 // pred_check
    _
  $region87: #{_forward_device.1} parent=0 // pred_check_branch
    %4121 = sbr.rel (0) target = $region89
  $region88: #{_forward_device.1} parent=0 // pred_region
    _
  $region89: #{_forward_device.1} parent=0 // pred_fallthru
    _

</llo_original>
